<compile_context>
chip_gen: v7x
topology: tpu7x:2x2x1
jax: 0.10.0
libtpu: 0.0.40
codegen_flags: <defaults>
</compile_context>

<pallas_src>
import math
import functools

import jax
import jax.numpy as jnp
from jax import lax
from jax.experimental import pallas as pl
from jax.experimental.pallas import tpu as pltpu


def _const(ndim):
    """Index map for a weight that is the same full block at every grid step."""
    return lambda n: (0,) * ndim


def _pick_batch_tile(N, L, target_rows=128):
    """Largest divisor of N whose tile fills the MXU row dim (Bt*L <= ~128)."""
    best = 1
    for bt in range(1, N + 1):
        if N % bt == 0 and bt * L <= max(target_rows, L):
            best = bt
    return best


def _layer_norm(x, gamma, beta, eps=1e-5):
    mu = jnp.mean(x, axis=-1, keepdims=True)
    xc = x - mu
    var = jnp.mean(xc * xc, axis=-1, keepdims=True)
    return xc * lax.rsqrt(var + eps) * gamma + beta


# ----------------------------------------------------------------------------
# Single fused kernel: embeddings + mask + all encoder layers + rt head
# ----------------------------------------------------------------------------
def _fused_forward_kernel(tok_ref, dec_ref, len_ref, pos_ref, a_tab_ref, p_tab_ref,
                          wqkv_ref, bqkv_ref, wo_ref, bo_ref, g1_ref, be1_ref,
                          w1_ref, b1_ref, w2_ref, b2_ref, g2_ref, be2_ref,
                          rtw_ref, rtb_ref,
                          pred_ref, *, nhead, num_layers, matmul_dtype):
    Bt, L = tok_ref.shape
    D = pos_ref.shape[1]
    Va = a_tab_ref.shape[0]
    Vp = p_tab_ref.shape[0]
    hd = D // nhead
    R = Bt * L
    f32 = jnp.float32

    def mm(a, b):
        return jnp.dot(a.astype(matmul_dtype), b.astype(matmul_dtype),
                       preferred_element_type=f32)

    def bmm(eq, a, b):
        return jnp.einsum(eq, a.astype(matmul_dtype), b.astype(matmul_dtype),
                          preferred_element_type=f32)

    # ---- embeddings: one-hot MXU matmuls over the flattened (Bt*L) rows ----
    tok = tok_ref[...]                                           # (Bt, L) int32
    dec = dec_ref[...]                                           # (Bt, L) int32
    oh_a = (lax.broadcasted_iota(jnp.int32, (Bt, L, Va), 2)
            == tok[:, :, None]).astype(f32).reshape(R, Va)
    oh_p = (lax.broadcasted_iota(jnp.int32, (Bt, L, Vp), 2)
            == dec[:, :, None]).astype(f32).reshape(R, Vp)
    emb = mm(oh_a, a_tab_ref[...]) + mm(oh_p, p_tab_ref[...])    # (R, D)
    x2 = (emb.reshape(Bt, L, D) + pos_ref[...][None, :, :]).reshape(R, D)

    # ---- key-padding additive bias, computed in-kernel from int32 lengths ----
    lens = len_ref[...]                                          # (Bt, 1) int32
    col = lax.broadcasted_iota(jnp.int32, (Bt, 1, L), 2)
    bias = jnp.where(col >= lens[:, :, None], f32(-1e9), f32(0.0))   # (Bt, 1, L)

    # ---- post-norm TransformerEncoder layers (static unroll over layers) ----
    for l in range(num_layers):
        # fused QKV projection: one (R, D) x (D, 3D) matmul; q-scale pre-folded
        qkv = mm(x2, wqkv_ref[l]) + bqkv_ref[l]                  # (R, 3D)
        q3 = qkv[:, :D].reshape(Bt, L, D)
        k3 = qkv[:, D:2 * D].reshape(Bt, L, D)
        v3 = qkv[:, 2 * D:].reshape(Bt, L, D)

        heads = []
        for h in range(nhead):
            sl_lo, sl_hi = h * hd, (h + 1) * hd
            qh = q3[:, :, sl_lo:sl_hi]                           # (Bt, L, hd)
            kh = k3[:, :, sl_lo:sl_hi]
            vh = v3[:, :, sl_lo:sl_hi]
            s = bmm('bld,bmd->blm', qh, kh) + bias               # (Bt, L, L)
            s = s - jnp.max(s, axis=-1, keepdims=True)           # single exp/elem
            p = jnp.exp(s)
            p = p * pl.reciprocal(jnp.sum(p, axis=-1, keepdims=True), approx=True)
            heads.append(bmm('blm,bmd->bld', p, vh))             # (Bt, L, hd)

        # single (D, D) out-projection on concatenated head outputs
        ctx = jnp.concatenate(heads, axis=-1).reshape(R, D)
        attn = mm(ctx, wo_ref[l]) + bo_ref[l]

        # residual + LayerNorm 1 (dropout == identity at inference)
        y = _layer_norm(x2 + attn, g1_ref[l], be1_ref[l])
        # feed-forward (ReLU) + residual + LayerNorm 2
        ff = jnp.maximum(mm(y, w1_ref[l]) + b1_ref[l], 0.0)
        ff = mm(ff, w2_ref[l]) + b2_ref[l]
        x2 = _layer_norm(y + ff, g2_ref[l], be2_ref[l])

    # ---- rtlinear head on token position 0 (fused epilogue) ----
    y0 = x2.reshape(Bt, L, D)[:, 0, :]                           # (Bt, D)
    pred_ref[...] = mm(y0, rtw_ref[...]) + rtb_ref[...]          # (Bt, 1)


# ----------------------------------------------------------------------------
# Parameter prep: concat per-head weights into Wqkv / Wo, stack over layers
# ----------------------------------------------------------------------------
def prepare_fused_params(params, *, nhead, seq_len):
    D = params['a_table'].shape[1]
    hd = D // nhead
    scale = 1.0 / math.sqrt(hd)

    wqkv, bqkv, wo, bo = [], [], [], []
    g1, be1, w1, b1, w2, b2, g2, be2 = [], [], [], [], [], [], [], []
    for lp in params['layers']:
        wq = jnp.concatenate([lp['wq'][h] for h in range(nhead)], axis=1) * scale
        bq = jnp.concatenate([lp['bq'][h] for h in range(nhead)], axis=1) * scale
        wk = jnp.concatenate([lp['wk'][h] for h in range(nhead)], axis=1)
        bk = jnp.concatenate([lp['bk'][h] for h in range(nhead)], axis=1)
        wv = jnp.concatenate([lp['wv'][h] for h in range(nhead)], axis=1)
        bv = jnp.concatenate([lp['bv'][h] for h in range(nhead)], axis=1)
        wqkv.append(jnp.concatenate([wq, wk, wv], axis=1))       # (D, 3D)
        bqkv.append(jnp.concatenate([bq, bk, bv], axis=1))       # (1, 3D)
        wo.append(jnp.concatenate([lp['wo'][h] for h in range(nhead)], axis=0))  # (D, D)
        bo.append(lp['bo'])
        g1.append(lp['g1']); be1.append(lp['be1'])
        w1.append(lp['w1']); b1.append(lp['b1'])
        w2.append(lp['w2']); b2.append(lp['b2'])
        g2.append(lp['g2']); be2.append(lp['be2'])

    stack = lambda xs: jnp.stack(xs, axis=0)
    return dict(
        pos=params['pos_table'][:seq_len],
        a_table=params['a_table'], phos_table=params['phos_table'],
        wqkv=stack(wqkv), bqkv=stack(bqkv), wo=stack(wo), bo=stack(bo),
        g1=stack(g1), be1=stack(be1), w1=stack(w1), b1=stack(b1),
        w2=stack(w2), b2=stack(b2), g2=stack(g2), be2=stack(be2),
        rt_w=params['rt_w'], rt_b=params['rt_b'])


# ----------------------------------------------------------------------------
# Model forward (mirrors _2deepchargeModelirt_zero_all.forward)
# ----------------------------------------------------------------------------
def model_forward(params, peptide_tokens, peptide_length, charge, decoration, *,
                  nhead, matmul_dtype=jnp.float32):
    # matmul_dtype=jnp.bfloat16 is the recommended setting on v6e/v7x MXUs.
    N, L = peptide_tokens.shape
    fused = prepare_fused_params(params, nhead=nhead, seq_len=L)
    num_layers = fused['wqkv'].shape[0]

    Bt = _pick_batch_tile(N, L)
    grid = (N // Bt,)

    tokens = peptide_tokens.astype(jnp.int32)
    dec = decoration.astype(jnp.int32)
    lens = peptide_length.astype(jnp.int32)[:, None]              # (N, 1)

    weights = (fused['pos'], fused['a_table'], fused['phos_table'],
               fused['wqkv'], fused['bqkv'], fused['wo'], fused['bo'],
               fused['g1'], fused['be1'], fused['w1'], fused['b1'],
               fused['w2'], fused['b2'], fused['g2'], fused['be2'],
               fused['rt_w'], fused['rt_b'])

    in_specs = [pl.BlockSpec((Bt, L), lambda n: (n, 0)),           # tokens
                pl.BlockSpec((Bt, L), lambda n: (n, 0)),           # decoration
                pl.BlockSpec((Bt, 1), lambda n: (n, 0))]           # lengths
    in_specs += [pl.BlockSpec(w.shape, _const(w.ndim)) for w in weights]

    pred = pl.pallas_call(
        functools.partial(_fused_forward_kernel, nhead=nhead,
                          num_layers=num_layers, matmul_dtype=matmul_dtype),
        out_shape=jax.ShapeDtypeStruct((N, 1), jnp.float32),
        grid=grid,
        in_specs=in_specs,
        out_specs=pl.BlockSpec((Bt, 1), lambda n: (n, 0)),
        compiler_params=pltpu.CompilerParams(dimension_semantics=("parallel",)),
    )(tokens, dec, lens, *weights)

    return {'pred': pred[:, 0], 'sequence': peptide_tokens, 'charge': charge,
            'decoration': decoration, 'seq_len': peptide_length}


# ----------------------------------------------------------------------------
# Parameter construction + pure-JAX reference for verification
# ----------------------------------------------------------------------------
def init_params(key, *, maxlength, acid_size, embed_dim, nhead, num_layers, dim_feedforward):
    D, H = embed_dim, nhead
    hd = D // H
    keys = jax.random.split(key, 4 + num_layers)

    def nrm(k, shape, scale):
        return scale * jax.random.normal(k, shape, dtype=jnp.float32)

    a_table = nrm(keys[0], (acid_size, D), 0.3).at[0].set(0.0)     # padding_idx=0
    phos_table = nrm(keys[1], (5, D), 0.3)
    pos_table = nrm(keys[2], (maxlength, D), 0.3)
    k_rtw, k_rtb = jax.random.split(keys[3])
    rt_w = nrm(k_rtw, (D, 1), 0.2)
    rt_b = nrm(k_rtb, (1, 1), 0.2)

    layers = []
    for i in range(num_layers):
        lk = jax.random.split(keys[4 + i], 12)
        layers.append(dict(
            wq=nrm(lk[0], (H, D, hd), 0.2), bq=nrm(lk[1], (H, 1, hd), 0.1),
            wk=nrm(lk[2], (H, D, hd), 0.2), bk=nrm(lk[3], (H, 1, hd), 0.1),
            wv=nrm(lk[4], (H, D, hd), 0.2), bv=nrm(lk[5], (H, 1, hd), 0.1),
            wo=nrm(lk[6], (H, hd, D), 0.2), bo=nrm(lk[7], (1, D), 0.1),
            g1=jnp.ones((1, D), jnp.float32), be1=jnp.zeros((1, D), jnp.float32),
            w1=nrm(lk[8], (D, dim_feedforward), 0.2), b1=nrm(lk[9], (1, dim_feedforward), 0.1),
            w2=nrm(lk[10], (dim_feedforward, D), 0.2), b2=nrm(lk[11], (1, D), 0.1),
            g2=jnp.ones((1, D), jnp.float32), be2=jnp.zeros((1, D), jnp.float32),
        ))
    return dict(a_table=a_table, phos_table=phos_table, pos_table=pos_table,
                rt_w=rt_w, rt_b=rt_b, layers=layers)


def reference_forward(params, tokens, lengths, decoration, *, nhead):
    N, L = tokens.shape
    D = params['a_table'].shape[1]
    hd = D // nhead

    def ln(t, g, b, eps=1e-5):
        mu = jnp.mean(t, axis=-1, keepdims=True)
        tc = t - mu
        var = jnp.mean(tc * tc, axis=-1, keepdims=True)
        return tc * lax.rsqrt(var + eps) * g + b

    x = (params['pos_table'][:L][None]
         + params['a_table'][tokens]
         + params['phos_table'][decoration])
    bias = jnp.where(jnp.arange(L)[None, :] >= lengths[:, None], -1e9, 0.0).astype(jnp.float32)
    for lp in params['layers']:
        acc = jnp.zeros((N, L, D), jnp.float32)
        for h in range(nhead):
            q = (x @ lp['wq'][h] + lp['bq'][h]) * (1.0 / math.sqrt(hd))
            k = x @ lp['wk'][h] + lp['bk'][h]
            v = x @ lp['wv'][h] + lp['bv'][h]
            s = jnp.einsum('nld,nmd->nlm', q, k) + bias[:, None, :]
            s = s - jnp.max(s, axis=-1, keepdims=True)
            p = jnp.exp(s)
            p = p / jnp.sum(p, axis=-1, keepdims=True)
            acc = acc + jnp.einsum('nlm,nmd->nld', p, v) @ lp['wo'][h]
        attn = acc + lp['bo']
        y = ln(x + attn, lp['g1'], lp['be1'])
        ff = jnp.maximum(y @ lp['w1'] + lp['b1'], 0.0) @ lp['w2'] + lp['b2']
        x = ln(y + ff, lp['g2'], lp['be2'])
    y0 = x[:, 0, :]
    return (y0 @ params['rt_w'] + params['rt_b'])[:, 0]


if __name__ == "__main__":
    key = jax.random.PRNGKey(0)
    maxlength, acid_size = 50, 28
    embed_dim, nhead, num_layers = 32, 4, 2
    dim_feedforward = 64
    N, L = 2, 8

    k_par, k_tok, k_dec, k_chg = jax.random.split(key, 4)
    params = init_params(k_par, maxlength=maxlength, acid_size=acid_size,
                         embed_dim=embed_dim, nhead=nhead, num_layers=num_layers,
                         dim_feedforward=dim_feedforward)
    peptide_tokens = jax.random.randint(k_tok, (N, L), 1, acid_size, dtype=jnp.int32)
    decoration = jax.random.randint(k_dec, (N, L), 0, 5, dtype=jnp.int32)
    charge = jax.random.randint(k_chg, (N,), 1, 6, dtype=jnp.int32)
    peptide_length = jnp.array([L, 5], dtype=jnp.int32)            # max length == L

    out = model_forward(params, peptide_tokens, peptide_length, charge, decoration,
                        nhead=nhead, matmul_dtype=jnp.float32)
    pred = jax.block_until_ready(out['pred'])

    ref = jax.block_until_ready(
        reference_forward(params, peptide_tokens, peptide_length, decoration, nhead=nhead))

    assert pred.shape == (N,), pred.shape
    assert jnp.allclose(pred, ref, atol=1e-2, rtol=1e-2), (pred, ref)
    print("KERNEL_OK")
</pallas_src>

<mosaic_0001>
module attributes {stable_mosaic.version = 11 : i64} {
  func.func @_fused_forward_kernel(%arg0: i32, %arg1: memref<2x8xi32, #tpu.memory_space<vmem>>, %arg2: memref<2x8xi32, #tpu.memory_space<vmem>>, %arg3: memref<2x1xi32, #tpu.memory_space<vmem>>, %arg4: memref<8x32xf32, #tpu.memory_space<vmem>>, %arg5: memref<28x32xf32, #tpu.memory_space<vmem>>, %arg6: memref<5x32xf32, #tpu.memory_space<vmem>>, %arg7: memref<2x32x96xf32, #tpu.memory_space<vmem>>, %arg8: memref<2x1x96xf32, #tpu.memory_space<vmem>>, %arg9: memref<2x32x32xf32, #tpu.memory_space<vmem>>, %arg10: memref<2x1x32xf32, #tpu.memory_space<vmem>>, %arg11: memref<2x1x32xf32, #tpu.memory_space<vmem>>, %arg12: memref<2x1x32xf32, #tpu.memory_space<vmem>>, %arg13: memref<2x32x64xf32, #tpu.memory_space<vmem>>, %arg14: memref<2x1x64xf32, #tpu.memory_space<vmem>>, %arg15: memref<2x64x32xf32, #tpu.memory_space<vmem>>, %arg16: memref<2x1x32xf32, #tpu.memory_space<vmem>>, %arg17: memref<2x1x32xf32, #tpu.memory_space<vmem>>, %arg18: memref<2x1x32xf32, #tpu.memory_space<vmem>>, %arg19: memref<32x1xf32, #tpu.memory_space<vmem>>, %arg20: memref<1x1xf32, #tpu.memory_space<vmem>>, %arg21: memref<2x1xf32, #tpu.memory_space<vmem>>) attributes {dimension_semantics = [#tpu.dimension_semantics<parallel>], iteration_bounds = array<i64: 1>, scalar_prefetch = 0 : i64, scratch_operands = 0 : i64, tpu.core_type = #tpu.core_type<tc>, window_params = [{transform_indices = @transform_0, window_bounds = array<i64: 2, 8>}, {transform_indices = @transform_1, window_bounds = array<i64: 2, 8>}, {transform_indices = @transform_2, window_bounds = array<i64: 2, 1>}, {pipeline_mode = #tpu.pipeline_mode<synchronous>, transform_indices = @transform_3, window_bounds = array<i64: 8, 32>}, {pipeline_mode = #tpu.pipeline_mode<synchronous>, transform_indices = @transform_4, window_bounds = array<i64: 28, 32>}, {pipeline_mode = #tpu.pipeline_mode<synchronous>, transform_indices = @transform_5, window_bounds = array<i64: 5, 32>}, {pipeline_mode = #tpu.pipeline_mode<synchronous>, transform_indices = @transform_6, window_bounds = array<i64: 2, 32, 96>}, {pipeline_mode = #tpu.pipeline_mode<synchronous>, transform_indices = @transform_7, window_bounds = array<i64: 2, 1, 96>}, {pipeline_mode = #tpu.pipeline_mode<synchronous>, transform_indices = @transform_8, window_bounds = array<i64: 2, 32, 32>}, {pipeline_mode = #tpu.pipeline_mode<synchronous>, transform_indices = @transform_9, window_bounds = array<i64: 2, 1, 32>}, {pipeline_mode = #tpu.pipeline_mode<synchronous>, transform_indices = @transform_10, window_bounds = array<i64: 2, 1, 32>}, {pipeline_mode = #tpu.pipeline_mode<synchronous>, transform_indices = @transform_11, window_bounds = array<i64: 2, 1, 32>}, {pipeline_mode = #tpu.pipeline_mode<synchronous>, transform_indices = @transform_12, window_bounds = array<i64: 2, 32, 64>}, {pipeline_mode = #tpu.pipeline_mode<synchronous>, transform_indices = @transform_13, window_bounds = array<i64: 2, 1, 64>}, {pipeline_mode = #tpu.pipeline_mode<synchronous>, transform_indices = @transform_14, window_bounds = array<i64: 2, 64, 32>}, {pipeline_mode = #tpu.pipeline_mode<synchronous>, transform_indices = @transform_15, window_bounds = array<i64: 2, 1, 32>}, {pipeline_mode = #tpu.pipeline_mode<synchronous>, transform_indices = @transform_16, window_bounds = array<i64: 2, 1, 32>}, {pipeline_mode = #tpu.pipeline_mode<synchronous>, transform_indices = @transform_17, window_bounds = array<i64: 2, 1, 32>}, {pipeline_mode = #tpu.pipeline_mode<synchronous>, transform_indices = @transform_18, window_bounds = array<i64: 32, 1>}, {pipeline_mode = #tpu.pipeline_mode<synchronous>, transform_indices = @transform_19, window_bounds = array<i64: 1, 1>}, {transform_indices = @transform_20, window_bounds = array<i64: 2, 1>}]} {
    %c0 = arith.constant 0 : index
    %c0_0 = arith.constant 0 : index
    %0 = vector.load %arg1[%c0, %c0_0] : memref<2x8xi32, #tpu.memory_space<vmem>>, vector<2x8xi32>
    %c0_1 = arith.constant 0 : index
    %c0_2 = arith.constant 0 : index
    %1 = vector.load %arg2[%c0_1, %c0_2] : memref<2x8xi32, #tpu.memory_space<vmem>>, vector<2x8xi32>
    %2 = tpu.iota {dimensions = array<i32: 2>} : vector<2x8x28xi32>
    %3 = vector.shape_cast %0 : vector<2x8xi32> to vector<2x8x1xi32>
    %4 = vector.broadcast %3 : vector<2x8x1xi32> to vector<2x8x28xi32>
    %5 = arith.cmpi eq, %2, %4 : vector<2x8x28xi32>
    %6 = arith.extui %5 : vector<2x8x28xi1> to vector<2x8x28xi32>
    %7 = arith.sitofp %6 : vector<2x8x28xi32> to vector<2x8x28xf32>
    %8 = vector.shape_cast %7 : vector<2x8x28xf32> to vector<16x28xf32>
    %9 = tpu.iota {dimensions = array<i32: 2>} : vector<2x8x5xi32>
    %10 = vector.shape_cast %1 : vector<2x8xi32> to vector<2x8x1xi32>
    %11 = vector.broadcast %10 : vector<2x8x1xi32> to vector<2x8x5xi32>
    %12 = arith.cmpi eq, %9, %11 : vector<2x8x5xi32>
    %13 = arith.extui %12 : vector<2x8x5xi1> to vector<2x8x5xi32>
    %14 = arith.sitofp %13 : vector<2x8x5xi32> to vector<2x8x5xf32>
    %15 = vector.shape_cast %14 : vector<2x8x5xf32> to vector<16x5xf32>
    %c0_3 = arith.constant 0 : index
    %c0_4 = arith.constant 0 : index
    %16 = vector.load %arg5[%c0_3, %c0_4] : memref<28x32xf32, #tpu.memory_space<vmem>>, vector<28x32xf32>
    %cst = arith.constant dense<0.000000e+00> : vector<16x32xf32>
    %17 = tpu.matmul %8, %16, %cst {dimension_numbers = #tpu.dot_dimension_numbers<[1], [0], [0], [1], [0, 0, 1, 1], [], []>} : vector<16x28xf32>, vector<28x32xf32>, vector<16x32xf32> -> vector<16x32xf32>
    %c0_5 = arith.constant 0 : index
    %c0_6 = arith.constant 0 : index
    %18 = vector.load %arg6[%c0_5, %c0_6] : memref<5x32xf32, #tpu.memory_space<vmem>>, vector<5x32xf32>
    %cst_7 = arith.constant dense<0.000000e+00> : vector<16x32xf32>
    %19 = tpu.matmul %15, %18, %cst_7 {dimension_numbers = #tpu.dot_dimension_numbers<[1], [0], [0], [1], [0, 0, 1, 1], [], []>} : vector<16x5xf32>, vector<5x32xf32>, vector<16x32xf32> -> vector<16x32xf32>
    %20 = arith.addf %17, %19 : vector<16x32xf32>
    %21 = vector.shape_cast %20 : vector<16x32xf32> to vector<2x8x32xf32>
    %c0_8 = arith.constant 0 : index
    %c0_9 = arith.constant 0 : index
    %22 = vector.load %arg4[%c0_8, %c0_9] : memref<8x32xf32, #tpu.memory_space<vmem>>, vector<8x32xf32>
    %23 = vector.shape_cast %22 : vector<8x32xf32> to vector<1x8x32xf32>
    %24 = vector.broadcast %23 : vector<1x8x32xf32> to vector<2x8x32xf32>
    %25 = arith.addf %21, %24 : vector<2x8x32xf32>
    %26 = vector.shape_cast %25 : vector<2x8x32xf32> to vector<16x32xf32>
    %c0_10 = arith.constant 0 : index
    %c0_11 = arith.constant 0 : index
    %27 = vector.load %arg3[%c0_10, %c0_11] : memref<2x1xi32, #tpu.memory_space<vmem>>, vector<2x1xi32>
    %28 = tpu.iota {dimensions = array<i32: 2>} : vector<2x1x8xi32>
    %29 = vector.shape_cast %27 : vector<2x1xi32> to vector<2x1x1xi32>
    %30 = vector.broadcast %29 : vector<2x1x1xi32> to vector<2x1x8xi32>
    %31 = arith.cmpi sge, %28, %30 : vector<2x1x8xi32>
    %cst_12 = arith.constant -1.000000e+09 : f32
    %cst_13 = arith.constant 0.000000e+00 : f32
    %32 = vector.broadcast %cst_12 : f32 to vector<2x1x8xf32>
    %33 = vector.broadcast %cst_13 : f32 to vector<2x1x8xf32>
    %34 = arith.select %31, %32, %33 : vector<2x1x8xi1>, vector<2x1x8xf32>
    %c0_14 = arith.constant 0 : index
    %c0_15 = arith.constant 0 : index
    %c0_16 = arith.constant 0 : index
    %35 = vector.load %arg7[%c0_14, %c0_15, %c0_16] : memref<2x32x96xf32, #tpu.memory_space<vmem>>, vector<1x32x96xf32>
    %36 = vector.shape_cast %35 : vector<1x32x96xf32> to vector<32x96xf32>
    %cst_17 = arith.constant dense<0.000000e+00> : vector<16x96xf32>
    %37 = tpu.matmul %26, %36, %cst_17 {dimension_numbers = #tpu.dot_dimension_numbers<[1], [0], [0], [1], [0, 0, 1, 1], [], []>} : vector<16x32xf32>, vector<32x96xf32>, vector<16x96xf32> -> vector<16x96xf32>
    %c0_18 = arith.constant 0 : index
    %c0_19 = arith.constant 0 : index
    %c0_20 = arith.constant 0 : index
    %38 = vector.load %arg8[%c0_18, %c0_19, %c0_20] : memref<2x1x96xf32, #tpu.memory_space<vmem>>, vector<1x1x96xf32>
    %39 = vector.shape_cast %38 : vector<1x1x96xf32> to vector<1x96xf32>
    %40 = vector.broadcast %39 : vector<1x96xf32> to vector<16x96xf32>
    %41 = arith.addf %37, %40 : vector<16x96xf32>
    %42 = vector.extract_strided_slice %41 {offsets = [0, 0], sizes = [16, 32], strides = [1, 1]} : vector<16x96xf32> to vector<16x32xf32>
    %43 = vector.shape_cast %42 : vector<16x32xf32> to vector<2x8x32xf32>
    %44 = vector.extract_strided_slice %41 {offsets = [0, 32], sizes = [16, 32], strides = [1, 1]} : vector<16x96xf32> to vector<16x32xf32>
    %45 = vector.shape_cast %44 : vector<16x32xf32> to vector<2x8x32xf32>
    %46 = vector.extract_strided_slice %41 {offsets = [0, 64], sizes = [16, 32], strides = [1, 1]} : vector<16x96xf32> to vector<16x32xf32>
    %47 = vector.shape_cast %46 : vector<16x32xf32> to vector<2x8x32xf32>
    %48 = vector.extract_strided_slice %43 {offsets = [0, 0, 0], sizes = [2, 8, 8], strides = [1, 1, 1]} : vector<2x8x32xf32> to vector<2x8x8xf32>
    %49 = vector.extract_strided_slice %45 {offsets = [0, 0, 0], sizes = [2, 8, 8], strides = [1, 1, 1]} : vector<2x8x32xf32> to vector<2x8x8xf32>
    %50 = vector.extract_strided_slice %47 {offsets = [0, 0, 0], sizes = [2, 8, 8], strides = [1, 1, 1]} : vector<2x8x32xf32> to vector<2x8x8xf32>
    "tpu.trace_start"() <{level = 10 : i32, message = "bld,bmd->blm"}> : () -> ()
    %cst_21 = arith.constant dense<0.000000e+00> : vector<2x8x8xf32>
    %51 = tpu.matmul %48, %49, %cst_21 {dimension_numbers = #tpu.dot_dimension_numbers<[2], [2], [1], [1], [0, 0, 0, 1, 1, 1], [0], [0]>} : vector<2x8x8xf32>, vector<2x8x8xf32>, vector<2x8x8xf32> -> vector<2x8x8xf32>
    "tpu.trace_stop"() : () -> ()
    %52 = vector.broadcast %34 : vector<2x1x8xf32> to vector<2x8x8xf32>
    %53 = arith.addf %51, %52 : vector<2x8x8xf32>
    %cst_22 = arith.constant dense<0xFF800000> : vector<2x8xf32>
    %54 = vector.multi_reduction <maximumf>, %53, %cst_22 [2] : vector<2x8x8xf32> to vector<2x8xf32>
    %55 = vector.shape_cast %54 : vector<2x8xf32> to vector<2x8x1xf32>
    %56 = vector.broadcast %55 : vector<2x8x1xf32> to vector<2x8x8xf32>
    %57 = arith.subf %53, %56 : vector<2x8x8xf32>
    %58 = math.exp %57 : vector<2x8x8xf32>
    %cst_23 = arith.constant dense<0.000000e+00> : vector<2x8xf32>
    %59 = vector.multi_reduction <add>, %58, %cst_23 [2] : vector<2x8x8xf32> to vector<2x8xf32>
    %60 = vector.shape_cast %59 : vector<2x8xf32> to vector<2x8x1xf32>
    %61 = tpu.reciprocal %60 {approx = true} : vector<2x8x1xf32> -> vector<2x8x1xf32>
    %62 = vector.broadcast %61 : vector<2x8x1xf32> to vector<2x8x8xf32>
    %63 = arith.mulf %58, %62 : vector<2x8x8xf32>
    "tpu.trace_start"() <{level = 10 : i32, message = "blm,bmd->bld"}> : () -> ()
    %cst_24 = arith.constant dense<0.000000e+00> : vector<2x8x8xf32>
    %64 = tpu.matmul %63, %50, %cst_24 {dimension_numbers = #tpu.dot_dimension_numbers<[2], [1], [1], [2], [0, 0, 0, 1, 1, 2], [0], [0]>} : vector<2x8x8xf32>, vector<2x8x8xf32>, vector<2x8x8xf32> -> vector<2x8x8xf32>
    "tpu.trace_stop"() : () -> ()
    %65 = vector.extract_strided_slice %43 {offsets = [0, 0, 8], sizes = [2, 8, 8], strides = [1, 1, 1]} : vector<2x8x32xf32> to vector<2x8x8xf32>
    %66 = vector.extract_strided_slice %45 {offsets = [0, 0, 8], sizes = [2, 8, 8], strides = [1, 1, 1]} : vector<2x8x32xf32> to vector<2x8x8xf32>
    %67 = vector.extract_strided_slice %47 {offsets = [0, 0, 8], sizes = [2, 8, 8], strides = [1, 1, 1]} : vector<2x8x32xf32> to vector<2x8x8xf32>
    "tpu.trace_start"() <{level = 10 : i32, message = "bld,bmd->blm"}> : () -> ()
    %cst_25 = arith.constant dense<0.000000e+00> : vector<2x8x8xf32>
    %68 = tpu.matmul %65, %66, %cst_25 {dimension_numbers = #tpu.dot_dimension_numbers<[2], [2], [1], [1], [0, 0, 0, 1, 1, 1], [0], [0]>} : vector<2x8x8xf32>, vector<2x8x8xf32>, vector<2x8x8xf32> -> vector<2x8x8xf32>
    "tpu.trace_stop"() : () -> ()
    %69 = vector.broadcast %34 : vector<2x1x8xf32> to vector<2x8x8xf32>
    %70 = arith.addf %68, %69 : vector<2x8x8xf32>
    %cst_26 = arith.constant dense<0xFF800000> : vector<2x8xf32>
    %71 = vector.multi_reduction <maximumf>, %70, %cst_26 [2] : vector<2x8x8xf32> to vector<2x8xf32>
    %72 = vector.shape_cast %71 : vector<2x8xf32> to vector<2x8x1xf32>
    %73 = vector.broadcast %72 : vector<2x8x1xf32> to vector<2x8x8xf32>
    %74 = arith.subf %70, %73 : vector<2x8x8xf32>
    %75 = math.exp %74 : vector<2x8x8xf32>
    %cst_27 = arith.constant dense<0.000000e+00> : vector<2x8xf32>
    %76 = vector.multi_reduction <add>, %75, %cst_27 [2] : vector<2x8x8xf32> to vector<2x8xf32>
    %77 = vector.shape_cast %76 : vector<2x8xf32> to vector<2x8x1xf32>
    %78 = tpu.reciprocal %77 {approx = true} : vector<2x8x1xf32> -> vector<2x8x1xf32>
    %79 = vector.broadcast %78 : vector<2x8x1xf32> to vector<2x8x8xf32>
    %80 = arith.mulf %75, %79 : vector<2x8x8xf32>
    "tpu.trace_start"() <{level = 10 : i32, message = "blm,bmd->bld"}> : () -> ()
    %cst_28 = arith.constant dense<0.000000e+00> : vector<2x8x8xf32>
    %81 = tpu.matmul %80, %67, %cst_28 {dimension_numbers = #tpu.dot_dimension_numbers<[2], [1], [1], [2], [0, 0, 0, 1, 1, 2], [0], [0]>} : vector<2x8x8xf32>, vector<2x8x8xf32>, vector<2x8x8xf32> -> vector<2x8x8xf32>
    "tpu.trace_stop"() : () -> ()
    %82 = vector.extract_strided_slice %43 {offsets = [0, 0, 16], sizes = [2, 8, 8], strides = [1, 1, 1]} : vector<2x8x32xf32> to vector<2x8x8xf32>
    %83 = vector.extract_strided_slice %45 {offsets = [0, 0, 16], sizes = [2, 8, 8], strides = [1, 1, 1]} : vector<2x8x32xf32> to vector<2x8x8xf32>
    %84 = vector.extract_strided_slice %47 {offsets = [0, 0, 16], sizes = [2, 8, 8], strides = [1, 1, 1]} : vector<2x8x32xf32> to vector<2x8x8xf32>
    "tpu.trace_start"() <{level = 10 : i32, message = "bld,bmd->blm"}> : () -> ()
    %cst_29 = arith.constant dense<0.000000e+00> : vector<2x8x8xf32>
    %85 = tpu.matmul %82, %83, %cst_29 {dimension_numbers = #tpu.dot_dimension_numbers<[2], [2], [1], [1], [0, 0, 0, 1, 1, 1], [0], [0]>} : vector<2x8x8xf32>, vector<2x8x8xf32>, vector<2x8x8xf32> -> vector<2x8x8xf32>
    "tpu.trace_stop"() : () -> ()
    %86 = vector.broadcast %34 : vector<2x1x8xf32> to vector<2x8x8xf32>
    %87 = arith.addf %85, %86 : vector<2x8x8xf32>
    %cst_30 = arith.constant dense<0xFF800000> : vector<2x8xf32>
    %88 = vector.multi_reduction <maximumf>, %87, %cst_30 [2] : vector<2x8x8xf32> to vector<2x8xf32>
    %89 = vector.shape_cast %88 : vector<2x8xf32> to vector<2x8x1xf32>
    %90 = vector.broadcast %89 : vector<2x8x1xf32> to vector<2x8x8xf32>
    %91 = arith.subf %87, %90 : vector<2x8x8xf32>
    %92 = math.exp %91 : vector<2x8x8xf32>
    %cst_31 = arith.constant dense<0.000000e+00> : vector<2x8xf32>
    %93 = vector.multi_reduction <add>, %92, %cst_31 [2] : vector<2x8x8xf32> to vector<2x8xf32>
    %94 = vector.shape_cast %93 : vector<2x8xf32> to vector<2x8x1xf32>
    %95 = tpu.reciprocal %94 {approx = true} : vector<2x8x1xf32> -> vector<2x8x1xf32>
    %96 = vector.broadcast %95 : vector<2x8x1xf32> to vector<2x8x8xf32>
    %97 = arith.mulf %92, %96 : vector<2x8x8xf32>
    "tpu.trace_start"() <{level = 10 : i32, message = "blm,bmd->bld"}> : () -> ()
    %cst_32 = arith.constant dense<0.000000e+00> : vector<2x8x8xf32>
    %98 = tpu.matmul %97, %84, %cst_32 {dimension_numbers = #tpu.dot_dimension_numbers<[2], [1], [1], [2], [0, 0, 0, 1, 1, 2], [0], [0]>} : vector<2x8x8xf32>, vector<2x8x8xf32>, vector<2x8x8xf32> -> vector<2x8x8xf32>
    "tpu.trace_stop"() : () -> ()
    %99 = vector.extract_strided_slice %43 {offsets = [0, 0, 24], sizes = [2, 8, 8], strides = [1, 1, 1]} : vector<2x8x32xf32> to vector<2x8x8xf32>
    %100 = vector.extract_strided_slice %45 {offsets = [0, 0, 24], sizes = [2, 8, 8], strides = [1, 1, 1]} : vector<2x8x32xf32> to vector<2x8x8xf32>
    %101 = vector.extract_strided_slice %47 {offsets = [0, 0, 24], sizes = [2, 8, 8], strides = [1, 1, 1]} : vector<2x8x32xf32> to vector<2x8x8xf32>
    "tpu.trace_start"() <{level = 10 : i32, message = "bld,bmd->blm"}> : () -> ()
    %cst_33 = arith.constant dense<0.000000e+00> : vector<2x8x8xf32>
    %102 = tpu.matmul %99, %100, %cst_33 {dimension_numbers = #tpu.dot_dimension_numbers<[2], [2], [1], [1], [0, 0, 0, 1, 1, 1], [0], [0]>} : vector<2x8x8xf32>, vector<2x8x8xf32>, vector<2x8x8xf32> -> vector<2x8x8xf32>
    "tpu.trace_stop"() : () -> ()
    %103 = vector.broadcast %34 : vector<2x1x8xf32> to vector<2x8x8xf32>
    %104 = arith.addf %102, %103 : vector<2x8x8xf32>
    %cst_34 = arith.constant dense<0xFF800000> : vector<2x8xf32>
    %105 = vector.multi_reduction <maximumf>, %104, %cst_34 [2] : vector<2x8x8xf32> to vector<2x8xf32>
    %106 = vector.shape_cast %105 : vector<2x8xf32> to vector<2x8x1xf32>
    %107 = vector.broadcast %106 : vector<2x8x1xf32> to vector<2x8x8xf32>
    %108 = arith.subf %104, %107 : vector<2x8x8xf32>
    %109 = math.exp %108 : vector<2x8x8xf32>
    %cst_35 = arith.constant dense<0.000000e+00> : vector<2x8xf32>
    %110 = vector.multi_reduction <add>, %109, %cst_35 [2] : vector<2x8x8xf32> to vector<2x8xf32>
    %111 = vector.shape_cast %110 : vector<2x8xf32> to vector<2x8x1xf32>
    %112 = tpu.reciprocal %111 {approx = true} : vector<2x8x1xf32> -> vector<2x8x1xf32>
    %113 = vector.broadcast %112 : vector<2x8x1xf32> to vector<2x8x8xf32>
    %114 = arith.mulf %109, %113 : vector<2x8x8xf32>
    "tpu.trace_start"() <{level = 10 : i32, message = "blm,bmd->bld"}> : () -> ()
    %cst_36 = arith.constant dense<0.000000e+00> : vector<2x8x8xf32>
    %115 = tpu.matmul %114, %101, %cst_36 {dimension_numbers = #tpu.dot_dimension_numbers<[2], [1], [1], [2], [0, 0, 0, 1, 1, 2], [0], [0]>} : vector<2x8x8xf32>, vector<2x8x8xf32>, vector<2x8x8xf32> -> vector<2x8x8xf32>
    "tpu.trace_stop"() : () -> ()
    %116 = tpu.concatenate %64, %81, %98, %115 in 2 : vector<2x8x8xf32>, vector<2x8x8xf32>, vector<2x8x8xf32>, vector<2x8x8xf32> -> vector<2x8x32xf32>
    %117 = vector.shape_cast %116 : vector<2x8x32xf32> to vector<16x32xf32>
    %c0_37 = arith.constant 0 : index
    %c0_38 = arith.constant 0 : index
    %c0_39 = arith.constant 0 : index
    %118 = vector.load %arg9[%c0_37, %c0_38, %c0_39] : memref<2x32x32xf32, #tpu.memory_space<vmem>>, vector<1x32x32xf32>
    %119 = vector.shape_cast %118 : vector<1x32x32xf32> to vector<32x32xf32>
    %cst_40 = arith.constant dense<0.000000e+00> : vector<16x32xf32>
    %120 = tpu.matmul %117, %119, %cst_40 {dimension_numbers = #tpu.dot_dimension_numbers<[1], [0], [0], [1], [0, 0, 1, 1], [], []>} : vector<16x32xf32>, vector<32x32xf32>, vector<16x32xf32> -> vector<16x32xf32>
    %c0_41 = arith.constant 0 : index
    %c0_42 = arith.constant 0 : index
    %c0_43 = arith.constant 0 : index
    %121 = vector.load %arg10[%c0_41, %c0_42, %c0_43] : memref<2x1x32xf32, #tpu.memory_space<vmem>>, vector<1x1x32xf32>
    %122 = vector.shape_cast %121 : vector<1x1x32xf32> to vector<1x32xf32>
    %123 = vector.broadcast %122 : vector<1x32xf32> to vector<16x32xf32>
    %124 = arith.addf %120, %123 : vector<16x32xf32>
    %125 = arith.addf %26, %124 : vector<16x32xf32>
    %c0_44 = arith.constant 0 : index
    %c0_45 = arith.constant 0 : index
    %c0_46 = arith.constant 0 : index
    %126 = vector.load %arg11[%c0_44, %c0_45, %c0_46] : memref<2x1x32xf32, #tpu.memory_space<vmem>>, vector<1x1x32xf32>
    %127 = vector.shape_cast %126 : vector<1x1x32xf32> to vector<1x32xf32>
    %c0_47 = arith.constant 0 : index
    %c0_48 = arith.constant 0 : index
    %c0_49 = arith.constant 0 : index
    %128 = vector.load %arg12[%c0_47, %c0_48, %c0_49] : memref<2x1x32xf32, #tpu.memory_space<vmem>>, vector<1x1x32xf32>
    %129 = vector.shape_cast %128 : vector<1x1x32xf32> to vector<1x32xf32>
    %cst_50 = arith.constant dense<0.000000e+00> : vector<16xf32>
    %130 = vector.multi_reduction <add>, %125, %cst_50 [1] : vector<16x32xf32> to vector<16xf32>
    %131 = vector.shape_cast %130 : vector<16xf32> to vector<16x1xf32>
    %cst_51 = arith.constant 3.200000e+01 : f32
    %132 = vector.broadcast %cst_51 : f32 to vector<16x1xf32>
    %133 = arith.divf %131, %132 : vector<16x1xf32>
    %134 = vector.broadcast %133 : vector<16x1xf32> to vector<16x32xf32>
    %135 = arith.subf %125, %134 : vector<16x32xf32>
    %136 = arith.mulf %135, %135 : vector<16x32xf32>
    %cst_52 = arith.constant dense<0.000000e+00> : vector<16xf32>
    %137 = vector.multi_reduction <add>, %136, %cst_52 [1] : vector<16x32xf32> to vector<16xf32>
    %138 = vector.shape_cast %137 : vector<16xf32> to vector<16x1xf32>
    %cst_53 = arith.constant 3.200000e+01 : f32
    %139 = vector.broadcast %cst_53 : f32 to vector<16x1xf32>
    %140 = arith.divf %138, %139 : vector<16x1xf32>
    %cst_54 = arith.constant 9.99999974E-6 : f32
    %141 = vector.broadcast %cst_54 : f32 to vector<16x1xf32>
    %142 = arith.addf %140, %141 : vector<16x1xf32>
    %143 = math.rsqrt %142 : vector<16x1xf32>
    %144 = vector.broadcast %143 : vector<16x1xf32> to vector<16x32xf32>
    %145 = arith.mulf %135, %144 : vector<16x32xf32>
    %146 = vector.broadcast %127 : vector<1x32xf32> to vector<16x32xf32>
    %147 = arith.mulf %145, %146 : vector<16x32xf32>
    %148 = vector.broadcast %129 : vector<1x32xf32> to vector<16x32xf32>
    %149 = arith.addf %147, %148 : vector<16x32xf32>
    %c0_55 = arith.constant 0 : index
    %c0_56 = arith.constant 0 : index
    %c0_57 = arith.constant 0 : index
    %150 = vector.load %arg13[%c0_55, %c0_56, %c0_57] : memref<2x32x64xf32, #tpu.memory_space<vmem>>, vector<1x32x64xf32>
    %151 = vector.shape_cast %150 : vector<1x32x64xf32> to vector<32x64xf32>
    %cst_58 = arith.constant dense<0.000000e+00> : vector<16x64xf32>
    %152 = tpu.matmul %149, %151, %cst_58 {dimension_numbers = #tpu.dot_dimension_numbers<[1], [0], [0], [1], [0, 0, 1, 1], [], []>} : vector<16x32xf32>, vector<32x64xf32>, vector<16x64xf32> -> vector<16x64xf32>
    %c0_59 = arith.constant 0 : index
    %c0_60 = arith.constant 0 : index
    %c0_61 = arith.constant 0 : index
    %153 = vector.load %arg14[%c0_59, %c0_60, %c0_61] : memref<2x1x64xf32, #tpu.memory_space<vmem>>, vector<1x1x64xf32>
    %154 = vector.shape_cast %153 : vector<1x1x64xf32> to vector<1x64xf32>
    %155 = vector.broadcast %154 : vector<1x64xf32> to vector<16x64xf32>
    %156 = arith.addf %152, %155 : vector<16x64xf32>
    %cst_62 = arith.constant 0.000000e+00 : f32
    %157 = vector.broadcast %cst_62 : f32 to vector<16x64xf32>
    %158 = arith.maximumf %156, %157 : vector<16x64xf32>
    %c0_63 = arith.constant 0 : index
    %c0_64 = arith.constant 0 : index
    %c0_65 = arith.constant 0 : index
    %159 = vector.load %arg15[%c0_63, %c0_64, %c0_65] : memref<2x64x32xf32, #tpu.memory_space<vmem>>, vector<1x64x32xf32>
    %160 = vector.shape_cast %159 : vector<1x64x32xf32> to vector<64x32xf32>
    %cst_66 = arith.constant dense<0.000000e+00> : vector<16x32xf32>
    %161 = tpu.matmul %158, %160, %cst_66 {dimension_numbers = #tpu.dot_dimension_numbers<[1], [0], [0], [1], [0, 0, 1, 1], [], []>} : vector<16x64xf32>, vector<64x32xf32>, vector<16x32xf32> -> vector<16x32xf32>
    %c0_67 = arith.constant 0 : index
    %c0_68 = arith.constant 0 : index
    %c0_69 = arith.constant 0 : index
    %162 = vector.load %arg16[%c0_67, %c0_68, %c0_69] : memref<2x1x32xf32, #tpu.memory_space<vmem>>, vector<1x1x32xf32>
    %163 = vector.shape_cast %162 : vector<1x1x32xf32> to vector<1x32xf32>
    %164 = vector.broadcast %163 : vector<1x32xf32> to vector<16x32xf32>
    %165 = arith.addf %161, %164 : vector<16x32xf32>
    %166 = arith.addf %149, %165 : vector<16x32xf32>
    %c0_70 = arith.constant 0 : index
    %c0_71 = arith.constant 0 : index
    %c0_72 = arith.constant 0 : index
    %167 = vector.load %arg17[%c0_70, %c0_71, %c0_72] : memref<2x1x32xf32, #tpu.memory_space<vmem>>, vector<1x1x32xf32>
    %168 = vector.shape_cast %167 : vector<1x1x32xf32> to vector<1x32xf32>
    %c0_73 = arith.constant 0 : index
    %c0_74 = arith.constant 0 : index
    %c0_75 = arith.constant 0 : index
    %169 = vector.load %arg18[%c0_73, %c0_74, %c0_75] : memref<2x1x32xf32, #tpu.memory_space<vmem>>, vector<1x1x32xf32>
    %170 = vector.shape_cast %169 : vector<1x1x32xf32> to vector<1x32xf32>
    %cst_76 = arith.constant dense<0.000000e+00> : vector<16xf32>
    %171 = vector.multi_reduction <add>, %166, %cst_76 [1] : vector<16x32xf32> to vector<16xf32>
    %172 = vector.shape_cast %171 : vector<16xf32> to vector<16x1xf32>
    %cst_77 = arith.constant 3.200000e+01 : f32
    %173 = vector.broadcast %cst_77 : f32 to vector<16x1xf32>
    %174 = arith.divf %172, %173 : vector<16x1xf32>
    %175 = vector.broadcast %174 : vector<16x1xf32> to vector<16x32xf32>
    %176 = arith.subf %166, %175 : vector<16x32xf32>
    %177 = arith.mulf %176, %176 : vector<16x32xf32>
    %cst_78 = arith.constant dense<0.000000e+00> : vector<16xf32>
    %178 = vector.multi_reduction <add>, %177, %cst_78 [1] : vector<16x32xf32> to vector<16xf32>
    %179 = vector.shape_cast %178 : vector<16xf32> to vector<16x1xf32>
    %cst_79 = arith.constant 3.200000e+01 : f32
    %180 = vector.broadcast %cst_79 : f32 to vector<16x1xf32>
    %181 = arith.divf %179, %180 : vector<16x1xf32>
    %cst_80 = arith.constant 9.99999974E-6 : f32
    %182 = vector.broadcast %cst_80 : f32 to vector<16x1xf32>
    %183 = arith.addf %181, %182 : vector<16x1xf32>
    %184 = math.rsqrt %183 : vector<16x1xf32>
    %185 = vector.broadcast %184 : vector<16x1xf32> to vector<16x32xf32>
    %186 = arith.mulf %176, %185 : vector<16x32xf32>
    %187 = vector.broadcast %168 : vector<1x32xf32> to vector<16x32xf32>
    %188 = arith.mulf %186, %187 : vector<16x32xf32>
    %189 = vector.broadcast %170 : vector<1x32xf32> to vector<16x32xf32>
    %190 = arith.addf %188, %189 : vector<16x32xf32>
    %c1 = arith.constant 1 : index
    %c0_81 = arith.constant 0 : index
    %c0_82 = arith.constant 0 : index
    %191 = vector.load %arg7[%c1, %c0_81, %c0_82] : memref<2x32x96xf32, #tpu.memory_space<vmem>>, vector<1x32x96xf32>
    %192 = vector.shape_cast %191 : vector<1x32x96xf32> to vector<32x96xf32>
    %cst_83 = arith.constant dense<0.000000e+00> : vector<16x96xf32>
    %193 = tpu.matmul %190, %192, %cst_83 {dimension_numbers = #tpu.dot_dimension_numbers<[1], [0], [0], [1], [0, 0, 1, 1], [], []>} : vector<16x32xf32>, vector<32x96xf32>, vector<16x96xf32> -> vector<16x96xf32>
    %c1_84 = arith.constant 1 : index
    %c0_85 = arith.constant 0 : index
    %c0_86 = arith.constant 0 : index
    %194 = vector.load %arg8[%c1_84, %c0_85, %c0_86] : memref<2x1x96xf32, #tpu.memory_space<vmem>>, vector<1x1x96xf32>
    %195 = vector.shape_cast %194 : vector<1x1x96xf32> to vector<1x96xf32>
    %196 = vector.broadcast %195 : vector<1x96xf32> to vector<16x96xf32>
    %197 = arith.addf %193, %196 : vector<16x96xf32>
    %198 = vector.extract_strided_slice %197 {offsets = [0, 0], sizes = [16, 32], strides = [1, 1]} : vector<16x96xf32> to vector<16x32xf32>
    %199 = vector.shape_cast %198 : vector<16x32xf32> to vector<2x8x32xf32>
    %200 = vector.extract_strided_slice %197 {offsets = [0, 32], sizes = [16, 32], strides = [1, 1]} : vector<16x96xf32> to vector<16x32xf32>
    %201 = vector.shape_cast %200 : vector<16x32xf32> to vector<2x8x32xf32>
    %202 = vector.extract_strided_slice %197 {offsets = [0, 64], sizes = [16, 32], strides = [1, 1]} : vector<16x96xf32> to vector<16x32xf32>
    %203 = vector.shape_cast %202 : vector<16x32xf32> to vector<2x8x32xf32>
    %204 = vector.extract_strided_slice %199 {offsets = [0, 0, 0], sizes = [2, 8, 8], strides = [1, 1, 1]} : vector<2x8x32xf32> to vector<2x8x8xf32>
    %205 = vector.extract_strided_slice %201 {offsets = [0, 0, 0], sizes = [2, 8, 8], strides = [1, 1, 1]} : vector<2x8x32xf32> to vector<2x8x8xf32>
    %206 = vector.extract_strided_slice %203 {offsets = [0, 0, 0], sizes = [2, 8, 8], strides = [1, 1, 1]} : vector<2x8x32xf32> to vector<2x8x8xf32>
    "tpu.trace_start"() <{level = 10 : i32, message = "bld,bmd->blm"}> : () -> ()
    %cst_87 = arith.constant dense<0.000000e+00> : vector<2x8x8xf32>
    %207 = tpu.matmul %204, %205, %cst_87 {dimension_numbers = #tpu.dot_dimension_numbers<[2], [2], [1], [1], [0, 0, 0, 1, 1, 1], [0], [0]>} : vector<2x8x8xf32>, vector<2x8x8xf32>, vector<2x8x8xf32> -> vector<2x8x8xf32>
    "tpu.trace_stop"() : () -> ()
    %208 = vector.broadcast %34 : vector<2x1x8xf32> to vector<2x8x8xf32>
    %209 = arith.addf %207, %208 : vector<2x8x8xf32>
    %cst_88 = arith.constant dense<0xFF800000> : vector<2x8xf32>
    %210 = vector.multi_reduction <maximumf>, %209, %cst_88 [2] : vector<2x8x8xf32> to vector<2x8xf32>
    %211 = vector.shape_cast %210 : vector<2x8xf32> to vector<2x8x1xf32>
    %212 = vector.broadcast %211 : vector<2x8x1xf32> to vector<2x8x8xf32>
    %213 = arith.subf %209, %212 : vector<2x8x8xf32>
    %214 = math.exp %213 : vector<2x8x8xf32>
    %cst_89 = arith.constant dense<0.000000e+00> : vector<2x8xf32>
    %215 = vector.multi_reduction <add>, %214, %cst_89 [2] : vector<2x8x8xf32> to vector<2x8xf32>
    %216 = vector.shape_cast %215 : vector<2x8xf32> to vector<2x8x1xf32>
    %217 = tpu.reciprocal %216 {approx = true} : vector<2x8x1xf32> -> vector<2x8x1xf32>
    %218 = vector.broadcast %217 : vector<2x8x1xf32> to vector<2x8x8xf32>
    %219 = arith.mulf %214, %218 : vector<2x8x8xf32>
    "tpu.trace_start"() <{level = 10 : i32, message = "blm,bmd->bld"}> : () -> ()
    %cst_90 = arith.constant dense<0.000000e+00> : vector<2x8x8xf32>
    %220 = tpu.matmul %219, %206, %cst_90 {dimension_numbers = #tpu.dot_dimension_numbers<[2], [1], [1], [2], [0, 0, 0, 1, 1, 2], [0], [0]>} : vector<2x8x8xf32>, vector<2x8x8xf32>, vector<2x8x8xf32> -> vector<2x8x8xf32>
    "tpu.trace_stop"() : () -> ()
    %221 = vector.extract_strided_slice %199 {offsets = [0, 0, 8], sizes = [2, 8, 8], strides = [1, 1, 1]} : vector<2x8x32xf32> to vector<2x8x8xf32>
    %222 = vector.extract_strided_slice %201 {offsets = [0, 0, 8], sizes = [2, 8, 8], strides = [1, 1, 1]} : vector<2x8x32xf32> to vector<2x8x8xf32>
    %223 = vector.extract_strided_slice %203 {offsets = [0, 0, 8], sizes = [2, 8, 8], strides = [1, 1, 1]} : vector<2x8x32xf32> to vector<2x8x8xf32>
    "tpu.trace_start"() <{level = 10 : i32, message = "bld,bmd->blm"}> : () -> ()
    %cst_91 = arith.constant dense<0.000000e+00> : vector<2x8x8xf32>
    %224 = tpu.matmul %221, %222, %cst_91 {dimension_numbers = #tpu.dot_dimension_numbers<[2], [2], [1], [1], [0, 0, 0, 1, 1, 1], [0], [0]>} : vector<2x8x8xf32>, vector<2x8x8xf32>, vector<2x8x8xf32> -> vector<2x8x8xf32>
    "tpu.trace_stop"() : () -> ()
    %225 = vector.broadcast %34 : vector<2x1x8xf32> to vector<2x8x8xf32>
    %226 = arith.addf %224, %225 : vector<2x8x8xf32>
    %cst_92 = arith.constant dense<0xFF800000> : vector<2x8xf32>
    %227 = vector.multi_reduction <maximumf>, %226, %cst_92 [2] : vector<2x8x8xf32> to vector<2x8xf32>
    %228 = vector.shape_cast %227 : vector<2x8xf32> to vector<2x8x1xf32>
    %229 = vector.broadcast %228 : vector<2x8x1xf32> to vector<2x8x8xf32>
    %230 = arith.subf %226, %229 : vector<2x8x8xf32>
    %231 = math.exp %230 : vector<2x8x8xf32>
    %cst_93 = arith.constant dense<0.000000e+00> : vector<2x8xf32>
    %232 = vector.multi_reduction <add>, %231, %cst_93 [2] : vector<2x8x8xf32> to vector<2x8xf32>
    %233 = vector.shape_cast %232 : vector<2x8xf32> to vector<2x8x1xf32>
    %234 = tpu.reciprocal %233 {approx = true} : vector<2x8x1xf32> -> vector<2x8x1xf32>
    %235 = vector.broadcast %234 : vector<2x8x1xf32> to vector<2x8x8xf32>
    %236 = arith.mulf %231, %235 : vector<2x8x8xf32>
    "tpu.trace_start"() <{level = 10 : i32, message = "blm,bmd->bld"}> : () -> ()
    %cst_94 = arith.constant dense<0.000000e+00> : vector<2x8x8xf32>
    %237 = tpu.matmul %236, %223, %cst_94 {dimension_numbers = #tpu.dot_dimension_numbers<[2], [1], [1], [2], [0, 0, 0, 1, 1, 2], [0], [0]>} : vector<2x8x8xf32>, vector<2x8x8xf32>, vector<2x8x8xf32> -> vector<2x8x8xf32>
    "tpu.trace_stop"() : () -> ()
    %238 = vector.extract_strided_slice %199 {offsets = [0, 0, 16], sizes = [2, 8, 8], strides = [1, 1, 1]} : vector<2x8x32xf32> to vector<2x8x8xf32>
    %239 = vector.extract_strided_slice %201 {offsets = [0, 0, 16], sizes = [2, 8, 8], strides = [1, 1, 1]} : vector<2x8x32xf32> to vector<2x8x8xf32>
    %240 = vector.extract_strided_slice %203 {offsets = [0, 0, 16], sizes = [2, 8, 8], strides = [1, 1, 1]} : vector<2x8x32xf32> to vector<2x8x8xf32>
    "tpu.trace_start"() <{level = 10 : i32, message = "bld,bmd->blm"}> : () -> ()
    %cst_95 = arith.constant dense<0.000000e+00> : vector<2x8x8xf32>
    %241 = tpu.matmul %238, %239, %cst_95 {dimension_numbers = #tpu.dot_dimension_numbers<[2], [2], [1], [1], [0, 0, 0, 1, 1, 1], [0], [0]>} : vector<2x8x8xf32>, vector<2x8x8xf32>, vector<2x8x8xf32> -> vector<2x8x8xf32>
    "tpu.trace_stop"() : () -> ()
    %242 = vector.broadcast %34 : vector<2x1x8xf32> to vector<2x8x8xf32>
    %243 = arith.addf %241, %242 : vector<2x8x8xf32>
    %cst_96 = arith.constant dense<0xFF800000> : vector<2x8xf32>
    %244 = vector.multi_reduction <maximumf>, %243, %cst_96 [2] : vector<2x8x8xf32> to vector<2x8xf32>
    %245 = vector.shape_cast %244 : vector<2x8xf32> to vector<2x8x1xf32>
    %246 = vector.broadcast %245 : vector<2x8x1xf32> to vector<2x8x8xf32>
    %247 = arith.subf %243, %246 : vector<2x8x8xf32>
    %248 = math.exp %247 : vector<2x8x8xf32>
    %cst_97 = arith.constant dense<0.000000e+00> : vector<2x8xf32>
    %249 = vector.multi_reduction <add>, %248, %cst_97 [2] : vector<2x8x8xf32> to vector<2x8xf32>
    %250 = vector.shape_cast %249 : vector<2x8xf32> to vector<2x8x1xf32>
    %251 = tpu.reciprocal %250 {approx = true} : vector<2x8x1xf32> -> vector<2x8x1xf32>
    %252 = vector.broadcast %251 : vector<2x8x1xf32> to vector<2x8x8xf32>
    %253 = arith.mulf %248, %252 : vector<2x8x8xf32>
    "tpu.trace_start"() <{level = 10 : i32, message = "blm,bmd->bld"}> : () -> ()
    %cst_98 = arith.constant dense<0.000000e+00> : vector<2x8x8xf32>
    %254 = tpu.matmul %253, %240, %cst_98 {dimension_numbers = #tpu.dot_dimension_numbers<[2], [1], [1], [2], [0, 0, 0, 1, 1, 2], [0], [0]>} : vector<2x8x8xf32>, vector<2x8x8xf32>, vector<2x8x8xf32> -> vector<2x8x8xf32>
    "tpu.trace_stop"() : () -> ()
    %255 = vector.extract_strided_slice %199 {offsets = [0, 0, 24], sizes = [2, 8, 8], strides = [1, 1, 1]} : vector<2x8x32xf32> to vector<2x8x8xf32>
    %256 = vector.extract_strided_slice %201 {offsets = [0, 0, 24], sizes = [2, 8, 8], strides = [1, 1, 1]} : vector<2x8x32xf32> to vector<2x8x8xf32>
    %257 = vector.extract_strided_slice %203 {offsets = [0, 0, 24], sizes = [2, 8, 8], strides = [1, 1, 1]} : vector<2x8x32xf32> to vector<2x8x8xf32>
    "tpu.trace_start"() <{level = 10 : i32, message = "bld,bmd->blm"}> : () -> ()
    %cst_99 = arith.constant dense<0.000000e+00> : vector<2x8x8xf32>
    %258 = tpu.matmul %255, %256, %cst_99 {dimension_numbers = #tpu.dot_dimension_numbers<[2], [2], [1], [1], [0, 0, 0, 1, 1, 1], [0], [0]>} : vector<2x8x8xf32>, vector<2x8x8xf32>, vector<2x8x8xf32> -> vector<2x8x8xf32>
    "tpu.trace_stop"() : () -> ()
    %259 = vector.broadcast %34 : vector<2x1x8xf32> to vector<2x8x8xf32>
    %260 = arith.addf %258, %259 : vector<2x8x8xf32>
    %cst_100 = arith.constant dense<0xFF800000> : vector<2x8xf32>
    %261 = vector.multi_reduction <maximumf>, %260, %cst_100 [2] : vector<2x8x8xf32> to vector<2x8xf32>
    %262 = vector.shape_cast %261 : vector<2x8xf32> to vector<2x8x1xf32>
    %263 = vector.broadcast %262 : vector<2x8x1xf32> to vector<2x8x8xf32>
    %264 = arith.subf %260, %263 : vector<2x8x8xf32>
    %265 = math.exp %264 : vector<2x8x8xf32>
    %cst_101 = arith.constant dense<0.000000e+00> : vector<2x8xf32>
    %266 = vector.multi_reduction <add>, %265, %cst_101 [2] : vector<2x8x8xf32> to vector<2x8xf32>
    %267 = vector.shape_cast %266 : vector<2x8xf32> to vector<2x8x1xf32>
    %268 = tpu.reciprocal %267 {approx = true} : vector<2x8x1xf32> -> vector<2x8x1xf32>
    %269 = vector.broadcast %268 : vector<2x8x1xf32> to vector<2x8x8xf32>
    %270 = arith.mulf %265, %269 : vector<2x8x8xf32>
    "tpu.trace_start"() <{level = 10 : i32, message = "blm,bmd->bld"}> : () -> ()
    %cst_102 = arith.constant dense<0.000000e+00> : vector<2x8x8xf32>
    %271 = tpu.matmul %270, %257, %cst_102 {dimension_numbers = #tpu.dot_dimension_numbers<[2], [1], [1], [2], [0, 0, 0, 1, 1, 2], [0], [0]>} : vector<2x8x8xf32>, vector<2x8x8xf32>, vector<2x8x8xf32> -> vector<2x8x8xf32>
    "tpu.trace_stop"() : () -> ()
    %272 = tpu.concatenate %220, %237, %254, %271 in 2 : vector<2x8x8xf32>, vector<2x8x8xf32>, vector<2x8x8xf32>, vector<2x8x8xf32> -> vector<2x8x32xf32>
    %273 = vector.shape_cast %272 : vector<2x8x32xf32> to vector<16x32xf32>
    %c1_103 = arith.constant 1 : index
    %c0_104 = arith.constant 0 : index
    %c0_105 = arith.constant 0 : index
    %274 = vector.load %arg9[%c1_103, %c0_104, %c0_105] : memref<2x32x32xf32, #tpu.memory_space<vmem>>, vector<1x32x32xf32>
    %275 = vector.shape_cast %274 : vector<1x32x32xf32> to vector<32x32xf32>
    %cst_106 = arith.constant dense<0.000000e+00> : vector<16x32xf32>
    %276 = tpu.matmul %273, %275, %cst_106 {dimension_numbers = #tpu.dot_dimension_numbers<[1], [0], [0], [1], [0, 0, 1, 1], [], []>} : vector<16x32xf32>, vector<32x32xf32>, vector<16x32xf32> -> vector<16x32xf32>
    %c1_107 = arith.constant 1 : index
    %c0_108 = arith.constant 0 : index
    %c0_109 = arith.constant 0 : index
    %277 = vector.load %arg10[%c1_107, %c0_108, %c0_109] : memref<2x1x32xf32, #tpu.memory_space<vmem>>, vector<1x1x32xf32>
    %278 = vector.shape_cast %277 : vector<1x1x32xf32> to vector<1x32xf32>
    %279 = vector.broadcast %278 : vector<1x32xf32> to vector<16x32xf32>
    %280 = arith.addf %276, %279 : vector<16x32xf32>
    %281 = arith.addf %190, %280 : vector<16x32xf32>
    %c1_110 = arith.constant 1 : index
    %c0_111 = arith.constant 0 : index
    %c0_112 = arith.constant 0 : index
    %282 = vector.load %arg11[%c1_110, %c0_111, %c0_112] : memref<2x1x32xf32, #tpu.memory_space<vmem>>, vector<1x1x32xf32>
    %283 = vector.shape_cast %282 : vector<1x1x32xf32> to vector<1x32xf32>
    %c1_113 = arith.constant 1 : index
    %c0_114 = arith.constant 0 : index
    %c0_115 = arith.constant 0 : index
    %284 = vector.load %arg12[%c1_113, %c0_114, %c0_115] : memref<2x1x32xf32, #tpu.memory_space<vmem>>, vector<1x1x32xf32>
    %285 = vector.shape_cast %284 : vector<1x1x32xf32> to vector<1x32xf32>
    %cst_116 = arith.constant dense<0.000000e+00> : vector<16xf32>
    %286 = vector.multi_reduction <add>, %281, %cst_116 [1] : vector<16x32xf32> to vector<16xf32>
    %287 = vector.shape_cast %286 : vector<16xf32> to vector<16x1xf32>
    %cst_117 = arith.constant 3.200000e+01 : f32
    %288 = vector.broadcast %cst_117 : f32 to vector<16x1xf32>
    %289 = arith.divf %287, %288 : vector<16x1xf32>
    %290 = vector.broadcast %289 : vector<16x1xf32> to vector<16x32xf32>
    %291 = arith.subf %281, %290 : vector<16x32xf32>
    %292 = arith.mulf %291, %291 : vector<16x32xf32>
    %cst_118 = arith.constant dense<0.000000e+00> : vector<16xf32>
    %293 = vector.multi_reduction <add>, %292, %cst_118 [1] : vector<16x32xf32> to vector<16xf32>
    %294 = vector.shape_cast %293 : vector<16xf32> to vector<16x1xf32>
    %cst_119 = arith.constant 3.200000e+01 : f32
    %295 = vector.broadcast %cst_119 : f32 to vector<16x1xf32>
    %296 = arith.divf %294, %295 : vector<16x1xf32>
    %cst_120 = arith.constant 9.99999974E-6 : f32
    %297 = vector.broadcast %cst_120 : f32 to vector<16x1xf32>
    %298 = arith.addf %296, %297 : vector<16x1xf32>
    %299 = math.rsqrt %298 : vector<16x1xf32>
    %300 = vector.broadcast %299 : vector<16x1xf32> to vector<16x32xf32>
    %301 = arith.mulf %291, %300 : vector<16x32xf32>
    %302 = vector.broadcast %283 : vector<1x32xf32> to vector<16x32xf32>
    %303 = arith.mulf %301, %302 : vector<16x32xf32>
    %304 = vector.broadcast %285 : vector<1x32xf32> to vector<16x32xf32>
    %305 = arith.addf %303, %304 : vector<16x32xf32>
    %c1_121 = arith.constant 1 : index
    %c0_122 = arith.constant 0 : index
    %c0_123 = arith.constant 0 : index
    %306 = vector.load %arg13[%c1_121, %c0_122, %c0_123] : memref<2x32x64xf32, #tpu.memory_space<vmem>>, vector<1x32x64xf32>
    %307 = vector.shape_cast %306 : vector<1x32x64xf32> to vector<32x64xf32>
    %cst_124 = arith.constant dense<0.000000e+00> : vector<16x64xf32>
    %308 = tpu.matmul %305, %307, %cst_124 {dimension_numbers = #tpu.dot_dimension_numbers<[1], [0], [0], [1], [0, 0, 1, 1], [], []>} : vector<16x32xf32>, vector<32x64xf32>, vector<16x64xf32> -> vector<16x64xf32>
    %c1_125 = arith.constant 1 : index
    %c0_126 = arith.constant 0 : index
    %c0_127 = arith.constant 0 : index
    %309 = vector.load %arg14[%c1_125, %c0_126, %c0_127] : memref<2x1x64xf32, #tpu.memory_space<vmem>>, vector<1x1x64xf32>
    %310 = vector.shape_cast %309 : vector<1x1x64xf32> to vector<1x64xf32>
    %311 = vector.broadcast %310 : vector<1x64xf32> to vector<16x64xf32>
    %312 = arith.addf %308, %311 : vector<16x64xf32>
    %cst_128 = arith.constant 0.000000e+00 : f32
    %313 = vector.broadcast %cst_128 : f32 to vector<16x64xf32>
    %314 = arith.maximumf %312, %313 : vector<16x64xf32>
    %c1_129 = arith.constant 1 : index
    %c0_130 = arith.constant 0 : index
    %c0_131 = arith.constant 0 : index
    %315 = vector.load %arg15[%c1_129, %c0_130, %c0_131] : memref<2x64x32xf32, #tpu.memory_space<vmem>>, vector<1x64x32xf32>
    %316 = vector.shape_cast %315 : vector<1x64x32xf32> to vector<64x32xf32>
    %cst_132 = arith.constant dense<0.000000e+00> : vector<16x32xf32>
    %317 = tpu.matmul %314, %316, %cst_132 {dimension_numbers = #tpu.dot_dimension_numbers<[1], [0], [0], [1], [0, 0, 1, 1], [], []>} : vector<16x64xf32>, vector<64x32xf32>, vector<16x32xf32> -> vector<16x32xf32>
    %c1_133 = arith.constant 1 : index
    %c0_134 = arith.constant 0 : index
    %c0_135 = arith.constant 0 : index
    %318 = vector.load %arg16[%c1_133, %c0_134, %c0_135] : memref<2x1x32xf32, #tpu.memory_space<vmem>>, vector<1x1x32xf32>
    %319 = vector.shape_cast %318 : vector<1x1x32xf32> to vector<1x32xf32>
    %320 = vector.broadcast %319 : vector<1x32xf32> to vector<16x32xf32>
    %321 = arith.addf %317, %320 : vector<16x32xf32>
    %322 = arith.addf %305, %321 : vector<16x32xf32>
    %c1_136 = arith.constant 1 : index
    %c0_137 = arith.constant 0 : index
    %c0_138 = arith.constant 0 : index
    %323 = vector.load %arg17[%c1_136, %c0_137, %c0_138] : memref<2x1x32xf32, #tpu.memory_space<vmem>>, vector<1x1x32xf32>
    %324 = vector.shape_cast %323 : vector<1x1x32xf32> to vector<1x32xf32>
    %c1_139 = arith.constant 1 : index
    %c0_140 = arith.constant 0 : index
    %c0_141 = arith.constant 0 : index
    %325 = vector.load %arg18[%c1_139, %c0_140, %c0_141] : memref<2x1x32xf32, #tpu.memory_space<vmem>>, vector<1x1x32xf32>
    %326 = vector.shape_cast %325 : vector<1x1x32xf32> to vector<1x32xf32>
    %cst_142 = arith.constant dense<0.000000e+00> : vector<16xf32>
    %327 = vector.multi_reduction <add>, %322, %cst_142 [1] : vector<16x32xf32> to vector<16xf32>
    %328 = vector.shape_cast %327 : vector<16xf32> to vector<16x1xf32>
    %cst_143 = arith.constant 3.200000e+01 : f32
    %329 = vector.broadcast %cst_143 : f32 to vector<16x1xf32>
    %330 = arith.divf %328, %329 : vector<16x1xf32>
    %331 = vector.broadcast %330 : vector<16x1xf32> to vector<16x32xf32>
    %332 = arith.subf %322, %331 : vector<16x32xf32>
    %333 = arith.mulf %332, %332 : vector<16x32xf32>
    %cst_144 = arith.constant dense<0.000000e+00> : vector<16xf32>
    %334 = vector.multi_reduction <add>, %333, %cst_144 [1] : vector<16x32xf32> to vector<16xf32>
    %335 = vector.shape_cast %334 : vector<16xf32> to vector<16x1xf32>
    %cst_145 = arith.constant 3.200000e+01 : f32
    %336 = vector.broadcast %cst_145 : f32 to vector<16x1xf32>
    %337 = arith.divf %335, %336 : vector<16x1xf32>
    %cst_146 = arith.constant 9.99999974E-6 : f32
    %338 = vector.broadcast %cst_146 : f32 to vector<16x1xf32>
    %339 = arith.addf %337, %338 : vector<16x1xf32>
    %340 = math.rsqrt %339 : vector<16x1xf32>
    %341 = vector.broadcast %340 : vector<16x1xf32> to vector<16x32xf32>
    %342 = arith.mulf %332, %341 : vector<16x32xf32>
    %343 = vector.broadcast %324 : vector<1x32xf32> to vector<16x32xf32>
    %344 = arith.mulf %342, %343 : vector<16x32xf32>
    %345 = vector.broadcast %326 : vector<1x32xf32> to vector<16x32xf32>
    %346 = arith.addf %344, %345 : vector<16x32xf32>
    %347 = vector.shape_cast %346 : vector<16x32xf32> to vector<2x8x32xf32>
    %348 = vector.extract_strided_slice %347 {offsets = [0, 0, 0], sizes = [2, 1, 32], strides = [1, 1, 1]} : vector<2x8x32xf32> to vector<2x1x32xf32>
    %349 = vector.shape_cast %348 : vector<2x1x32xf32> to vector<2x32xf32>
    %c0_147 = arith.constant 0 : index
    %c0_148 = arith.constant 0 : index
    %350 = vector.load %arg19[%c0_147, %c0_148] : memref<32x1xf32, #tpu.memory_space<vmem>>, vector<32x1xf32>
    %cst_149 = arith.constant dense<0.000000e+00> : vector<2x1xf32>
    %351 = tpu.matmul %349, %350, %cst_149 {dimension_numbers = #tpu.dot_dimension_numbers<[1], [0], [0], [1], [0, 0, 1, 1], [], []>} : vector<2x32xf32>, vector<32x1xf32>, vector<2x1xf32> -> vector<2x1xf32>
    %c0_150 = arith.constant 0 : index
    %c0_151 = arith.constant 0 : index
    %352 = vector.load %arg20[%c0_150, %c0_151] : memref<1x1xf32, #tpu.memory_space<vmem>>, vector<1x1xf32>
    %353 = vector.broadcast %352 : vector<1x1xf32> to vector<2x1xf32>
    %354 = arith.addf %351, %353 : vector<2x1xf32>
    %c0_152 = arith.constant 0 : index
    %c0_153 = arith.constant 0 : index
    %355 = vector.load %arg21[%c0_152, %c0_153] : memref<2x1xf32, #tpu.memory_space<vmem>>, vector<2x1xf32>
    tpu.vector_store %arg21[%c0_152, %c0_153], %354 {strides = array<i32>} : memref<2x1xf32, #tpu.memory_space<vmem>>, vector<2x1xf32>,
    return
  }
  func.func @transform_0(%arg0: i32) -> (i32, i32) {
    %c0_i32 = arith.constant 0 : i32
    %c0_i32_0 = arith.constant 0 : i32
    return %arg0, %c0_i32 : i32, i32
  }
  func.func @transform_1(%arg0: i32) -> (i32, i32) {
    %c0_i32 = arith.constant 0 : i32
    %c0_i32_0 = arith.constant 0 : i32
    return %arg0, %c0_i32 : i32, i32
  }
  func.func @transform_2(%arg0: i32) -> (i32, i32) {
    %c0_i32 = arith.constant 0 : i32
    %c0_i32_0 = arith.constant 0 : i32
    return %arg0, %c0_i32 : i32, i32
  }
  func.func @transform_3(%arg0: i32) -> (i32, i32) {
    %c0_i32 = arith.constant 0 : i32
    %c0_i32_0 = arith.constant 0 : i32
    %c0_i32_1 = arith.constant 0 : i32
    return %c0_i32, %c0_i32_0 : i32, i32
  }
  func.func @transform_4(%arg0: i32) -> (i32, i32) {
    %c0_i32 = arith.constant 0 : i32
    %c0_i32_0 = arith.constant 0 : i32
    %c0_i32_1 = arith.constant 0 : i32
    return %c0_i32, %c0_i32_0 : i32, i32
  }
  func.func @transform_5(%arg0: i32) -> (i32, i32) {
    %c0_i32 = arith.constant 0 : i32
    %c0_i32_0 = arith.constant 0 : i32
    %c0_i32_1 = arith.constant 0 : i32
    return %c0_i32, %c0_i32_0 : i32, i32
  }
  func.func @transform_6(%arg0: i32) -> (i32, i32, i32) {
    %c0_i32 = arith.constant 0 : i32
    %c0_i32_0 = arith.constant 0 : i32
    %c0_i32_1 = arith.constant 0 : i32
    %c0_i32_2 = arith.constant 0 : i32
    return %c0_i32, %c0_i32_0, %c0_i32_1 : i32, i32, i32
  }
  func.func @transform_7(%arg0: i32) -> (i32, i32, i32) {
    %c0_i32 = arith.constant 0 : i32
    %c0_i32_0 = arith.constant 0 : i32
    %c0_i32_1 = arith.constant 0 : i32
    %c0_i32_2 = arith.constant 0 : i32
    return %c0_i32, %c0_i32_0, %c0_i32_1 : i32, i32, i32
  }
  func.func @transform_8(%arg0: i32) -> (i32, i32, i32) {
    %c0_i32 = arith.constant 0 : i32
    %c0_i32_0 = arith.constant 0 : i32
    %c0_i32_1 = arith.constant 0 : i32
    %c0_i32_2 = arith.constant 0 : i32
    return %c0_i32, %c0_i32_0, %c0_i32_1 : i32, i32, i32
  }
  func.func @transform_9(%arg0: i32) -> (i32, i32, i32) {
    %c0_i32 = arith.constant 0 : i32
    %c0_i32_0 = arith.constant 0 : i32
    %c0_i32_1 = arith.constant 0 : i32
    %c0_i32_2 = arith.constant 0 : i32
    return %c0_i32, %c0_i32_0, %c0_i32_1 : i32, i32, i32
  }
  func.func @transform_10(%arg0: i32) -> (i32, i32, i32) {
    %c0_i32 = arith.constant 0 : i32
    %c0_i32_0 = arith.constant 0 : i32
    %c0_i32_1 = arith.constant 0 : i32
    %c0_i32_2 = arith.constant 0 : i32
    return %c0_i32, %c0_i32_0, %c0_i32_1 : i32, i32, i32
  }
  func.func @transform_11(%arg0: i32) -> (i32, i32, i32) {
    %c0_i32 = arith.constant 0 : i32
    %c0_i32_0 = arith.constant 0 : i32
    %c0_i32_1 = arith.constant 0 : i32
    %c0_i32_2 = arith.constant 0 : i32
    return %c0_i32, %c0_i32_0, %c0_i32_1 : i32, i32, i32
  }
  func.func @transform_12(%arg0: i32) -> (i32, i32, i32) {
    %c0_i32 = arith.constant 0 : i32
    %c0_i32_0 = arith.constant 0 : i32
    %c0_i32_1 = arith.constant 0 : i32
    %c0_i32_2 = arith.constant 0 : i32
    return %c0_i32, %c0_i32_0, %c0_i32_1 : i32, i32, i32
  }
  func.func @transform_13(%arg0: i32) -> (i32, i32, i32) {
    %c0_i32 = arith.constant 0 : i32
    %c0_i32_0 = arith.constant 0 : i32
    %c0_i32_1 = arith.constant 0 : i32
    %c0_i32_2 = arith.constant 0 : i32
    return %c0_i32, %c0_i32_0, %c0_i32_1 : i32, i32, i32
  }
  func.func @transform_14(%arg0: i32) -> (i32, i32, i32) {
    %c0_i32 = arith.constant 0 : i32
    %c0_i32_0 = arith.constant 0 : i32
    %c0_i32_1 = arith.constant 0 : i32
    %c0_i32_2 = arith.constant 0 : i32
    return %c0_i32, %c0_i32_0, %c0_i32_1 : i32, i32, i32
  }
  func.func @transform_15(%arg0: i32) -> (i32, i32, i32) {
    %c0_i32 = arith.constant 0 : i32
    %c0_i32_0 = arith.constant 0 : i32
    %c0_i32_1 = arith.constant 0 : i32
    %c0_i32_2 = arith.constant 0 : i32
    return %c0_i32, %c0_i32_0, %c0_i32_1 : i32, i32, i32
  }
  func.func @transform_16(%arg0: i32) -> (i32, i32, i32) {
    %c0_i32 = arith.constant 0 : i32
    %c0_i32_0 = arith.constant 0 : i32
    %c0_i32_1 = arith.constant 0 : i32
    %c0_i32_2 = arith.constant 0 : i32
    return %c0_i32, %c0_i32_0, %c0_i32_1 : i32, i32, i32
  }
  func.func @transform_17(%arg0: i32) -> (i32, i32, i32) {
    %c0_i32 = arith.constant 0 : i32
    %c0_i32_0 = arith.constant 0 : i32
    %c0_i32_1 = arith.constant 0 : i32
    %c0_i32_2 = arith.constant 0 : i32
    return %c0_i32, %c0_i32_0, %c0_i32_1 : i32, i32, i32
  }
  func.func @transform_18(%arg0: i32) -> (i32, i32) {
    %c0_i32 = arith.constant 0 : i32
    %c0_i32_0 = arith.constant 0 : i32
    %c0_i32_1 = arith.constant 0 : i32
    return %c0_i32, %c0_i32_0 : i32, i32
  }
  func.func @transform_19(%arg0: i32) -> (i32, i32) {
    %c0_i32 = arith.constant 0 : i32
    %c0_i32_0 = arith.constant 0 : i32
    %c0_i32_1 = arith.constant 0 : i32
    return %c0_i32, %c0_i32_0 : i32, i32
  }
  func.func @transform_20(%arg0: i32) -> (i32, i32) {
    %c0_i32 = arith.constant 0 : i32
    %c0_i32_0 = arith.constant 0 : i32
    return %arg0, %c0_i32 : i32, i32
  }
}

</mosaic_0001>

<llo_original>
// kernel: tpu_custom_call.1
$region0: #{tpu_custom_call.1}
  #allocation0 [shape = 'u32[]', space=smem, size = 0x4, offset = 0x4, fixed_abs, tag = 'smem constant byte address 0x4 - core index']
  #allocation1 [shape = 'u32[144,128]{1,0:T(1,128)}', space=vmem, size = 0x12000, scoped, tag = 'internal scratch']
  #allocation2 [shape = 'f32[1,1]{1,0:T(1,128)S(1)}', space=vmem, size = 0x200, scoped, tag = 'scoped memory for tpu_custom_call.1']
  %s0 = inlined_call_operand.vmem [shape: s32[2,8], index: 0, kind: input, shape index: {}]
  %s1 = inlined_call_operand.vmem [shape: s32[2,8], index: 1, kind: input, shape index: {}]
  %s2 = inlined_call_operand.vmem [shape: s32[2,1], index: 2, kind: input, shape index: {}]
  %s3 = inlined_call_operand.vmem [shape: f32[8,32], index: 3, kind: input, shape index: {}]
  %s4 = inlined_call_operand.hbm [shape: f32[28,32], index: 4, kind: input, shape index: {}]
  %s5 = inlined_call_operand.vmem [shape: f32[5,32], index: 5, kind: input, shape index: {}]
  %s6 = inlined_call_operand.vmem [shape: f32[2,32,96], index: 6, kind: input, shape index: {}]
  %s7 = inlined_call_operand.vmem [shape: f32[2,1,96], index: 7, kind: input, shape index: {}]
  %s8 = inlined_call_operand.vmem [shape: f32[2,32,32], index: 8, kind: input, shape index: {}]
  %s9 = inlined_call_operand.vmem [shape: f32[2,1,32], index: 9, kind: input, shape index: {}]
  %s10 = inlined_call_operand.vmem [shape: f32[2,1,32], index: 10, kind: input, shape index: {}]
  %s11 = inlined_call_operand.vmem [shape: f32[2,1,32], index: 11, kind: input, shape index: {}]
  %s12 = inlined_call_operand.vmem [shape: f32[2,32,64], index: 12, kind: input, shape index: {}]
  %s13 = inlined_call_operand.hbm [shape: f32[2,1,64], index: 13, kind: input, shape index: {}]
  %s14 = inlined_call_operand.vmem [shape: f32[2,64,32], index: 14, kind: input, shape index: {}]
  %s15 = inlined_call_operand.vmem [shape: f32[2,1,32], index: 15, kind: input, shape index: {}]
  %s16 = inlined_call_operand.vmem [shape: f32[2,1,32], index: 16, kind: input, shape index: {}]
  %s17 = inlined_call_operand.vmem [shape: f32[2,1,32], index: 17, kind: input, shape index: {}]
  %s18 = inlined_call_operand.vmem [shape: f32[32,1], index: 18, kind: input, shape index: {}]
  %s19 = inlined_call_operand.<no memory space> [shape: f32[1,1], index: 19, kind: input, shape index: {}]
  %s20 = inlined_call_operand.vmem [shape: f32[2,1], index: 20, kind: output, shape index: {}]
  %s21 = sld [smem:[#allocation0]]
  $region98: #{tpu_custom_call.1} parent=0
    _
  %s23 = ssub.s32 1, %s21
  %s24 = scalar_select 0, %s23, %s21
  %v25 = vstv %s19
  %26 = vst [vmem:[#allocation2] sm:$0x1] %v25
  $region1: #{tpu_custom_call.1} parent=0
    #allocation3 [shape = 'u8[16384]{0}', space=vmem, size = 0x4000, scoped, tag = 'input window, operand 4, single buffered']
    #allocation4 [shape = 's32[1]{0}', space=sflag, size = 0x4, scoped, tag = 'scoped memory for tpu_custom_call.1']
    #allocation5 [shape = 'u8[1024]{0}', space=vmem, size = 0x400, scoped, tag = 'input window, operand 13, single buffered']
    #allocation6 [shape = 's32[1]{0}', space=sflag, size = 0x4, scoped, tag = 'scoped memory for tpu_custom_call.1']
    %27 = vsyncpa [#allocation4], 0
    %28 = vsyncpa [#allocation6], 0
    // Predicated region
    $region2: #{tpu_custom_call.1} parent=1 // pred_check
      _
    $region3: #{tpu_custom_call.1} parent=1 // pred_check_branch
      %30 = sbr.rel (0) target = $region5
    $region4: #{tpu_custom_call.1} parent=1 // pred_region
      _
    $region5: #{tpu_custom_call.1} parent=1 // pred_fallthru
      _
    // Predicated region
    $region6: #{tpu_custom_call.1} parent=1 // pred_check
      _
    $region7: #{tpu_custom_call.1} parent=1 // pred_check_branch
      %32 = sbr.rel (0) target = $region9
    $region8: #{tpu_custom_call.1} parent=1 // pred_region
      _
    $region9: #{tpu_custom_call.1} parent=1 // pred_fallthru
      _
    // Predicated region
    $region10: #{tpu_custom_call.1} parent=1 // pred_check
      _
    $region11: #{tpu_custom_call.1} parent=1 // pred_check_branch
      %34 = sbr.rel (0) target = $region13
    $region12: #{tpu_custom_call.1} parent=1 // pred_region
      _
    $region13: #{tpu_custom_call.1} parent=1 // pred_fallthru
      _
    // Predicated region
    $region14: #{tpu_custom_call.1} parent=1 // pred_check
      _
    $region15: #{tpu_custom_call.1} parent=1 // pred_check_branch
      %36 = sbr.rel (0) target = $region17
    $region16: #{tpu_custom_call.1} parent=1 // pred_region
      _
    $region17: #{tpu_custom_call.1} parent=1 // pred_fallthru
      _
    // Predicated region
    $region18: #{tpu_custom_call.1} parent=1 // pred_check
      _
    $region19: #{tpu_custom_call.1} parent=1 // pred_check_branch
      %38 = sbr.rel (0) target = $region21
    $region20: #{tpu_custom_call.1} parent=1 // pred_region
      %s40 = ssub.s32 512, 512
      %41 = vsyncadd [#allocation4], %s40
      %s42 = sshll.u32 [#allocation3], 4
      %s43 = int_to_ptr.vmem [resolvable:$true] %s42
      %48 = dma.hbm_to_vmem [thread:$0]  %s4, 512, %s43, [#allocation4], 128, 128, 8
    $region21: #{tpu_custom_call.1} parent=1 // pred_fallthru
      _
    // Predicated region
    $region22: #{tpu_custom_call.1} parent=1 // pred_check
      _
    $region23: #{tpu_custom_call.1} parent=1 // pred_check_branch
      %50 = sbr.rel (0) target = $region25
    $region24: #{tpu_custom_call.1} parent=1 // pred_region
      _
    $region25: #{tpu_custom_call.1} parent=1 // pred_fallthru
      _
    // Predicated region
    $region26: #{tpu_custom_call.1} parent=1 // pred_check
      _
    $region27: #{tpu_custom_call.1} parent=1 // pred_check_branch
      %52 = sbr.rel (0) target = $region29
    $region28: #{tpu_custom_call.1} parent=1 // pred_region
      _
    $region29: #{tpu_custom_call.1} parent=1 // pred_fallthru
      _
    // Predicated region
    $region30: #{tpu_custom_call.1} parent=1 // pred_check
      _
    $region31: #{tpu_custom_call.1} parent=1 // pred_check_branch
      %54 = sbr.rel (0) target = $region33
    $region32: #{tpu_custom_call.1} parent=1 // pred_region
      _
    $region33: #{tpu_custom_call.1} parent=1 // pred_fallthru
      _
    // Predicated region
    $region34: #{tpu_custom_call.1} parent=1 // pred_check
      _
    $region35: #{tpu_custom_call.1} parent=1 // pred_check_branch
      %56 = sbr.rel (0) target = $region37
    $region36: #{tpu_custom_call.1} parent=1 // pred_region
      _
    $region37: #{tpu_custom_call.1} parent=1 // pred_fallthru
      _
    // Predicated region
    $region38: #{tpu_custom_call.1} parent=1 // pred_check
      _
    $region39: #{tpu_custom_call.1} parent=1 // pred_check_branch
      %58 = sbr.rel (0) target = $region41
    $region40: #{tpu_custom_call.1} parent=1 // pred_region
      _
    $region41: #{tpu_custom_call.1} parent=1 // pred_fallthru
      _
    // Predicated region
    $region42: #{tpu_custom_call.1} parent=1 // pred_check
      _
    $region43: #{tpu_custom_call.1} parent=1 // pred_check_branch
      %60 = sbr.rel (0) target = $region45
    $region44: #{tpu_custom_call.1} parent=1 // pred_region
      _
    $region45: #{tpu_custom_call.1} parent=1 // pred_fallthru
      _
    // Predicated region
    $region46: #{tpu_custom_call.1} parent=1 // pred_check
      _
    $region47: #{tpu_custom_call.1} parent=1 // pred_check_branch
      %62 = sbr.rel (0) target = $region49
    $region48: #{tpu_custom_call.1} parent=1 // pred_region
      _
    $region49: #{tpu_custom_call.1} parent=1 // pred_fallthru
      _
    // Predicated region
    $region50: #{tpu_custom_call.1} parent=1 // pred_check
      _
    $region51: #{tpu_custom_call.1} parent=1 // pred_check_branch
      %64 = sbr.rel (0) target = $region53
    $region52: #{tpu_custom_call.1} parent=1 // pred_region
      _
    $region53: #{tpu_custom_call.1} parent=1 // pred_fallthru
      _
    // Predicated region
    $region54: #{tpu_custom_call.1} parent=1 // pred_check
      _
    $region55: #{tpu_custom_call.1} parent=1 // pred_check_branch
      %66 = sbr.rel (0) target = $region57
    $region56: #{tpu_custom_call.1} parent=1 // pred_region
      %s68 = ssub.s32 32, 32
      %69 = vsyncadd [#allocation6], %s68
      %s70 = sshll.u32 [#allocation5], 4
      %s71 = int_to_ptr.vmem [resolvable:$true] %s70
      %76 = dma.hbm_to_vmem [thread:$0]  %s13, 32, %s71, [#allocation6], 16, 16, 1
    $region57: #{tpu_custom_call.1} parent=1 // pred_fallthru
      _
    // Predicated region
    $region58: #{tpu_custom_call.1} parent=1 // pred_check
      _
    $region59: #{tpu_custom_call.1} parent=1 // pred_check_branch
      %78 = sbr.rel (0) target = $region61
    $region60: #{tpu_custom_call.1} parent=1 // pred_region
      _
    $region61: #{tpu_custom_call.1} parent=1 // pred_fallthru
      _
    // Predicated region
    $region62: #{tpu_custom_call.1} parent=1 // pred_check
      _
    $region63: #{tpu_custom_call.1} parent=1 // pred_check_branch
      %80 = sbr.rel (0) target = $region65
    $region64: #{tpu_custom_call.1} parent=1 // pred_region
      _
    $region65: #{tpu_custom_call.1} parent=1 // pred_fallthru
      _
    // Predicated region
    $region66: #{tpu_custom_call.1} parent=1 // pred_check
      _
    $region67: #{tpu_custom_call.1} parent=1 // pred_check_branch
      %82 = sbr.rel (0) target = $region69
    $region68: #{tpu_custom_call.1} parent=1 // pred_region
      _
    $region69: #{tpu_custom_call.1} parent=1 // pred_fallthru
      _
    // Predicated region
    $region70: #{tpu_custom_call.1} parent=1 // pred_check
      _
    $region71: #{tpu_custom_call.1} parent=1 // pred_check_branch
      %84 = sbr.rel (0) target = $region73
    $region72: #{tpu_custom_call.1} parent=1 // pred_region
      _
    $region73: #{tpu_custom_call.1} parent=1 // pred_fallthru
      _
    // Predicated region
    $region74: #{tpu_custom_call.1} parent=1 // pred_check
      _
    $region75: #{tpu_custom_call.1} parent=1 // pred_check_branch
      %86 = sbr.rel (0) target = $region77
    $region76: #{tpu_custom_call.1} parent=1 // pred_region
      _
    $region77: #{tpu_custom_call.1} parent=1 // pred_fallthru
      _
    // Predicated region
    $region78: #{tpu_custom_call.1} parent=1 // pred_check
      _
    $region79: #{tpu_custom_call.1} parent=1 // pred_check_branch
      %88 = sbr.rel (0) target = $region81
    $region80: #{tpu_custom_call.1} parent=1 // pred_region
      _
    $region81: #{tpu_custom_call.1} parent=1 // pred_fallthru
      _
    // Predicated region
    $region82: #{tpu_custom_call.1} parent=1 // pred_check
      _
    $region83: #{tpu_custom_call.1} parent=1 // pred_check_branch
      %90 = sbr.rel (0) target = $region85
    $region84: #{tpu_custom_call.1} parent=1 // pred_region
      %91 = dma.done [#allocation4], 512
    $region85: #{tpu_custom_call.1} parent=1 // pred_fallthru
      _
    // Predicated region
    $region86: #{tpu_custom_call.1} parent=1 // pred_check
      _
    $region87: #{tpu_custom_call.1} parent=1 // pred_check_branch
      %93 = sbr.rel (0) target = $region89
    $region88: #{tpu_custom_call.1} parent=1 // pred_region
      %94 = dma.done [#allocation6], 32
    $region89: #{tpu_custom_call.1} parent=1 // pred_fallthru
      _
    %v95 = vld [vmem:[%s0] sm:$0x3]
    %v96 = vld [vmem:[%s1] sm:$0x3]
    %v97 = vlaneseq
    %v98 = vand.u32 %v97, 127
    %v99 = vlaneseq
    %v100 = vshrl.u32 %v99, 7
    %v101 = vsub.s32 0, %v100
    %v102 = vrot.slane %v95, %v101
    %104 = vbcast.lane.b32.xlu0 %v102, 256
    %v105 = vpop.permute.xlu0 %104
    %v106 = vlaneseq
    %v107 = vshrl.u32 %v106, 7
    %v108 = vsub.s32 1, %v107
    %v109 = vrot.slane %v95, %v108
    %111 = vbcast.lane.b32.xlu0 %v109, 256
    %v112 = vpop.permute.xlu0 %111
    %vm113 = vcmp.eq.s32.totalorder %v98, %v105
    %vm114 = vcmp.eq.s32.totalorder %v98, %v112
    %v115 = vsel %vm113, 1, 0
    %v116 = vsel %vm114, 1, 0
    %v117 = vcvt.s32.f32 %v115
    %v118 = vcvt.s32.f32 %v116
    %v119 = vlaneseq
    %v120 = vshrl.u32 %v119, 7
    %v121 = vsub.s32 0, %v120
    %v122 = vrot.slane %v96, %v121
    %124 = vbcast.lane.b32.xlu0 %v122, 256
    %v125 = vpop.permute.xlu0 %124
    %v126 = vlaneseq
    %v127 = vshrl.u32 %v126, 7
    %v128 = vsub.s32 1, %v127
    %v129 = vrot.slane %v96, %v128
    %131 = vbcast.lane.b32.xlu0 %v129, 256
    %v132 = vpop.permute.xlu0 %131
    %vm133 = vcmp.eq.s32.totalorder %v98, %v125
    %vm134 = vcmp.eq.s32.totalorder %v98, %v132
    %v135 = vsel %vm133, 1, 0
    %v136 = vsel %vm134, 1, 0
    %v137 = vcvt.s32.f32 %v135
    %v138 = vcvt.s32.f32 %v136
    %v139 = vld [vmem:[#allocation3] sm:$0xff]
    %v140 = vld [vmem:[#allocation3 + $0x8] sm:$0xff]
    %v141 = vld [vmem:[#allocation3 + $0x10] sm:$0xff]
    %v142 = vld [vmem:[#allocation3 + $0x18] sm:$0xf]
    %v143 = vld [vmem:[%s5] sm:$0x1f]
    %vm144 = vcmask 39936
    %v146 = vsel %vm144, %v137, 0
    %v149 = vsel %vm144, %v138, 0
    %vm151 = vcmask 1044480
    %v153 = vsel %vm151, %v143, 0
    %155 = vmatprep.subr.mxu0 0.0
    %156 = vmatpush1.msra.mxu0 %v153
    %157 = vmatprep.subr.mxu0 0.0
    %158 = vmatpush1.msra.mxu0 0.0
    %159 = vmatprep.subr.mxu0 0.0
    %160 = vmatpush1.msra.mxu0 0.0
    %161 = vmatprep.subr.mxu0 0.0
    %162 = vmatpush1.msra.mxu0 0.0
    %163 = vmatprep.subr.mxu0 0.0
    %164 = vmatpush1.msra.mxu0 0.0
    %165 = vmatprep.subr.mxu0 0.0
    %166 = vmatpush1.msra.mxu0 0.0
    %167 = vmatprep.subr.mxu0 0.0
    %168 = vmatpush1.msra.mxu0 0.0
    %169 = vmatprep.subr.mxu0 0.0
    %170 = vmatpush1.msra.mxu0 0.0
    %171 = vmatprep.subr.mxu0 0.0
    %172 = vmatpush1.msra.mxu0 0.0
    %173 = vmatprep.subr.mxu0 0.0
    %174 = vmatpush1.msra.mxu0 0.0
    %175 = vmatprep.subr.mxu0 0.0
    %176 = vmatpush1.msra.mxu0 0.0
    %177 = vmatprep.subr.mxu0 0.0
    %178 = vmatpush1.msra.mxu0 0.0
    %179 = vmatprep.subr.mxu0 0.0
    %180 = vmatpush1.msra.mxu0 0.0
    %181 = vmatprep.subr.mxu0 0.0
    %182 = vmatpush1.msra.mxu0 0.0
    %183 = vmatprep.subr.mxu0 0.0
    %184 = vmatpush1.msra.mxu0 0.0
    %185 = vmatprep.subr.mxu0 0.0
    %186 = vmatpush1.msra.mxu0 0.0
    %187 = vmatprep.subr.mxu0 0.0
    %188 = vmatpush1.msra.mxu0 0.0
    %189 = vmatprep.subr.mxu0 0.0
    %190 = vmatpush1.msra.mxu0 0.0
    %191 = vmatprep.subr.mxu0 0.0
    %192 = vmatpush1.msra.mxu0 0.0
    %193 = vmatprep.subr.mxu0 0.0
    %194 = vmatpush1.msra.mxu0 0.0
    %195 = vmatprep.subr.mxu0 0.0
    %196 = vmatpush1.msra.mxu0 0.0
    %197 = vmatprep.subr.mxu0 0.0
    %198 = vmatpush1.msra.mxu0 0.0
    %199 = vmatprep.subr.mxu0 0.0
    %200 = vmatpush1.msra.mxu0 0.0
    %201 = vmatprep.subr.mxu0 0.0
    %202 = vmatpush1.msra.mxu0 0.0
    %203 = vmatprep.subr.mxu0 0.0
    %204 = vmatpush1.msra.mxu0 0.0
    %205 = vmatprep.subr.mxu0 0.0
    %206 = vmatpush1.msra.mxu0 0.0
    %207 = vmatprep.subr.mxu0 0.0
    %208 = vmatpush1.msra.mxu0 0.0
    %209 = vmatprep.subr.mxu0 0.0
    %210 = vmatpush1.msra.mxu0 0.0
    %211 = vmatprep.subr.mxu0 0.0
    %212 = vmatpush1.msra.mxu0 0.0
    %213 = vmatprep.subr.mxu0 0.0
    %214 = vmatpush1.msra.mxu0 0.0
    %215 = vmatprep.subr.mxu0 0.0
    %216 = vmatpush1.msra.mxu0 0.0
    %217 = vmatprep.subr.mxu0 0.0
    %218 = vmatpush1.msra.mxu0 0.0
    %219 = vmatprep.mubr.f32.mxu0 0.0
    %220 = vmatmul.mubr.f32.gmra.mrb[0].mxu0 %v146
    %v221 = vpop.f32.mrb[0].mxu0
    %v222 = vadd.f32 0.0, %v221
    %v223 = vpop.f32.mrb[0].mxu0
    %224 = vmatprep.mubr.f32.mxu0 0.0
    %225 = vmatmul.mubr.f32.gmra.mrb[0].mxu0 %v149
    %v226 = vpop.f32.mrb[0].mxu0
    %v227 = vadd.f32 0.0, %v226
    %v228 = vpop.f32.mrb[0].mxu0
    %229 = vdwg.mxu0
    %vm230 = vcmask 228352
    %v232 = vsel %vm230, %v117, 0
    %v235 = vsel %vm230, %v118, 0
    %vm237 = vcmask 1043456
    %v239 = vsel %vm237, %v142, 0
    %241 = vmatprep.subr.mxu0 0.0
    %242 = vmatpush1.msra.mxu0 %v139
    %243 = vmatprep.subr.mxu0 0.0
    %244 = vmatpush1.msra.mxu0 %v140
    %245 = vmatprep.subr.mxu0 0.0
    %246 = vmatpush1.msra.mxu0 %v141
    %247 = vmatprep.subr.mxu0 0.0
    %248 = vmatpush1.msra.mxu0 %v239
    %249 = vmatprep.subr.mxu0 0.0
    %250 = vmatpush1.msra.mxu0 0.0
    %251 = vmatprep.subr.mxu0 0.0
    %252 = vmatpush1.msra.mxu0 0.0
    %253 = vmatprep.subr.mxu0 0.0
    %254 = vmatpush1.msra.mxu0 0.0
    %255 = vmatprep.subr.mxu0 0.0
    %256 = vmatpush1.msra.mxu0 0.0
    %257 = vmatprep.subr.mxu0 0.0
    %258 = vmatpush1.msra.mxu0 0.0
    %259 = vmatprep.subr.mxu0 0.0
    %260 = vmatpush1.msra.mxu0 0.0
    %261 = vmatprep.subr.mxu0 0.0
    %262 = vmatpush1.msra.mxu0 0.0
    %263 = vmatprep.subr.mxu0 0.0
    %264 = vmatpush1.msra.mxu0 0.0
    %265 = vmatprep.subr.mxu0 0.0
    %266 = vmatpush1.msra.mxu0 0.0
    %267 = vmatprep.subr.mxu0 0.0
    %268 = vmatpush1.msra.mxu0 0.0
    %269 = vmatprep.subr.mxu0 0.0
    %270 = vmatpush1.msra.mxu0 0.0
    %271 = vmatprep.subr.mxu0 0.0
    %272 = vmatpush1.msra.mxu0 0.0
    %273 = vmatprep.subr.mxu0 0.0
    %274 = vmatpush1.msra.mxu0 0.0
    %275 = vmatprep.subr.mxu0 0.0
    %276 = vmatpush1.msra.mxu0 0.0
    %277 = vmatprep.subr.mxu0 0.0
    %278 = vmatpush1.msra.mxu0 0.0
    %279 = vmatprep.subr.mxu0 0.0
    %280 = vmatpush1.msra.mxu0 0.0
    %281 = vmatprep.subr.mxu0 0.0
    %282 = vmatpush1.msra.mxu0 0.0
    %283 = vmatprep.subr.mxu0 0.0
    %284 = vmatpush1.msra.mxu0 0.0
    %285 = vmatprep.subr.mxu0 0.0
    %286 = vmatpush1.msra.mxu0 0.0
    %287 = vmatprep.subr.mxu0 0.0
    %288 = vmatpush1.msra.mxu0 0.0
    %289 = vmatprep.subr.mxu0 0.0
    %290 = vmatpush1.msra.mxu0 0.0
    %291 = vmatprep.subr.mxu0 0.0
    %292 = vmatpush1.msra.mxu0 0.0
    %293 = vmatprep.subr.mxu0 0.0
    %294 = vmatpush1.msra.mxu0 0.0
    %295 = vmatprep.subr.mxu0 0.0
    %296 = vmatpush1.msra.mxu0 0.0
    %297 = vmatprep.subr.mxu0 0.0
    %298 = vmatpush1.msra.mxu0 0.0
    %299 = vmatprep.subr.mxu0 0.0
    %300 = vmatpush1.msra.mxu0 0.0
    %301 = vmatprep.subr.mxu0 0.0
    %302 = vmatpush1.msra.mxu0 0.0
    %303 = vmatprep.subr.mxu0 0.0
    %304 = vmatpush1.msra.mxu0 0.0
    %305 = vmatprep.mubr.f32.mxu0 0.0
    %306 = vmatmul.mubr.f32.gmra.mrb[0].mxu0 %v232
    %v307 = vpop.f32.mrb[0].mxu0
    %v308 = vadd.f32 %v222, %v307
    %v309 = vpop.f32.mrb[0].mxu0
    %310 = vmatprep.mubr.f32.mxu0 0.0
    %311 = vmatmul.mubr.f32.gmra.mrb[0].mxu0 %v235
    %v312 = vpop.f32.mrb[0].mxu0
    %v313 = vadd.f32 %v227, %v312
    %v314 = vpop.f32.mrb[0].mxu0
    %315 = vdwg.mxu0
    %v316 = vld [vmem:[%s3] sm:$0xff]
    %v317 = vadd.f32 %v308, %v316
    %v318 = vadd.f32 %v313, %v316
    %v319 = vld [vmem:[%s2] sm:$0x3]
    %v321 = vunpack.c.l.s4 1966171168
    %v322 = vunpack.c.0.s8 %v321
    %v323 = vlaneseq
    %v324 = vshrl.u32 %v323, 7
    %v325 = vsub.s32 %v322, %v324
    %v326 = vrot.slane %v319, %v325
    %v327 = vcombine.high %v326, %v326
    %v329 = vunpack.c.l.s4 1966171168
    %v330 = vunpack.c.0.s8 %v329
    %v331 = vlaneseq
    %v332 = vshrl.u32 %v331, 7
    %v333 = vsub.s32 %v330, %v332
    %v334 = vrot.slane %v326, %v333
    %v336 = vunpack.c.l.s4 1966171168
    %v337 = vunpack.c.0.s8 %v336
    %v338 = vlaneseq
    %v339 = vshrl.u32 %v338, 7
    %v340 = vsub.s32 %v337, %v339
    %v341 = vrot.slane %v327, %v340
    %342 = vset.pattern.permute.xlu0 0
    %343 = vperm.xlu0 %342, %v334
    %v344 = vpop.permute.xlu0 %343
    %v345 = vlaneseq
    %v346 = vshrl.u32 %v345, 7
    %v347 = vsub.s32 0, %v346
    %v348 = vrot.slane %v344, %v347
    %349 = vset.pattern.permute.xlu0 0
    %350 = vperm.xlu0 %349, %v341
    %v351 = vpop.permute.xlu0 %350
    %v352 = vlaneseq
    %v353 = vshrl.u32 %v352, 7
    %v354 = vsub.s32 0, %v353
    %v355 = vrot.slane %v351, %v354
    %vm356 = vcmp.ge.s32.totalorder %v98, %v348
    %vm357 = vcmp.ge.s32.totalorder %v98, %v355
    %v358 = vsel %vm356, -1e+09, 0.0
    %v359 = vsel %vm357, -1e+09, 0.0
    %v360 = vld [vmem:[%s6] sm:$0xff]
    %v361 = vld [vmem:[%s6 + $0x8] sm:$0xff]
    %v362 = vld [vmem:[%s6 + $0x10] sm:$0xff]
    %v363 = vld [vmem:[%s6 + $0x18] sm:$0xff]
    %v364 = vld [vmem:[%s7] sm:$0x1]
    %v366 = vlaneseq
    %v367 = vshrl.u32 %v366, 7
    %v368 = vsub.s32 0, %v367
    %v369 = vrot.slane %v364, %v368
    %vm371 = vcmask 261120
    %v373 = vsel %vm371, %v317, 0
    %v376 = vsel %vm371, %v318, 0
    %378 = vmatprep.subr.mxu0 0.0
    %379 = vmatpush1.msra.mxu0 %v360
    %380 = vmatprep.subr.mxu0 0.0
    %381 = vmatpush1.msra.mxu0 %v361
    %382 = vmatprep.subr.mxu0 0.0
    %383 = vmatpush1.msra.mxu0 %v362
    %384 = vmatprep.subr.mxu0 0.0
    %385 = vmatpush1.msra.mxu0 %v363
    %386 = vmatprep.subr.mxu0 0.0
    %387 = vmatpush1.msra.mxu0 0.0
    %388 = vmatprep.subr.mxu0 0.0
    %389 = vmatpush1.msra.mxu0 0.0
    %390 = vmatprep.subr.mxu0 0.0
    %391 = vmatpush1.msra.mxu0 0.0
    %392 = vmatprep.subr.mxu0 0.0
    %393 = vmatpush1.msra.mxu0 0.0
    %394 = vmatprep.subr.mxu0 0.0
    %395 = vmatpush1.msra.mxu0 0.0
    %396 = vmatprep.subr.mxu0 0.0
    %397 = vmatpush1.msra.mxu0 0.0
    %398 = vmatprep.subr.mxu0 0.0
    %399 = vmatpush1.msra.mxu0 0.0
    %400 = vmatprep.subr.mxu0 0.0
    %401 = vmatpush1.msra.mxu0 0.0
    %402 = vmatprep.subr.mxu0 0.0
    %403 = vmatpush1.msra.mxu0 0.0
    %404 = vmatprep.subr.mxu0 0.0
    %405 = vmatpush1.msra.mxu0 0.0
    %406 = vmatprep.subr.mxu0 0.0
    %407 = vmatpush1.msra.mxu0 0.0
    %408 = vmatprep.subr.mxu0 0.0
    %409 = vmatpush1.msra.mxu0 0.0
    %410 = vmatprep.subr.mxu0 0.0
    %411 = vmatpush1.msra.mxu0 0.0
    %412 = vmatprep.subr.mxu0 0.0
    %413 = vmatpush1.msra.mxu0 0.0
    %414 = vmatprep.subr.mxu0 0.0
    %415 = vmatpush1.msra.mxu0 0.0
    %416 = vmatprep.subr.mxu0 0.0
    %417 = vmatpush1.msra.mxu0 0.0
    %418 = vmatprep.subr.mxu0 0.0
    %419 = vmatpush1.msra.mxu0 0.0
    %420 = vmatprep.subr.mxu0 0.0
    %421 = vmatpush1.msra.mxu0 0.0
    %422 = vmatprep.subr.mxu0 0.0
    %423 = vmatpush1.msra.mxu0 0.0
    %424 = vmatprep.subr.mxu0 0.0
    %425 = vmatpush1.msra.mxu0 0.0
    %426 = vmatprep.subr.mxu0 0.0
    %427 = vmatpush1.msra.mxu0 0.0
    %428 = vmatprep.subr.mxu0 0.0
    %429 = vmatpush1.msra.mxu0 0.0
    %430 = vmatprep.subr.mxu0 0.0
    %431 = vmatpush1.msra.mxu0 0.0
    %432 = vmatprep.subr.mxu0 0.0
    %433 = vmatpush1.msra.mxu0 0.0
    %434 = vmatprep.subr.mxu0 0.0
    %435 = vmatpush1.msra.mxu0 0.0
    %436 = vmatprep.subr.mxu0 0.0
    %437 = vmatpush1.msra.mxu0 0.0
    %438 = vmatprep.subr.mxu0 0.0
    %439 = vmatpush1.msra.mxu0 0.0
    %440 = vmatprep.subr.mxu0 0.0
    %441 = vmatpush1.msra.mxu0 0.0
    %442 = vmatprep.mubr.f32.mxu0 0.0
    %443 = vmatmul.mubr.f32.gmra.mrb[0].mxu0 %v373
    %v444 = vpop.f32.mrb[0].mxu0
    %v445 = vadd.f32 %v369, %v444
    %v446 = vpop.f32.mrb[0].mxu0
    %447 = vmatprep.mubr.f32.mxu0 0.0
    %448 = vmatmul.mubr.f32.gmra.mrb[0].mxu0 %v376
    %v449 = vpop.f32.mrb[0].mxu0
    %v450 = vadd.f32 %v369, %v449
    %v451 = vpop.f32.mrb[0].mxu0
    %452 = vdwg.mxu0
    %454 = vrot.lane.b32.xlu0 %v445, 96
    %v455 = vpop.permute.xlu0 %454
    %vm456 = vcmask 64512
    %v457 = vsel %vm456, %v445, 0
    %v459 = vsel %vm456, %v455, 0
    %461 = vmatprep.subr.mxu0 0.0
    %462 = vmatpush1.xpose.msra.mxu0 %v459
    %463 = vmatprep.subr.mxu0 0.0
    %464 = vmatpush1.xpose.msra.mxu0 0.0
    %465 = vmatprep.subr.mxu0 0.0
    %466 = vmatpush1.xpose.msra.mxu0 0.0
    %467 = vmatprep.subr.mxu0 0.0
    %468 = vmatpush1.xpose.msra.mxu0 0.0
    %469 = vmatprep.subr.mxu0 0.0
    %470 = vmatpush1.xpose.msra.mxu0 0.0
    %471 = vmatprep.subr.mxu0 0.0
    %472 = vmatpush1.xpose.msra.mxu0 0.0
    %473 = vmatprep.subr.mxu0 0.0
    %474 = vmatpush1.xpose.msra.mxu0 0.0
    %475 = vmatprep.subr.mxu0 0.0
    %476 = vmatpush1.xpose.msra.mxu0 0.0
    %477 = vmatprep.subr.mxu0 0.0
    %478 = vmatpush1.xpose.msra.mxu0 0.0
    %479 = vmatprep.subr.mxu0 0.0
    %480 = vmatpush1.xpose.msra.mxu0 0.0
    %481 = vmatprep.subr.mxu0 0.0
    %482 = vmatpush1.xpose.msra.mxu0 0.0
    %483 = vmatprep.subr.mxu0 0.0
    %484 = vmatpush1.xpose.msra.mxu0 0.0
    %485 = vmatprep.subr.mxu0 0.0
    %486 = vmatpush1.xpose.msra.mxu0 0.0
    %487 = vmatprep.subr.mxu0 0.0
    %488 = vmatpush1.xpose.msra.mxu0 0.0
    %489 = vmatprep.subr.mxu0 0.0
    %490 = vmatpush1.xpose.msra.mxu0 0.0
    %491 = vmatprep.subr.mxu0 0.0
    %492 = vmatpush1.xpose.msra.mxu0 0.0
    %493 = vmatprep.subr.mxu0 0.0
    %494 = vmatpush1.xpose.msra.mxu0 0.0
    %495 = vmatprep.subr.mxu0 0.0
    %496 = vmatpush1.xpose.msra.mxu0 0.0
    %497 = vmatprep.subr.mxu0 0.0
    %498 = vmatpush1.xpose.msra.mxu0 0.0
    %499 = vmatprep.subr.mxu0 0.0
    %500 = vmatpush1.xpose.msra.mxu0 0.0
    %501 = vmatprep.subr.mxu0 0.0
    %502 = vmatpush1.xpose.msra.mxu0 0.0
    %503 = vmatprep.subr.mxu0 0.0
    %504 = vmatpush1.xpose.msra.mxu0 0.0
    %505 = vmatprep.subr.mxu0 0.0
    %506 = vmatpush1.xpose.msra.mxu0 0.0
    %507 = vmatprep.subr.mxu0 0.0
    %508 = vmatpush1.xpose.msra.mxu0 0.0
    %509 = vmatprep.subr.mxu0 0.0
    %510 = vmatpush1.xpose.msra.mxu0 0.0
    %511 = vmatprep.subr.mxu0 0.0
    %512 = vmatpush1.xpose.msra.mxu0 0.0
    %513 = vmatprep.subr.mxu0 0.0
    %514 = vmatpush1.xpose.msra.mxu0 0.0
    %515 = vmatprep.subr.mxu0 0.0
    %516 = vmatpush1.xpose.msra.mxu0 0.0
    %517 = vmatprep.subr.mxu0 0.0
    %518 = vmatpush1.xpose.msra.mxu0 0.0
    %519 = vmatprep.subr.mxu0 0.0
    %520 = vmatpush1.xpose.msra.mxu0 0.0
    %521 = vmatprep.subr.mxu0 0.0
    %522 = vmatpush1.xpose.msra.mxu0 0.0
    %523 = vmatprep.subr.mxu0 0.0
    %524 = vmatpush1.xpose.msra.mxu0 0.0
    %525 = vmatprep.mubr.f32.mxu0 0.0
    %526 = vmatmul.mubr.f32.gmra.mrb[0].mxu0 %v457
    %v527 = vpop.f32.mrb[0].mxu0
    %v528 = vadd.f32 %v358, %v527
    %v529 = vpop.f32.mrb[0].mxu0
    %530 = vdwg.mxu0
    %532 = vrot.lane.b32.xlu0 %v450, 96
    %v533 = vpop.permute.xlu0 %532
    %v534 = vsel %vm456, %v450, 0
    %v536 = vsel %vm456, %v533, 0
    %538 = vmatprep.subr.mxu0 0.0
    %539 = vmatpush1.xpose.msra.mxu0 %v536
    %540 = vmatprep.subr.mxu0 0.0
    %541 = vmatpush1.xpose.msra.mxu0 0.0
    %542 = vmatprep.subr.mxu0 0.0
    %543 = vmatpush1.xpose.msra.mxu0 0.0
    %544 = vmatprep.subr.mxu0 0.0
    %545 = vmatpush1.xpose.msra.mxu0 0.0
    %546 = vmatprep.subr.mxu0 0.0
    %547 = vmatpush1.xpose.msra.mxu0 0.0
    %548 = vmatprep.subr.mxu0 0.0
    %549 = vmatpush1.xpose.msra.mxu0 0.0
    %550 = vmatprep.subr.mxu0 0.0
    %551 = vmatpush1.xpose.msra.mxu0 0.0
    %552 = vmatprep.subr.mxu0 0.0
    %553 = vmatpush1.xpose.msra.mxu0 0.0
    %554 = vmatprep.subr.mxu0 0.0
    %555 = vmatpush1.xpose.msra.mxu0 0.0
    %556 = vmatprep.subr.mxu0 0.0
    %557 = vmatpush1.xpose.msra.mxu0 0.0
    %558 = vmatprep.subr.mxu0 0.0
    %559 = vmatpush1.xpose.msra.mxu0 0.0
    %560 = vmatprep.subr.mxu0 0.0
    %561 = vmatpush1.xpose.msra.mxu0 0.0
    %562 = vmatprep.subr.mxu0 0.0
    %563 = vmatpush1.xpose.msra.mxu0 0.0
    %564 = vmatprep.subr.mxu0 0.0
    %565 = vmatpush1.xpose.msra.mxu0 0.0
    %566 = vmatprep.subr.mxu0 0.0
    %567 = vmatpush1.xpose.msra.mxu0 0.0
    %568 = vmatprep.subr.mxu0 0.0
    %569 = vmatpush1.xpose.msra.mxu0 0.0
    %570 = vmatprep.subr.mxu0 0.0
    %571 = vmatpush1.xpose.msra.mxu0 0.0
    %572 = vmatprep.subr.mxu0 0.0
    %573 = vmatpush1.xpose.msra.mxu0 0.0
    %574 = vmatprep.subr.mxu0 0.0
    %575 = vmatpush1.xpose.msra.mxu0 0.0
    %576 = vmatprep.subr.mxu0 0.0
    %577 = vmatpush1.xpose.msra.mxu0 0.0
    %578 = vmatprep.subr.mxu0 0.0
    %579 = vmatpush1.xpose.msra.mxu0 0.0
    %580 = vmatprep.subr.mxu0 0.0
    %581 = vmatpush1.xpose.msra.mxu0 0.0
    %582 = vmatprep.subr.mxu0 0.0
    %583 = vmatpush1.xpose.msra.mxu0 0.0
    %584 = vmatprep.subr.mxu0 0.0
    %585 = vmatpush1.xpose.msra.mxu0 0.0
    %586 = vmatprep.subr.mxu0 0.0
    %587 = vmatpush1.xpose.msra.mxu0 0.0
    %588 = vmatprep.subr.mxu0 0.0
    %589 = vmatpush1.xpose.msra.mxu0 0.0
    %590 = vmatprep.subr.mxu0 0.0
    %591 = vmatpush1.xpose.msra.mxu0 0.0
    %592 = vmatprep.subr.mxu0 0.0
    %593 = vmatpush1.xpose.msra.mxu0 0.0
    %594 = vmatprep.subr.mxu0 0.0
    %595 = vmatpush1.xpose.msra.mxu0 0.0
    %596 = vmatprep.subr.mxu0 0.0
    %597 = vmatpush1.xpose.msra.mxu0 0.0
    %598 = vmatprep.subr.mxu0 0.0
    %599 = vmatpush1.xpose.msra.mxu0 0.0
    %600 = vmatprep.subr.mxu0 0.0
    %601 = vmatpush1.xpose.msra.mxu0 0.0
    %602 = vmatprep.mubr.f32.mxu0 0.0
    %603 = vmatmul.mubr.f32.gmra.mrb[0].mxu0 %v534
    %v604 = vpop.f32.mrb[0].mxu0
    %v605 = vadd.f32 %v359, %v604
    %v606 = vpop.f32.mrb[0].mxu0
    %607 = vdwg.mxu0
    %v608 = vsel %vm456, %v528, -inf
    %609 = vmax.xlane.f32.xlu0 %v608
    %v610 = vpop.xlane.xlu0 %609
    %v611 = vsel %vm456, %v605, -inf
    %612 = vmax.xlane.f32.xlu0 %v611
    %v613 = vpop.xlane.xlu0 %612
    %v614 = vsub.f32 %v528, %v610
    %v615 = vsub.f32 %v605, %v613
    %v616 = vmul.f32 %v614, 1.442695
    %v617 = vpow.pop %v616
    %v618 = vmul.f32 %v615, 1.442695
    %v619 = vpow.pop %v618
    %v620 = vsel %vm456, %v617, 0.0
    %621 = vadd.xlane.f32.xlu0 %v620
    %v622 = vpop.xlane.xlu0 %621
    %v623 = vsel %vm456, %v619, 0.0
    %624 = vadd.xlane.f32.xlu0 %v623
    %v625 = vpop.xlane.xlu0 %624
    %v626 = vrcp.pop %v622
    %v627 = vrcp.pop %v625
    %v628 = vmul.f32 %v617, %v626
    %v629 = vmul.f32 %v619, %v627
    %630 = vrot.lane.b32.xlu0 %v445, 64
    %v631 = vpop.permute.xlu0 %630
    %v634 = vsel %vm456, %v628, 0
    %636 = vmatprep.subr.mxu0 0.0
    %637 = vmatpush1.msra.mxu0 %v631
    %638 = vmatprep.subr.mxu0 0.0
    %639 = vmatpush1.msra.mxu0 0.0
    %640 = vmatprep.subr.mxu0 0.0
    %641 = vmatpush1.msra.mxu0 0.0
    %642 = vmatprep.subr.mxu0 0.0
    %643 = vmatpush1.msra.mxu0 0.0
    %644 = vmatprep.subr.mxu0 0.0
    %645 = vmatpush1.msra.mxu0 0.0
    %646 = vmatprep.subr.mxu0 0.0
    %647 = vmatpush1.msra.mxu0 0.0
    %648 = vmatprep.subr.mxu0 0.0
    %649 = vmatpush1.msra.mxu0 0.0
    %650 = vmatprep.subr.mxu0 0.0
    %651 = vmatpush1.msra.mxu0 0.0
    %652 = vmatprep.subr.mxu0 0.0
    %653 = vmatpush1.msra.mxu0 0.0
    %654 = vmatprep.subr.mxu0 0.0
    %655 = vmatpush1.msra.mxu0 0.0
    %656 = vmatprep.subr.mxu0 0.0
    %657 = vmatpush1.msra.mxu0 0.0
    %658 = vmatprep.subr.mxu0 0.0
    %659 = vmatpush1.msra.mxu0 0.0
    %660 = vmatprep.subr.mxu0 0.0
    %661 = vmatpush1.msra.mxu0 0.0
    %662 = vmatprep.subr.mxu0 0.0
    %663 = vmatpush1.msra.mxu0 0.0
    %664 = vmatprep.subr.mxu0 0.0
    %665 = vmatpush1.msra.mxu0 0.0
    %666 = vmatprep.subr.mxu0 0.0
    %667 = vmatpush1.msra.mxu0 0.0
    %668 = vmatprep.subr.mxu0 0.0
    %669 = vmatpush1.msra.mxu0 0.0
    %670 = vmatprep.subr.mxu0 0.0
    %671 = vmatpush1.msra.mxu0 0.0
    %672 = vmatprep.subr.mxu0 0.0
    %673 = vmatpush1.msra.mxu0 0.0
    %674 = vmatprep.subr.mxu0 0.0
    %675 = vmatpush1.msra.mxu0 0.0
    %676 = vmatprep.subr.mxu0 0.0
    %677 = vmatpush1.msra.mxu0 0.0
    %678 = vmatprep.subr.mxu0 0.0
    %679 = vmatpush1.msra.mxu0 0.0
    %680 = vmatprep.subr.mxu0 0.0
    %681 = vmatpush1.msra.mxu0 0.0
    %682 = vmatprep.subr.mxu0 0.0
    %683 = vmatpush1.msra.mxu0 0.0
    %684 = vmatprep.subr.mxu0 0.0
    %685 = vmatpush1.msra.mxu0 0.0
    %686 = vmatprep.subr.mxu0 0.0
    %687 = vmatpush1.msra.mxu0 0.0
    %688 = vmatprep.subr.mxu0 0.0
    %689 = vmatpush1.msra.mxu0 0.0
    %690 = vmatprep.subr.mxu0 0.0
    %691 = vmatpush1.msra.mxu0 0.0
    %692 = vmatprep.subr.mxu0 0.0
    %693 = vmatpush1.msra.mxu0 0.0
    %694 = vmatprep.subr.mxu0 0.0
    %695 = vmatpush1.msra.mxu0 0.0
    %696 = vmatprep.subr.mxu0 0.0
    %697 = vmatpush1.msra.mxu0 0.0
    %698 = vmatprep.subr.mxu0 0.0
    %699 = vmatpush1.msra.mxu0 0.0
    %700 = vmatprep.mubr.f32.mxu0 0.0
    %701 = vmatmul.mubr.f32.gmra.mrb[0].mxu0 %v634
    %v702 = vpop.f32.mrb[0].mxu0
    %v703 = vadd.f32 0.0, %v702
    %v704 = vpop.f32.mrb[0].mxu0
    %705 = vdwg.mxu0
    %706 = vrot.lane.b32.xlu0 %v450, 64
    %v707 = vpop.permute.xlu0 %706
    %v710 = vsel %vm456, %v629, 0
    %712 = vmatprep.subr.mxu0 0.0
    %713 = vmatpush1.msra.mxu0 %v707
    %714 = vmatprep.subr.mxu0 0.0
    %715 = vmatpush1.msra.mxu0 0.0
    %716 = vmatprep.subr.mxu0 0.0
    %717 = vmatpush1.msra.mxu0 0.0
    %718 = vmatprep.subr.mxu0 0.0
    %719 = vmatpush1.msra.mxu0 0.0
    %720 = vmatprep.subr.mxu0 0.0
    %721 = vmatpush1.msra.mxu0 0.0
    %722 = vmatprep.subr.mxu0 0.0
    %723 = vmatpush1.msra.mxu0 0.0
    %724 = vmatprep.subr.mxu0 0.0
    %725 = vmatpush1.msra.mxu0 0.0
    %726 = vmatprep.subr.mxu0 0.0
    %727 = vmatpush1.msra.mxu0 0.0
    %728 = vmatprep.subr.mxu0 0.0
    %729 = vmatpush1.msra.mxu0 0.0
    %730 = vmatprep.subr.mxu0 0.0
    %731 = vmatpush1.msra.mxu0 0.0
    %732 = vmatprep.subr.mxu0 0.0
    %733 = vmatpush1.msra.mxu0 0.0
    %734 = vmatprep.subr.mxu0 0.0
    %735 = vmatpush1.msra.mxu0 0.0
    %736 = vmatprep.subr.mxu0 0.0
    %737 = vmatpush1.msra.mxu0 0.0
    %738 = vmatprep.subr.mxu0 0.0
    %739 = vmatpush1.msra.mxu0 0.0
    %740 = vmatprep.subr.mxu0 0.0
    %741 = vmatpush1.msra.mxu0 0.0
    %742 = vmatprep.subr.mxu0 0.0
    %743 = vmatpush1.msra.mxu0 0.0
    %744 = vmatprep.subr.mxu0 0.0
    %745 = vmatpush1.msra.mxu0 0.0
    %746 = vmatprep.subr.mxu0 0.0
    %747 = vmatpush1.msra.mxu0 0.0
    %748 = vmatprep.subr.mxu0 0.0
    %749 = vmatpush1.msra.mxu0 0.0
    %750 = vmatprep.subr.mxu0 0.0
    %751 = vmatpush1.msra.mxu0 0.0
    %752 = vmatprep.subr.mxu0 0.0
    %753 = vmatpush1.msra.mxu0 0.0
    %754 = vmatprep.subr.mxu0 0.0
    %755 = vmatpush1.msra.mxu0 0.0
    %756 = vmatprep.subr.mxu0 0.0
    %757 = vmatpush1.msra.mxu0 0.0
    %758 = vmatprep.subr.mxu0 0.0
    %759 = vmatpush1.msra.mxu0 0.0
    %760 = vmatprep.subr.mxu0 0.0
    %761 = vmatpush1.msra.mxu0 0.0
    %762 = vmatprep.subr.mxu0 0.0
    %763 = vmatpush1.msra.mxu0 0.0
    %764 = vmatprep.subr.mxu0 0.0
    %765 = vmatpush1.msra.mxu0 0.0
    %766 = vmatprep.subr.mxu0 0.0
    %767 = vmatpush1.msra.mxu0 0.0
    %768 = vmatprep.subr.mxu0 0.0
    %769 = vmatpush1.msra.mxu0 0.0
    %770 = vmatprep.subr.mxu0 0.0
    %771 = vmatpush1.msra.mxu0 0.0
    %772 = vmatprep.subr.mxu0 0.0
    %773 = vmatpush1.msra.mxu0 0.0
    %774 = vmatprep.subr.mxu0 0.0
    %775 = vmatpush1.msra.mxu0 0.0
    %776 = vmatprep.mubr.f32.mxu0 0.0
    %777 = vmatmul.mubr.f32.gmra.mrb[0].mxu0 %v710
    %v778 = vpop.f32.mrb[0].mxu0
    %v779 = vadd.f32 0.0, %v778
    %v780 = vpop.f32.mrb[0].mxu0
    %781 = vdwg.mxu0
    %782 = vrot.lane.b32.xlu0 %v445, 120
    %v783 = vpop.permute.xlu0 %782
    %784 = vrot.lane.b32.xlu0 %v445, 88
    %v785 = vpop.permute.xlu0 %784
    %v786 = vsel %vm456, %v783, 0
    %v788 = vsel %vm456, %v785, 0
    %790 = vmatprep.subr.mxu0 0.0
    %791 = vmatpush1.xpose.msra.mxu0 %v788
    %792 = vmatprep.subr.mxu0 0.0
    %793 = vmatpush1.xpose.msra.mxu0 0.0
    %794 = vmatprep.subr.mxu0 0.0
    %795 = vmatpush1.xpose.msra.mxu0 0.0
    %796 = vmatprep.subr.mxu0 0.0
    %797 = vmatpush1.xpose.msra.mxu0 0.0
    %798 = vmatprep.subr.mxu0 0.0
    %799 = vmatpush1.xpose.msra.mxu0 0.0
    %800 = vmatprep.subr.mxu0 0.0
    %801 = vmatpush1.xpose.msra.mxu0 0.0
    %802 = vmatprep.subr.mxu0 0.0
    %803 = vmatpush1.xpose.msra.mxu0 0.0
    %804 = vmatprep.subr.mxu0 0.0
    %805 = vmatpush1.xpose.msra.mxu0 0.0
    %806 = vmatprep.subr.mxu0 0.0
    %807 = vmatpush1.xpose.msra.mxu0 0.0
    %808 = vmatprep.subr.mxu0 0.0
    %809 = vmatpush1.xpose.msra.mxu0 0.0
    %810 = vmatprep.subr.mxu0 0.0
    %811 = vmatpush1.xpose.msra.mxu0 0.0
    %812 = vmatprep.subr.mxu0 0.0
    %813 = vmatpush1.xpose.msra.mxu0 0.0
    %814 = vmatprep.subr.mxu0 0.0
    %815 = vmatpush1.xpose.msra.mxu0 0.0
    %816 = vmatprep.subr.mxu0 0.0
    %817 = vmatpush1.xpose.msra.mxu0 0.0
    %818 = vmatprep.subr.mxu0 0.0
    %819 = vmatpush1.xpose.msra.mxu0 0.0
    %820 = vmatprep.subr.mxu0 0.0
    %821 = vmatpush1.xpose.msra.mxu0 0.0
    %822 = vmatprep.subr.mxu0 0.0
    %823 = vmatpush1.xpose.msra.mxu0 0.0
    %824 = vmatprep.subr.mxu0 0.0
    %825 = vmatpush1.xpose.msra.mxu0 0.0
    %826 = vmatprep.subr.mxu0 0.0
    %827 = vmatpush1.xpose.msra.mxu0 0.0
    %828 = vmatprep.subr.mxu0 0.0
    %829 = vmatpush1.xpose.msra.mxu0 0.0
    %830 = vmatprep.subr.mxu0 0.0
    %831 = vmatpush1.xpose.msra.mxu0 0.0
    %832 = vmatprep.subr.mxu0 0.0
    %833 = vmatpush1.xpose.msra.mxu0 0.0
    %834 = vmatprep.subr.mxu0 0.0
    %835 = vmatpush1.xpose.msra.mxu0 0.0
    %836 = vmatprep.subr.mxu0 0.0
    %837 = vmatpush1.xpose.msra.mxu0 0.0
    %838 = vmatprep.subr.mxu0 0.0
    %839 = vmatpush1.xpose.msra.mxu0 0.0
    %840 = vmatprep.subr.mxu0 0.0
    %841 = vmatpush1.xpose.msra.mxu0 0.0
    %842 = vmatprep.subr.mxu0 0.0
    %843 = vmatpush1.xpose.msra.mxu0 0.0
    %844 = vmatprep.subr.mxu0 0.0
    %845 = vmatpush1.xpose.msra.mxu0 0.0
    %846 = vmatprep.subr.mxu0 0.0
    %847 = vmatpush1.xpose.msra.mxu0 0.0
    %848 = vmatprep.subr.mxu0 0.0
    %849 = vmatpush1.xpose.msra.mxu0 0.0
    %850 = vmatprep.subr.mxu0 0.0
    %851 = vmatpush1.xpose.msra.mxu0 0.0
    %852 = vmatprep.subr.mxu0 0.0
    %853 = vmatpush1.xpose.msra.mxu0 0.0
    %854 = vmatprep.mubr.f32.mxu0 0.0
    %855 = vmatmul.mubr.f32.gmra.mrb[0].mxu0 %v786
    %v856 = vpop.f32.mrb[0].mxu0
    %v857 = vadd.f32 %v358, %v856
    %v858 = vpop.f32.mrb[0].mxu0
    %859 = vdwg.mxu0
    %860 = vrot.lane.b32.xlu0 %v450, 120
    %v861 = vpop.permute.xlu0 %860
    %862 = vrot.lane.b32.xlu0 %v450, 88
    %v863 = vpop.permute.xlu0 %862
    %v864 = vsel %vm456, %v861, 0
    %v866 = vsel %vm456, %v863, 0
    %868 = vmatprep.subr.mxu0 0.0
    %869 = vmatpush1.xpose.msra.mxu0 %v866
    %870 = vmatprep.subr.mxu0 0.0
    %871 = vmatpush1.xpose.msra.mxu0 0.0
    %872 = vmatprep.subr.mxu0 0.0
    %873 = vmatpush1.xpose.msra.mxu0 0.0
    %874 = vmatprep.subr.mxu0 0.0
    %875 = vmatpush1.xpose.msra.mxu0 0.0
    %876 = vmatprep.subr.mxu0 0.0
    %877 = vmatpush1.xpose.msra.mxu0 0.0
    %878 = vmatprep.subr.mxu0 0.0
    %879 = vmatpush1.xpose.msra.mxu0 0.0
    %880 = vmatprep.subr.mxu0 0.0
    %881 = vmatpush1.xpose.msra.mxu0 0.0
    %882 = vmatprep.subr.mxu0 0.0
    %883 = vmatpush1.xpose.msra.mxu0 0.0
    %884 = vmatprep.subr.mxu0 0.0
    %885 = vmatpush1.xpose.msra.mxu0 0.0
    %886 = vmatprep.subr.mxu0 0.0
    %887 = vmatpush1.xpose.msra.mxu0 0.0
    %888 = vmatprep.subr.mxu0 0.0
    %889 = vmatpush1.xpose.msra.mxu0 0.0
    %890 = vmatprep.subr.mxu0 0.0
    %891 = vmatpush1.xpose.msra.mxu0 0.0
    %892 = vmatprep.subr.mxu0 0.0
    %893 = vmatpush1.xpose.msra.mxu0 0.0
    %894 = vmatprep.subr.mxu0 0.0
    %895 = vmatpush1.xpose.msra.mxu0 0.0
    %896 = vmatprep.subr.mxu0 0.0
    %897 = vmatpush1.xpose.msra.mxu0 0.0
    %898 = vmatprep.subr.mxu0 0.0
    %899 = vmatpush1.xpose.msra.mxu0 0.0
    %900 = vmatprep.subr.mxu0 0.0
    %901 = vmatpush1.xpose.msra.mxu0 0.0
    %902 = vmatprep.subr.mxu0 0.0
    %903 = vmatpush1.xpose.msra.mxu0 0.0
    %904 = vmatprep.subr.mxu0 0.0
    %905 = vmatpush1.xpose.msra.mxu0 0.0
    %906 = vmatprep.subr.mxu0 0.0
    %907 = vmatpush1.xpose.msra.mxu0 0.0
    %908 = vmatprep.subr.mxu0 0.0
    %909 = vmatpush1.xpose.msra.mxu0 0.0
    %910 = vmatprep.subr.mxu0 0.0
    %911 = vmatpush1.xpose.msra.mxu0 0.0
    %912 = vmatprep.subr.mxu0 0.0
    %913 = vmatpush1.xpose.msra.mxu0 0.0
    %914 = vmatprep.subr.mxu0 0.0
    %915 = vmatpush1.xpose.msra.mxu0 0.0
    %916 = vmatprep.subr.mxu0 0.0
    %917 = vmatpush1.xpose.msra.mxu0 0.0
    %918 = vmatprep.subr.mxu0 0.0
    %919 = vmatpush1.xpose.msra.mxu0 0.0
    %920 = vmatprep.subr.mxu0 0.0
    %921 = vmatpush1.xpose.msra.mxu0 0.0
    %922 = vmatprep.subr.mxu0 0.0
    %923 = vmatpush1.xpose.msra.mxu0 0.0
    %924 = vmatprep.subr.mxu0 0.0
    %925 = vmatpush1.xpose.msra.mxu0 0.0
    %926 = vmatprep.subr.mxu0 0.0
    %927 = vmatpush1.xpose.msra.mxu0 0.0
    %928 = vmatprep.subr.mxu0 0.0
    %929 = vmatpush1.xpose.msra.mxu0 0.0
    %930 = vmatprep.subr.mxu0 0.0
    %931 = vmatpush1.xpose.msra.mxu0 0.0
    %932 = vmatprep.mubr.f32.mxu0 0.0
    %933 = vmatmul.mubr.f32.gmra.mrb[0].mxu0 %v864
    %v934 = vpop.f32.mrb[0].mxu0
    %v935 = vadd.f32 %v359, %v934
    %v936 = vpop.f32.mrb[0].mxu0
    %937 = vdwg.mxu0
    %v938 = vsel %vm456, %v857, -inf
    %939 = vmax.xlane.f32.xlu0 %v938
    %v940 = vpop.xlane.xlu0 %939
    %v941 = vsel %vm456, %v935, -inf
    %942 = vmax.xlane.f32.xlu0 %v941
    %v943 = vpop.xlane.xlu0 %942
    %v944 = vsub.f32 %v857, %v940
    %v945 = vsub.f32 %v935, %v943
    %v946 = vmul.f32 %v944, 1.442695
    %v947 = vpow.pop %v946
    %v948 = vmul.f32 %v945, 1.442695
    %v949 = vpow.pop %v948
    %v950 = vsel %vm456, %v947, 0.0
    %951 = vadd.xlane.f32.xlu0 %v950
    %v952 = vpop.xlane.xlu0 %951
    %v953 = vsel %vm456, %v949, 0.0
    %954 = vadd.xlane.f32.xlu0 %v953
    %v955 = vpop.xlane.xlu0 %954
    %v956 = vrcp.pop %v952
    %v957 = vrcp.pop %v955
    %v958 = vmul.f32 %v947, %v956
    %v959 = vmul.f32 %v949, %v957
    %960 = vrot.lane.b32.xlu0 %v445, 56
    %v961 = vpop.permute.xlu0 %960
    %v964 = vsel %vm456, %v958, 0
    %966 = vmatprep.subr.mxu0 0.0
    %967 = vmatpush1.msra.mxu0 %v961
    %968 = vmatprep.subr.mxu0 0.0
    %969 = vmatpush1.msra.mxu0 0.0
    %970 = vmatprep.subr.mxu0 0.0
    %971 = vmatpush1.msra.mxu0 0.0
    %972 = vmatprep.subr.mxu0 0.0
    %973 = vmatpush1.msra.mxu0 0.0
    %974 = vmatprep.subr.mxu0 0.0
    %975 = vmatpush1.msra.mxu0 0.0
    %976 = vmatprep.subr.mxu0 0.0
    %977 = vmatpush1.msra.mxu0 0.0
    %978 = vmatprep.subr.mxu0 0.0
    %979 = vmatpush1.msra.mxu0 0.0
    %980 = vmatprep.subr.mxu0 0.0
    %981 = vmatpush1.msra.mxu0 0.0
    %982 = vmatprep.subr.mxu0 0.0
    %983 = vmatpush1.msra.mxu0 0.0
    %984 = vmatprep.subr.mxu0 0.0
    %985 = vmatpush1.msra.mxu0 0.0
    %986 = vmatprep.subr.mxu0 0.0
    %987 = vmatpush1.msra.mxu0 0.0
    %988 = vmatprep.subr.mxu0 0.0
    %989 = vmatpush1.msra.mxu0 0.0
    %990 = vmatprep.subr.mxu0 0.0
    %991 = vmatpush1.msra.mxu0 0.0
    %992 = vmatprep.subr.mxu0 0.0
    %993 = vmatpush1.msra.mxu0 0.0
    %994 = vmatprep.subr.mxu0 0.0
    %995 = vmatpush1.msra.mxu0 0.0
    %996 = vmatprep.subr.mxu0 0.0
    %997 = vmatpush1.msra.mxu0 0.0
    %998 = vmatprep.subr.mxu0 0.0
    %999 = vmatpush1.msra.mxu0 0.0
    %1000 = vmatprep.subr.mxu0 0.0
    %1001 = vmatpush1.msra.mxu0 0.0
    %1002 = vmatprep.subr.mxu0 0.0
    %1003 = vmatpush1.msra.mxu0 0.0
    %1004 = vmatprep.subr.mxu0 0.0
    %1005 = vmatpush1.msra.mxu0 0.0
    %1006 = vmatprep.subr.mxu0 0.0
    %1007 = vmatpush1.msra.mxu0 0.0
    %1008 = vmatprep.subr.mxu0 0.0
    %1009 = vmatpush1.msra.mxu0 0.0
    %1010 = vmatprep.subr.mxu0 0.0
    %1011 = vmatpush1.msra.mxu0 0.0
    %1012 = vmatprep.subr.mxu0 0.0
    %1013 = vmatpush1.msra.mxu0 0.0
    %1014 = vmatprep.subr.mxu0 0.0
    %1015 = vmatpush1.msra.mxu0 0.0
    %1016 = vmatprep.subr.mxu0 0.0
    %1017 = vmatpush1.msra.mxu0 0.0
    %1018 = vmatprep.subr.mxu0 0.0
    %1019 = vmatpush1.msra.mxu0 0.0
    %1020 = vmatprep.subr.mxu0 0.0
    %1021 = vmatpush1.msra.mxu0 0.0
    %1022 = vmatprep.subr.mxu0 0.0
    %1023 = vmatpush1.msra.mxu0 0.0
    %1024 = vmatprep.subr.mxu0 0.0
    %1025 = vmatpush1.msra.mxu0 0.0
    %1026 = vmatprep.subr.mxu0 0.0
    %1027 = vmatpush1.msra.mxu0 0.0
    %1028 = vmatprep.subr.mxu0 0.0
    %1029 = vmatpush1.msra.mxu0 0.0
    %1030 = vmatprep.mubr.f32.mxu0 0.0
    %1031 = vmatmul.mubr.f32.gmra.mrb[0].mxu0 %v964
    %v1032 = vpop.f32.mrb[0].mxu0
    %v1033 = vadd.f32 0.0, %v1032
    %v1034 = vpop.f32.mrb[0].mxu0
    %1035 = vdwg.mxu0
    %1036 = vrot.lane.b32.xlu0 %v450, 56
    %v1037 = vpop.permute.xlu0 %1036
    %v1040 = vsel %vm456, %v959, 0
    %1042 = vmatprep.subr.mxu0 0.0
    %1043 = vmatpush1.msra.mxu0 %v1037
    %1044 = vmatprep.subr.mxu0 0.0
    %1045 = vmatpush1.msra.mxu0 0.0
    %1046 = vmatprep.subr.mxu0 0.0
    %1047 = vmatpush1.msra.mxu0 0.0
    %1048 = vmatprep.subr.mxu0 0.0
    %1049 = vmatpush1.msra.mxu0 0.0
    %1050 = vmatprep.subr.mxu0 0.0
    %1051 = vmatpush1.msra.mxu0 0.0
    %1052 = vmatprep.subr.mxu0 0.0
    %1053 = vmatpush1.msra.mxu0 0.0
    %1054 = vmatprep.subr.mxu0 0.0
    %1055 = vmatpush1.msra.mxu0 0.0
    %1056 = vmatprep.subr.mxu0 0.0
    %1057 = vmatpush1.msra.mxu0 0.0
    %1058 = vmatprep.subr.mxu0 0.0
    %1059 = vmatpush1.msra.mxu0 0.0
    %1060 = vmatprep.subr.mxu0 0.0
    %1061 = vmatpush1.msra.mxu0 0.0
    %1062 = vmatprep.subr.mxu0 0.0
    %1063 = vmatpush1.msra.mxu0 0.0
    %1064 = vmatprep.subr.mxu0 0.0
    %1065 = vmatpush1.msra.mxu0 0.0
    %1066 = vmatprep.subr.mxu0 0.0
    %1067 = vmatpush1.msra.mxu0 0.0
    %1068 = vmatprep.subr.mxu0 0.0
    %1069 = vmatpush1.msra.mxu0 0.0
    %1070 = vmatprep.subr.mxu0 0.0
    %1071 = vmatpush1.msra.mxu0 0.0
    %1072 = vmatprep.subr.mxu0 0.0
    %1073 = vmatpush1.msra.mxu0 0.0
    %1074 = vmatprep.subr.mxu0 0.0
    %1075 = vmatpush1.msra.mxu0 0.0
    %1076 = vmatprep.subr.mxu0 0.0
    %1077 = vmatpush1.msra.mxu0 0.0
    %1078 = vmatprep.subr.mxu0 0.0
    %1079 = vmatpush1.msra.mxu0 0.0
    %1080 = vmatprep.subr.mxu0 0.0
    %1081 = vmatpush1.msra.mxu0 0.0
    %1082 = vmatprep.subr.mxu0 0.0
    %1083 = vmatpush1.msra.mxu0 0.0
    %1084 = vmatprep.subr.mxu0 0.0
    %1085 = vmatpush1.msra.mxu0 0.0
    %1086 = vmatprep.subr.mxu0 0.0
    %1087 = vmatpush1.msra.mxu0 0.0
    %1088 = vmatprep.subr.mxu0 0.0
    %1089 = vmatpush1.msra.mxu0 0.0
    %1090 = vmatprep.subr.mxu0 0.0
    %1091 = vmatpush1.msra.mxu0 0.0
    %1092 = vmatprep.subr.mxu0 0.0
    %1093 = vmatpush1.msra.mxu0 0.0
    %1094 = vmatprep.subr.mxu0 0.0
    %1095 = vmatpush1.msra.mxu0 0.0
    %1096 = vmatprep.subr.mxu0 0.0
    %1097 = vmatpush1.msra.mxu0 0.0
    %1098 = vmatprep.subr.mxu0 0.0
    %1099 = vmatpush1.msra.mxu0 0.0
    %1100 = vmatprep.subr.mxu0 0.0
    %1101 = vmatpush1.msra.mxu0 0.0
    %1102 = vmatprep.subr.mxu0 0.0
    %1103 = vmatpush1.msra.mxu0 0.0
    %1104 = vmatprep.subr.mxu0 0.0
    %1105 = vmatpush1.msra.mxu0 0.0
    %1106 = vmatprep.mubr.f32.mxu0 0.0
    %1107 = vmatmul.mubr.f32.gmra.mrb[0].mxu0 %v1040
    %v1108 = vpop.f32.mrb[0].mxu0
    %v1109 = vadd.f32 0.0, %v1108
    %v1110 = vpop.f32.mrb[0].mxu0
    %1111 = vdwg.mxu0
    %1112 = vrot.lane.b32.xlu0 %v445, 112
    %v1113 = vpop.permute.xlu0 %1112
    %1114 = vrot.lane.b32.xlu0 %v445, 80
    %v1115 = vpop.permute.xlu0 %1114
    %v1116 = vsel %vm456, %v1113, 0
    %v1118 = vsel %vm456, %v1115, 0
    %1120 = vmatprep.subr.mxu0 0.0
    %1121 = vmatpush1.xpose.msra.mxu0 %v1118
    %1122 = vmatprep.subr.mxu0 0.0
    %1123 = vmatpush1.xpose.msra.mxu0 0.0
    %1124 = vmatprep.subr.mxu0 0.0
    %1125 = vmatpush1.xpose.msra.mxu0 0.0
    %1126 = vmatprep.subr.mxu0 0.0
    %1127 = vmatpush1.xpose.msra.mxu0 0.0
    %1128 = vmatprep.subr.mxu0 0.0
    %1129 = vmatpush1.xpose.msra.mxu0 0.0
    %1130 = vmatprep.subr.mxu0 0.0
    %1131 = vmatpush1.xpose.msra.mxu0 0.0
    %1132 = vmatprep.subr.mxu0 0.0
    %1133 = vmatpush1.xpose.msra.mxu0 0.0
    %1134 = vmatprep.subr.mxu0 0.0
    %1135 = vmatpush1.xpose.msra.mxu0 0.0
    %1136 = vmatprep.subr.mxu0 0.0
    %1137 = vmatpush1.xpose.msra.mxu0 0.0
    %1138 = vmatprep.subr.mxu0 0.0
    %1139 = vmatpush1.xpose.msra.mxu0 0.0
    %1140 = vmatprep.subr.mxu0 0.0
    %1141 = vmatpush1.xpose.msra.mxu0 0.0
    %1142 = vmatprep.subr.mxu0 0.0
    %1143 = vmatpush1.xpose.msra.mxu0 0.0
    %1144 = vmatprep.subr.mxu0 0.0
    %1145 = vmatpush1.xpose.msra.mxu0 0.0
    %1146 = vmatprep.subr.mxu0 0.0
    %1147 = vmatpush1.xpose.msra.mxu0 0.0
    %1148 = vmatprep.subr.mxu0 0.0
    %1149 = vmatpush1.xpose.msra.mxu0 0.0
    %1150 = vmatprep.subr.mxu0 0.0
    %1151 = vmatpush1.xpose.msra.mxu0 0.0
    %1152 = vmatprep.subr.mxu0 0.0
    %1153 = vmatpush1.xpose.msra.mxu0 0.0
    %1154 = vmatprep.subr.mxu0 0.0
    %1155 = vmatpush1.xpose.msra.mxu0 0.0
    %1156 = vmatprep.subr.mxu0 0.0
    %1157 = vmatpush1.xpose.msra.mxu0 0.0
    %1158 = vmatprep.subr.mxu0 0.0
    %1159 = vmatpush1.xpose.msra.mxu0 0.0
    %1160 = vmatprep.subr.mxu0 0.0
    %1161 = vmatpush1.xpose.msra.mxu0 0.0
    %1162 = vmatprep.subr.mxu0 0.0
    %1163 = vmatpush1.xpose.msra.mxu0 0.0
    %1164 = vmatprep.subr.mxu0 0.0
    %1165 = vmatpush1.xpose.msra.mxu0 0.0
    %1166 = vmatprep.subr.mxu0 0.0
    %1167 = vmatpush1.xpose.msra.mxu0 0.0
    %1168 = vmatprep.subr.mxu0 0.0
    %1169 = vmatpush1.xpose.msra.mxu0 0.0
    %1170 = vmatprep.subr.mxu0 0.0
    %1171 = vmatpush1.xpose.msra.mxu0 0.0
    %1172 = vmatprep.subr.mxu0 0.0
    %1173 = vmatpush1.xpose.msra.mxu0 0.0
    %1174 = vmatprep.subr.mxu0 0.0
    %1175 = vmatpush1.xpose.msra.mxu0 0.0
    %1176 = vmatprep.subr.mxu0 0.0
    %1177 = vmatpush1.xpose.msra.mxu0 0.0
    %1178 = vmatprep.subr.mxu0 0.0
    %1179 = vmatpush1.xpose.msra.mxu0 0.0
    %1180 = vmatprep.subr.mxu0 0.0
    %1181 = vmatpush1.xpose.msra.mxu0 0.0
    %1182 = vmatprep.subr.mxu0 0.0
    %1183 = vmatpush1.xpose.msra.mxu0 0.0
    %1184 = vmatprep.mubr.f32.mxu0 0.0
    %1185 = vmatmul.mubr.f32.gmra.mrb[0].mxu0 %v1116
    %v1186 = vpop.f32.mrb[0].mxu0
    %v1187 = vadd.f32 %v358, %v1186
    %v1188 = vpop.f32.mrb[0].mxu0
    %1189 = vdwg.mxu0
    %1190 = vrot.lane.b32.xlu0 %v450, 112
    %v1191 = vpop.permute.xlu0 %1190
    %1192 = vrot.lane.b32.xlu0 %v450, 80
    %v1193 = vpop.permute.xlu0 %1192
    %v1194 = vsel %vm456, %v1191, 0
    %v1196 = vsel %vm456, %v1193, 0
    %1198 = vmatprep.subr.mxu0 0.0
    %1199 = vmatpush1.xpose.msra.mxu0 %v1196
    %1200 = vmatprep.subr.mxu0 0.0
    %1201 = vmatpush1.xpose.msra.mxu0 0.0
    %1202 = vmatprep.subr.mxu0 0.0
    %1203 = vmatpush1.xpose.msra.mxu0 0.0
    %1204 = vmatprep.subr.mxu0 0.0
    %1205 = vmatpush1.xpose.msra.mxu0 0.0
    %1206 = vmatprep.subr.mxu0 0.0
    %1207 = vmatpush1.xpose.msra.mxu0 0.0
    %1208 = vmatprep.subr.mxu0 0.0
    %1209 = vmatpush1.xpose.msra.mxu0 0.0
    %1210 = vmatprep.subr.mxu0 0.0
    %1211 = vmatpush1.xpose.msra.mxu0 0.0
    %1212 = vmatprep.subr.mxu0 0.0
    %1213 = vmatpush1.xpose.msra.mxu0 0.0
    %1214 = vmatprep.subr.mxu0 0.0
    %1215 = vmatpush1.xpose.msra.mxu0 0.0
    %1216 = vmatprep.subr.mxu0 0.0
    %1217 = vmatpush1.xpose.msra.mxu0 0.0
    %1218 = vmatprep.subr.mxu0 0.0
    %1219 = vmatpush1.xpose.msra.mxu0 0.0
    %1220 = vmatprep.subr.mxu0 0.0
    %1221 = vmatpush1.xpose.msra.mxu0 0.0
    %1222 = vmatprep.subr.mxu0 0.0
    %1223 = vmatpush1.xpose.msra.mxu0 0.0
    %1224 = vmatprep.subr.mxu0 0.0
    %1225 = vmatpush1.xpose.msra.mxu0 0.0
    %1226 = vmatprep.subr.mxu0 0.0
    %1227 = vmatpush1.xpose.msra.mxu0 0.0
    %1228 = vmatprep.subr.mxu0 0.0
    %1229 = vmatpush1.xpose.msra.mxu0 0.0
    %1230 = vmatprep.subr.mxu0 0.0
    %1231 = vmatpush1.xpose.msra.mxu0 0.0
    %1232 = vmatprep.subr.mxu0 0.0
    %1233 = vmatpush1.xpose.msra.mxu0 0.0
    %1234 = vmatprep.subr.mxu0 0.0
    %1235 = vmatpush1.xpose.msra.mxu0 0.0
    %1236 = vmatprep.subr.mxu0 0.0
    %1237 = vmatpush1.xpose.msra.mxu0 0.0
    %1238 = vmatprep.subr.mxu0 0.0
    %1239 = vmatpush1.xpose.msra.mxu0 0.0
    %1240 = vmatprep.subr.mxu0 0.0
    %1241 = vmatpush1.xpose.msra.mxu0 0.0
    %1242 = vmatprep.subr.mxu0 0.0
    %1243 = vmatpush1.xpose.msra.mxu0 0.0
    %1244 = vmatprep.subr.mxu0 0.0
    %1245 = vmatpush1.xpose.msra.mxu0 0.0
    %1246 = vmatprep.subr.mxu0 0.0
    %1247 = vmatpush1.xpose.msra.mxu0 0.0
    %1248 = vmatprep.subr.mxu0 0.0
    %1249 = vmatpush1.xpose.msra.mxu0 0.0
    %1250 = vmatprep.subr.mxu0 0.0
    %1251 = vmatpush1.xpose.msra.mxu0 0.0
    %1252 = vmatprep.subr.mxu0 0.0
    %1253 = vmatpush1.xpose.msra.mxu0 0.0
    %1254 = vmatprep.subr.mxu0 0.0
    %1255 = vmatpush1.xpose.msra.mxu0 0.0
    %1256 = vmatprep.subr.mxu0 0.0
    %1257 = vmatpush1.xpose.msra.mxu0 0.0
    %1258 = vmatprep.subr.mxu0 0.0
    %1259 = vmatpush1.xpose.msra.mxu0 0.0
    %1260 = vmatprep.subr.mxu0 0.0
    %1261 = vmatpush1.xpose.msra.mxu0 0.0
    %1262 = vmatprep.mubr.f32.mxu0 0.0
    %1263 = vmatmul.mubr.f32.gmra.mrb[0].mxu0 %v1194
    %v1264 = vpop.f32.mrb[0].mxu0
    %v1265 = vadd.f32 %v359, %v1264
    %v1266 = vpop.f32.mrb[0].mxu0
    %1267 = vdwg.mxu0
    %v1268 = vsel %vm456, %v1187, -inf
    %1269 = vmax.xlane.f32.xlu0 %v1268
    %v1270 = vpop.xlane.xlu0 %1269
    %v1271 = vsel %vm456, %v1265, -inf
    %1272 = vmax.xlane.f32.xlu0 %v1271
    %v1273 = vpop.xlane.xlu0 %1272
    %v1274 = vsub.f32 %v1187, %v1270
    %v1275 = vsub.f32 %v1265, %v1273
    %v1276 = vmul.f32 %v1274, 1.442695
    %v1277 = vpow.pop %v1276
    %v1278 = vmul.f32 %v1275, 1.442695
    %v1279 = vpow.pop %v1278
    %v1280 = vsel %vm456, %v1277, 0.0
    %1281 = vadd.xlane.f32.xlu0 %v1280
    %v1282 = vpop.xlane.xlu0 %1281
    %v1283 = vsel %vm456, %v1279, 0.0
    %1284 = vadd.xlane.f32.xlu0 %v1283
    %v1285 = vpop.xlane.xlu0 %1284
    %v1286 = vrcp.pop %v1282
    %v1287 = vrcp.pop %v1285
    %v1288 = vmul.f32 %v1277, %v1286
    %v1289 = vmul.f32 %v1279, %v1287
    %1290 = vrot.lane.b32.xlu0 %v445, 48
    %v1291 = vpop.permute.xlu0 %1290
    %v1294 = vsel %vm456, %v1288, 0
    %1296 = vmatprep.subr.mxu0 0.0
    %1297 = vmatpush1.msra.mxu0 %v1291
    %1298 = vmatprep.subr.mxu0 0.0
    %1299 = vmatpush1.msra.mxu0 0.0
    %1300 = vmatprep.subr.mxu0 0.0
    %1301 = vmatpush1.msra.mxu0 0.0
    %1302 = vmatprep.subr.mxu0 0.0
    %1303 = vmatpush1.msra.mxu0 0.0
    %1304 = vmatprep.subr.mxu0 0.0
    %1305 = vmatpush1.msra.mxu0 0.0
    %1306 = vmatprep.subr.mxu0 0.0
    %1307 = vmatpush1.msra.mxu0 0.0
    %1308 = vmatprep.subr.mxu0 0.0
    %1309 = vmatpush1.msra.mxu0 0.0
    %1310 = vmatprep.subr.mxu0 0.0
    %1311 = vmatpush1.msra.mxu0 0.0
    %1312 = vmatprep.subr.mxu0 0.0
    %1313 = vmatpush1.msra.mxu0 0.0
    %1314 = vmatprep.subr.mxu0 0.0
    %1315 = vmatpush1.msra.mxu0 0.0
    %1316 = vmatprep.subr.mxu0 0.0
    %1317 = vmatpush1.msra.mxu0 0.0
    %1318 = vmatprep.subr.mxu0 0.0
    %1319 = vmatpush1.msra.mxu0 0.0
    %1320 = vmatprep.subr.mxu0 0.0
    %1321 = vmatpush1.msra.mxu0 0.0
    %1322 = vmatprep.subr.mxu0 0.0
    %1323 = vmatpush1.msra.mxu0 0.0
    %1324 = vmatprep.subr.mxu0 0.0
    %1325 = vmatpush1.msra.mxu0 0.0
    %1326 = vmatprep.subr.mxu0 0.0
    %1327 = vmatpush1.msra.mxu0 0.0
    %1328 = vmatprep.subr.mxu0 0.0
    %1329 = vmatpush1.msra.mxu0 0.0
    %1330 = vmatprep.subr.mxu0 0.0
    %1331 = vmatpush1.msra.mxu0 0.0
    %1332 = vmatprep.subr.mxu0 0.0
    %1333 = vmatpush1.msra.mxu0 0.0
    %1334 = vmatprep.subr.mxu0 0.0
    %1335 = vmatpush1.msra.mxu0 0.0
    %1336 = vmatprep.subr.mxu0 0.0
    %1337 = vmatpush1.msra.mxu0 0.0
    %1338 = vmatprep.subr.mxu0 0.0
    %1339 = vmatpush1.msra.mxu0 0.0
    %1340 = vmatprep.subr.mxu0 0.0
    %1341 = vmatpush1.msra.mxu0 0.0
    %1342 = vmatprep.subr.mxu0 0.0
    %1343 = vmatpush1.msra.mxu0 0.0
    %1344 = vmatprep.subr.mxu0 0.0
    %1345 = vmatpush1.msra.mxu0 0.0
    %1346 = vmatprep.subr.mxu0 0.0
    %1347 = vmatpush1.msra.mxu0 0.0
    %1348 = vmatprep.subr.mxu0 0.0
    %1349 = vmatpush1.msra.mxu0 0.0
    %1350 = vmatprep.subr.mxu0 0.0
    %1351 = vmatpush1.msra.mxu0 0.0
    %1352 = vmatprep.subr.mxu0 0.0
    %1353 = vmatpush1.msra.mxu0 0.0
    %1354 = vmatprep.subr.mxu0 0.0
    %1355 = vmatpush1.msra.mxu0 0.0
    %1356 = vmatprep.subr.mxu0 0.0
    %1357 = vmatpush1.msra.mxu0 0.0
    %1358 = vmatprep.subr.mxu0 0.0
    %1359 = vmatpush1.msra.mxu0 0.0
    %1360 = vmatprep.mubr.f32.mxu0 0.0
    %1361 = vmatmul.mubr.f32.gmra.mrb[0].mxu0 %v1294
    %v1362 = vpop.f32.mrb[0].mxu0
    %v1363 = vadd.f32 0.0, %v1362
    %v1364 = vpop.f32.mrb[0].mxu0
    %1365 = vdwg.mxu0
    %1366 = vrot.lane.b32.xlu0 %v450, 48
    %v1367 = vpop.permute.xlu0 %1366
    %v1370 = vsel %vm456, %v1289, 0
    %1372 = vmatprep.subr.mxu0 0.0
    %1373 = vmatpush1.msra.mxu0 %v1367
    %1374 = vmatprep.subr.mxu0 0.0
    %1375 = vmatpush1.msra.mxu0 0.0
    %1376 = vmatprep.subr.mxu0 0.0
    %1377 = vmatpush1.msra.mxu0 0.0
    %1378 = vmatprep.subr.mxu0 0.0
    %1379 = vmatpush1.msra.mxu0 0.0
    %1380 = vmatprep.subr.mxu0 0.0
    %1381 = vmatpush1.msra.mxu0 0.0
    %1382 = vmatprep.subr.mxu0 0.0
    %1383 = vmatpush1.msra.mxu0 0.0
    %1384 = vmatprep.subr.mxu0 0.0
    %1385 = vmatpush1.msra.mxu0 0.0
    %1386 = vmatprep.subr.mxu0 0.0
    %1387 = vmatpush1.msra.mxu0 0.0
    %1388 = vmatprep.subr.mxu0 0.0
    %1389 = vmatpush1.msra.mxu0 0.0
    %1390 = vmatprep.subr.mxu0 0.0
    %1391 = vmatpush1.msra.mxu0 0.0
    %1392 = vmatprep.subr.mxu0 0.0
    %1393 = vmatpush1.msra.mxu0 0.0
    %1394 = vmatprep.subr.mxu0 0.0
    %1395 = vmatpush1.msra.mxu0 0.0
    %1396 = vmatprep.subr.mxu0 0.0
    %1397 = vmatpush1.msra.mxu0 0.0
    %1398 = vmatprep.subr.mxu0 0.0
    %1399 = vmatpush1.msra.mxu0 0.0
    %1400 = vmatprep.subr.mxu0 0.0
    %1401 = vmatpush1.msra.mxu0 0.0
    %1402 = vmatprep.subr.mxu0 0.0
    %1403 = vmatpush1.msra.mxu0 0.0
    %1404 = vmatprep.subr.mxu0 0.0
    %1405 = vmatpush1.msra.mxu0 0.0
    %1406 = vmatprep.subr.mxu0 0.0
    %1407 = vmatpush1.msra.mxu0 0.0
    %1408 = vmatprep.subr.mxu0 0.0
    %1409 = vmatpush1.msra.mxu0 0.0
    %1410 = vmatprep.subr.mxu0 0.0
    %1411 = vmatpush1.msra.mxu0 0.0
    %1412 = vmatprep.subr.mxu0 0.0
    %1413 = vmatpush1.msra.mxu0 0.0
    %1414 = vmatprep.subr.mxu0 0.0
    %1415 = vmatpush1.msra.mxu0 0.0
    %1416 = vmatprep.subr.mxu0 0.0
    %1417 = vmatpush1.msra.mxu0 0.0
    %1418 = vmatprep.subr.mxu0 0.0
    %1419 = vmatpush1.msra.mxu0 0.0
    %1420 = vmatprep.subr.mxu0 0.0
    %1421 = vmatpush1.msra.mxu0 0.0
    %1422 = vmatprep.subr.mxu0 0.0
    %1423 = vmatpush1.msra.mxu0 0.0
    %1424 = vmatprep.subr.mxu0 0.0
    %1425 = vmatpush1.msra.mxu0 0.0
    %1426 = vmatprep.subr.mxu0 0.0
    %1427 = vmatpush1.msra.mxu0 0.0
    %1428 = vmatprep.subr.mxu0 0.0
    %1429 = vmatpush1.msra.mxu0 0.0
    %1430 = vmatprep.subr.mxu0 0.0
    %1431 = vmatpush1.msra.mxu0 0.0
    %1432 = vmatprep.subr.mxu0 0.0
    %1433 = vmatpush1.msra.mxu0 0.0
    %1434 = vmatprep.subr.mxu0 0.0
    %1435 = vmatpush1.msra.mxu0 0.0
    %1436 = vmatprep.mubr.f32.mxu0 0.0
    %1437 = vmatmul.mubr.f32.gmra.mrb[0].mxu0 %v1370
    %v1438 = vpop.f32.mrb[0].mxu0
    %v1439 = vadd.f32 0.0, %v1438
    %v1440 = vpop.f32.mrb[0].mxu0
    %1441 = vdwg.mxu0
    %1442 = vrot.lane.b32.xlu0 %v445, 104
    %v1443 = vpop.permute.xlu0 %1442
    %1444 = vrot.lane.b32.xlu0 %v445, 72
    %v1445 = vpop.permute.xlu0 %1444
    %v1446 = vsel %vm456, %v1443, 0
    %v1448 = vsel %vm456, %v1445, 0
    %1450 = vmatprep.subr.mxu0 0.0
    %1451 = vmatpush1.xpose.msra.mxu0 %v1448
    %1452 = vmatprep.subr.mxu0 0.0
    %1453 = vmatpush1.xpose.msra.mxu0 0.0
    %1454 = vmatprep.subr.mxu0 0.0
    %1455 = vmatpush1.xpose.msra.mxu0 0.0
    %1456 = vmatprep.subr.mxu0 0.0
    %1457 = vmatpush1.xpose.msra.mxu0 0.0
    %1458 = vmatprep.subr.mxu0 0.0
    %1459 = vmatpush1.xpose.msra.mxu0 0.0
    %1460 = vmatprep.subr.mxu0 0.0
    %1461 = vmatpush1.xpose.msra.mxu0 0.0
    %1462 = vmatprep.subr.mxu0 0.0
    %1463 = vmatpush1.xpose.msra.mxu0 0.0
    %1464 = vmatprep.subr.mxu0 0.0
    %1465 = vmatpush1.xpose.msra.mxu0 0.0
    %1466 = vmatprep.subr.mxu0 0.0
    %1467 = vmatpush1.xpose.msra.mxu0 0.0
    %1468 = vmatprep.subr.mxu0 0.0
    %1469 = vmatpush1.xpose.msra.mxu0 0.0
    %1470 = vmatprep.subr.mxu0 0.0
    %1471 = vmatpush1.xpose.msra.mxu0 0.0
    %1472 = vmatprep.subr.mxu0 0.0
    %1473 = vmatpush1.xpose.msra.mxu0 0.0
    %1474 = vmatprep.subr.mxu0 0.0
    %1475 = vmatpush1.xpose.msra.mxu0 0.0
    %1476 = vmatprep.subr.mxu0 0.0
    %1477 = vmatpush1.xpose.msra.mxu0 0.0
    %1478 = vmatprep.subr.mxu0 0.0
    %1479 = vmatpush1.xpose.msra.mxu0 0.0
    %1480 = vmatprep.subr.mxu0 0.0
    %1481 = vmatpush1.xpose.msra.mxu0 0.0
    %1482 = vmatprep.subr.mxu0 0.0
    %1483 = vmatpush1.xpose.msra.mxu0 0.0
    %1484 = vmatprep.subr.mxu0 0.0
    %1485 = vmatpush1.xpose.msra.mxu0 0.0
    %1486 = vmatprep.subr.mxu0 0.0
    %1487 = vmatpush1.xpose.msra.mxu0 0.0
    %1488 = vmatprep.subr.mxu0 0.0
    %1489 = vmatpush1.xpose.msra.mxu0 0.0
    %1490 = vmatprep.subr.mxu0 0.0
    %1491 = vmatpush1.xpose.msra.mxu0 0.0
    %1492 = vmatprep.subr.mxu0 0.0
    %1493 = vmatpush1.xpose.msra.mxu0 0.0
    %1494 = vmatprep.subr.mxu0 0.0
    %1495 = vmatpush1.xpose.msra.mxu0 0.0
    %1496 = vmatprep.subr.mxu0 0.0
    %1497 = vmatpush1.xpose.msra.mxu0 0.0
    %1498 = vmatprep.subr.mxu0 0.0
    %1499 = vmatpush1.xpose.msra.mxu0 0.0
    %1500 = vmatprep.subr.mxu0 0.0
    %1501 = vmatpush1.xpose.msra.mxu0 0.0
    %1502 = vmatprep.subr.mxu0 0.0
    %1503 = vmatpush1.xpose.msra.mxu0 0.0
    %1504 = vmatprep.subr.mxu0 0.0
    %1505 = vmatpush1.xpose.msra.mxu0 0.0
    %1506 = vmatprep.subr.mxu0 0.0
    %1507 = vmatpush1.xpose.msra.mxu0 0.0
    %1508 = vmatprep.subr.mxu0 0.0
    %1509 = vmatpush1.xpose.msra.mxu0 0.0
    %1510 = vmatprep.subr.mxu0 0.0
    %1511 = vmatpush1.xpose.msra.mxu0 0.0
    %1512 = vmatprep.subr.mxu0 0.0
    %1513 = vmatpush1.xpose.msra.mxu0 0.0
    %1514 = vmatprep.mubr.f32.mxu0 0.0
    %1515 = vmatmul.mubr.f32.gmra.mrb[0].mxu0 %v1446
    %v1516 = vpop.f32.mrb[0].mxu0
    %v1517 = vadd.f32 %v358, %v1516
    %v1518 = vpop.f32.mrb[0].mxu0
    %1519 = vdwg.mxu0
    %1520 = vrot.lane.b32.xlu0 %v450, 104
    %v1521 = vpop.permute.xlu0 %1520
    %1522 = vrot.lane.b32.xlu0 %v450, 72
    %v1523 = vpop.permute.xlu0 %1522
    %v1524 = vsel %vm456, %v1521, 0
    %v1526 = vsel %vm456, %v1523, 0
    %1528 = vmatprep.subr.mxu0 0.0
    %1529 = vmatpush1.xpose.msra.mxu0 %v1526
    %1530 = vmatprep.subr.mxu0 0.0
    %1531 = vmatpush1.xpose.msra.mxu0 0.0
    %1532 = vmatprep.subr.mxu0 0.0
    %1533 = vmatpush1.xpose.msra.mxu0 0.0
    %1534 = vmatprep.subr.mxu0 0.0
    %1535 = vmatpush1.xpose.msra.mxu0 0.0
    %1536 = vmatprep.subr.mxu0 0.0
    %1537 = vmatpush1.xpose.msra.mxu0 0.0
    %1538 = vmatprep.subr.mxu0 0.0
    %1539 = vmatpush1.xpose.msra.mxu0 0.0
    %1540 = vmatprep.subr.mxu0 0.0
    %1541 = vmatpush1.xpose.msra.mxu0 0.0
    %1542 = vmatprep.subr.mxu0 0.0
    %1543 = vmatpush1.xpose.msra.mxu0 0.0
    %1544 = vmatprep.subr.mxu0 0.0
    %1545 = vmatpush1.xpose.msra.mxu0 0.0
    %1546 = vmatprep.subr.mxu0 0.0
    %1547 = vmatpush1.xpose.msra.mxu0 0.0
    %1548 = vmatprep.subr.mxu0 0.0
    %1549 = vmatpush1.xpose.msra.mxu0 0.0
    %1550 = vmatprep.subr.mxu0 0.0
    %1551 = vmatpush1.xpose.msra.mxu0 0.0
    %1552 = vmatprep.subr.mxu0 0.0
    %1553 = vmatpush1.xpose.msra.mxu0 0.0
    %1554 = vmatprep.subr.mxu0 0.0
    %1555 = vmatpush1.xpose.msra.mxu0 0.0
    %1556 = vmatprep.subr.mxu0 0.0
    %1557 = vmatpush1.xpose.msra.mxu0 0.0
    %1558 = vmatprep.subr.mxu0 0.0
    %1559 = vmatpush1.xpose.msra.mxu0 0.0
    %1560 = vmatprep.subr.mxu0 0.0
    %1561 = vmatpush1.xpose.msra.mxu0 0.0
    %1562 = vmatprep.subr.mxu0 0.0
    %1563 = vmatpush1.xpose.msra.mxu0 0.0
    %1564 = vmatprep.subr.mxu0 0.0
    %1565 = vmatpush1.xpose.msra.mxu0 0.0
    %1566 = vmatprep.subr.mxu0 0.0
    %1567 = vmatpush1.xpose.msra.mxu0 0.0
    %1568 = vmatprep.subr.mxu0 0.0
    %1569 = vmatpush1.xpose.msra.mxu0 0.0
    %1570 = vmatprep.subr.mxu0 0.0
    %1571 = vmatpush1.xpose.msra.mxu0 0.0
    %1572 = vmatprep.subr.mxu0 0.0
    %1573 = vmatpush1.xpose.msra.mxu0 0.0
    %1574 = vmatprep.subr.mxu0 0.0
    %1575 = vmatpush1.xpose.msra.mxu0 0.0
    %1576 = vmatprep.subr.mxu0 0.0
    %1577 = vmatpush1.xpose.msra.mxu0 0.0
    %1578 = vmatprep.subr.mxu0 0.0
    %1579 = vmatpush1.xpose.msra.mxu0 0.0
    %1580 = vmatprep.subr.mxu0 0.0
    %1581 = vmatpush1.xpose.msra.mxu0 0.0
    %1582 = vmatprep.subr.mxu0 0.0
    %1583 = vmatpush1.xpose.msra.mxu0 0.0
    %1584 = vmatprep.subr.mxu0 0.0
    %1585 = vmatpush1.xpose.msra.mxu0 0.0
    %1586 = vmatprep.subr.mxu0 0.0
    %1587 = vmatpush1.xpose.msra.mxu0 0.0
    %1588 = vmatprep.subr.mxu0 0.0
    %1589 = vmatpush1.xpose.msra.mxu0 0.0
    %1590 = vmatprep.subr.mxu0 0.0
    %1591 = vmatpush1.xpose.msra.mxu0 0.0
    %1592 = vmatprep.mubr.f32.mxu0 0.0
    %1593 = vmatmul.mubr.f32.gmra.mrb[0].mxu0 %v1524
    %v1594 = vpop.f32.mrb[0].mxu0
    %v1595 = vadd.f32 %v359, %v1594
    %v1596 = vpop.f32.mrb[0].mxu0
    %1597 = vdwg.mxu0
    %v1598 = vsel %vm456, %v1517, -inf
    %1599 = vmax.xlane.f32.xlu0 %v1598
    %v1600 = vpop.xlane.xlu0 %1599
    %v1601 = vsel %vm456, %v1595, -inf
    %1602 = vmax.xlane.f32.xlu0 %v1601
    %v1603 = vpop.xlane.xlu0 %1602
    %v1604 = vsub.f32 %v1517, %v1600
    %v1605 = vsub.f32 %v1595, %v1603
    %v1606 = vmul.f32 %v1604, 1.442695
    %v1607 = vpow.pop %v1606
    %v1608 = vmul.f32 %v1605, 1.442695
    %v1609 = vpow.pop %v1608
    %v1610 = vsel %vm456, %v1607, 0.0
    %1611 = vadd.xlane.f32.xlu0 %v1610
    %v1612 = vpop.xlane.xlu0 %1611
    %v1613 = vsel %vm456, %v1609, 0.0
    %1614 = vadd.xlane.f32.xlu0 %v1613
    %v1615 = vpop.xlane.xlu0 %1614
    %v1616 = vrcp.pop %v1612
    %v1617 = vrcp.pop %v1615
    %v1618 = vmul.f32 %v1607, %v1616
    %v1619 = vmul.f32 %v1609, %v1617
    %1620 = vrot.lane.b32.xlu0 %v445, 40
    %v1621 = vpop.permute.xlu0 %1620
    %v1624 = vsel %vm456, %v1618, 0
    %1626 = vmatprep.subr.mxu0 0.0
    %1627 = vmatpush1.msra.mxu0 %v1621
    %1628 = vmatprep.subr.mxu0 0.0
    %1629 = vmatpush1.msra.mxu0 0.0
    %1630 = vmatprep.subr.mxu0 0.0
    %1631 = vmatpush1.msra.mxu0 0.0
    %1632 = vmatprep.subr.mxu0 0.0
    %1633 = vmatpush1.msra.mxu0 0.0
    %1634 = vmatprep.subr.mxu0 0.0
    %1635 = vmatpush1.msra.mxu0 0.0
    %1636 = vmatprep.subr.mxu0 0.0
    %1637 = vmatpush1.msra.mxu0 0.0
    %1638 = vmatprep.subr.mxu0 0.0
    %1639 = vmatpush1.msra.mxu0 0.0
    %1640 = vmatprep.subr.mxu0 0.0
    %1641 = vmatpush1.msra.mxu0 0.0
    %1642 = vmatprep.subr.mxu0 0.0
    %1643 = vmatpush1.msra.mxu0 0.0
    %1644 = vmatprep.subr.mxu0 0.0
    %1645 = vmatpush1.msra.mxu0 0.0
    %1646 = vmatprep.subr.mxu0 0.0
    %1647 = vmatpush1.msra.mxu0 0.0
    %1648 = vmatprep.subr.mxu0 0.0
    %1649 = vmatpush1.msra.mxu0 0.0
    %1650 = vmatprep.subr.mxu0 0.0
    %1651 = vmatpush1.msra.mxu0 0.0
    %1652 = vmatprep.subr.mxu0 0.0
    %1653 = vmatpush1.msra.mxu0 0.0
    %1654 = vmatprep.subr.mxu0 0.0
    %1655 = vmatpush1.msra.mxu0 0.0
    %1656 = vmatprep.subr.mxu0 0.0
    %1657 = vmatpush1.msra.mxu0 0.0
    %1658 = vmatprep.subr.mxu0 0.0
    %1659 = vmatpush1.msra.mxu0 0.0
    %1660 = vmatprep.subr.mxu0 0.0
    %1661 = vmatpush1.msra.mxu0 0.0
    %1662 = vmatprep.subr.mxu0 0.0
    %1663 = vmatpush1.msra.mxu0 0.0
    %1664 = vmatprep.subr.mxu0 0.0
    %1665 = vmatpush1.msra.mxu0 0.0
    %1666 = vmatprep.subr.mxu0 0.0
    %1667 = vmatpush1.msra.mxu0 0.0
    %1668 = vmatprep.subr.mxu0 0.0
    %1669 = vmatpush1.msra.mxu0 0.0
    %1670 = vmatprep.subr.mxu0 0.0
    %1671 = vmatpush1.msra.mxu0 0.0
    %1672 = vmatprep.subr.mxu0 0.0
    %1673 = vmatpush1.msra.mxu0 0.0
    %1674 = vmatprep.subr.mxu0 0.0
    %1675 = vmatpush1.msra.mxu0 0.0
    %1676 = vmatprep.subr.mxu0 0.0
    %1677 = vmatpush1.msra.mxu0 0.0
    %1678 = vmatprep.subr.mxu0 0.0
    %1679 = vmatpush1.msra.mxu0 0.0
    %1680 = vmatprep.subr.mxu0 0.0
    %1681 = vmatpush1.msra.mxu0 0.0
    %1682 = vmatprep.subr.mxu0 0.0
    %1683 = vmatpush1.msra.mxu0 0.0
    %1684 = vmatprep.subr.mxu0 0.0
    %1685 = vmatpush1.msra.mxu0 0.0
    %1686 = vmatprep.subr.mxu0 0.0
    %1687 = vmatpush1.msra.mxu0 0.0
    %1688 = vmatprep.subr.mxu0 0.0
    %1689 = vmatpush1.msra.mxu0 0.0
    %1690 = vmatprep.mubr.f32.mxu0 0.0
    %1691 = vmatmul.mubr.f32.gmra.mrb[0].mxu0 %v1624
    %v1692 = vpop.f32.mrb[0].mxu0
    %v1693 = vadd.f32 0.0, %v1692
    %v1694 = vpop.f32.mrb[0].mxu0
    %1695 = vdwg.mxu0
    %1696 = vrot.lane.b32.xlu0 %v450, 40
    %v1697 = vpop.permute.xlu0 %1696
    %v1700 = vsel %vm456, %v1619, 0
    %1702 = vmatprep.subr.mxu0 0.0
    %1703 = vmatpush1.msra.mxu0 %v1697
    %1704 = vmatprep.subr.mxu0 0.0
    %1705 = vmatpush1.msra.mxu0 0.0
    %1706 = vmatprep.subr.mxu0 0.0
    %1707 = vmatpush1.msra.mxu0 0.0
    %1708 = vmatprep.subr.mxu0 0.0
    %1709 = vmatpush1.msra.mxu0 0.0
    %1710 = vmatprep.subr.mxu0 0.0
    %1711 = vmatpush1.msra.mxu0 0.0
    %1712 = vmatprep.subr.mxu0 0.0
    %1713 = vmatpush1.msra.mxu0 0.0
    %1714 = vmatprep.subr.mxu0 0.0
    %1715 = vmatpush1.msra.mxu0 0.0
    %1716 = vmatprep.subr.mxu0 0.0
    %1717 = vmatpush1.msra.mxu0 0.0
    %1718 = vmatprep.subr.mxu0 0.0
    %1719 = vmatpush1.msra.mxu0 0.0
    %1720 = vmatprep.subr.mxu0 0.0
    %1721 = vmatpush1.msra.mxu0 0.0
    %1722 = vmatprep.subr.mxu0 0.0
    %1723 = vmatpush1.msra.mxu0 0.0
    %1724 = vmatprep.subr.mxu0 0.0
    %1725 = vmatpush1.msra.mxu0 0.0
    %1726 = vmatprep.subr.mxu0 0.0
    %1727 = vmatpush1.msra.mxu0 0.0
    %1728 = vmatprep.subr.mxu0 0.0
    %1729 = vmatpush1.msra.mxu0 0.0
    %1730 = vmatprep.subr.mxu0 0.0
    %1731 = vmatpush1.msra.mxu0 0.0
    %1732 = vmatprep.subr.mxu0 0.0
    %1733 = vmatpush1.msra.mxu0 0.0
    %1734 = vmatprep.subr.mxu0 0.0
    %1735 = vmatpush1.msra.mxu0 0.0
    %1736 = vmatprep.subr.mxu0 0.0
    %1737 = vmatpush1.msra.mxu0 0.0
    %1738 = vmatprep.subr.mxu0 0.0
    %1739 = vmatpush1.msra.mxu0 0.0
    %1740 = vmatprep.subr.mxu0 0.0
    %1741 = vmatpush1.msra.mxu0 0.0
    %1742 = vmatprep.subr.mxu0 0.0
    %1743 = vmatpush1.msra.mxu0 0.0
    %1744 = vmatprep.subr.mxu0 0.0
    %1745 = vmatpush1.msra.mxu0 0.0
    %1746 = vmatprep.subr.mxu0 0.0
    %1747 = vmatpush1.msra.mxu0 0.0
    %1748 = vmatprep.subr.mxu0 0.0
    %1749 = vmatpush1.msra.mxu0 0.0
    %1750 = vmatprep.subr.mxu0 0.0
    %1751 = vmatpush1.msra.mxu0 0.0
    %1752 = vmatprep.subr.mxu0 0.0
    %1753 = vmatpush1.msra.mxu0 0.0
    %1754 = vmatprep.subr.mxu0 0.0
    %1755 = vmatpush1.msra.mxu0 0.0
    %1756 = vmatprep.subr.mxu0 0.0
    %1757 = vmatpush1.msra.mxu0 0.0
    %1758 = vmatprep.subr.mxu0 0.0
    %1759 = vmatpush1.msra.mxu0 0.0
    %1760 = vmatprep.subr.mxu0 0.0
    %1761 = vmatpush1.msra.mxu0 0.0
    %1762 = vmatprep.subr.mxu0 0.0
    %1763 = vmatpush1.msra.mxu0 0.0
    %1764 = vmatprep.subr.mxu0 0.0
    %1765 = vmatpush1.msra.mxu0 0.0
    %1766 = vmatprep.mubr.f32.mxu0 0.0
    %1767 = vmatmul.mubr.f32.gmra.mrb[0].mxu0 %v1700
    %v1768 = vpop.f32.mrb[0].mxu0
    %v1769 = vadd.f32 0.0, %v1768
    %v1770 = vpop.f32.mrb[0].mxu0
    %1771 = vdwg.mxu0
    %1774 = vrot.lane.b32.xlu0 %v1033, 8
    %v1775 = vpop.permute.xlu0 %1774
    %1776 = vrot.lane.b32.xlu0 %v1109, 8
    %v1777 = vpop.permute.xlu0 %1776
    %1782 = vrot.lane.b32.xlu0 %v1363, 16
    %v1783 = vpop.permute.xlu0 %1782
    %1784 = vrot.lane.b32.xlu0 %v1439, 16
    %v1785 = vpop.permute.xlu0 %1784
    %1790 = vrot.lane.b32.xlu0 %v1693, 24
    %v1791 = vpop.permute.xlu0 %1790
    %1792 = vrot.lane.b32.xlu0 %v1769, 24
    %v1793 = vpop.permute.xlu0 %1792
    %v1796 = vsel %vm456, %v703, %v1775
    %v1797 = vsel %vm456, %v779, %v1777
    %vm1798 = vcmask 130048
    %v1799 = vsel %vm1798, %v1796, %v1783
    %v1800 = vsel %vm1798, %v1797, %v1785
    %vm1801 = vcmask 195584
    %v1802 = vsel %vm1801, %v1799, %v1791
    %v1803 = vsel %vm1801, %v1800, %v1793
    %v1804 = vld [vmem:[%s8] sm:$0xff]
    %v1805 = vld [vmem:[%s8 + $0x8] sm:$0xff]
    %v1806 = vld [vmem:[%s8 + $0x10] sm:$0xff]
    %v1807 = vld [vmem:[%s8 + $0x18] sm:$0xff]
    %v1808 = vld [vmem:[%s9] sm:$0x1]
    %v1810 = vlaneseq
    %v1811 = vshrl.u32 %v1810, 7
    %v1812 = vsub.s32 0, %v1811
    %v1813 = vrot.slane %v1808, %v1812
    %v1816 = vsel %vm371, %v1802, 0
    %v1819 = vsel %vm371, %v1803, 0
    %1821 = vmatprep.subr.mxu0 0.0
    %1822 = vmatpush1.msra.mxu0 %v1804
    %1823 = vmatprep.subr.mxu0 0.0
    %1824 = vmatpush1.msra.mxu0 %v1805
    %1825 = vmatprep.subr.mxu0 0.0
    %1826 = vmatpush1.msra.mxu0 %v1806
    %1827 = vmatprep.subr.mxu0 0.0
    %1828 = vmatpush1.msra.mxu0 %v1807
    %1829 = vmatprep.subr.mxu0 0.0
    %1830 = vmatpush1.msra.mxu0 0.0
    %1831 = vmatprep.subr.mxu0 0.0
    %1832 = vmatpush1.msra.mxu0 0.0
    %1833 = vmatprep.subr.mxu0 0.0
    %1834 = vmatpush1.msra.mxu0 0.0
    %1835 = vmatprep.subr.mxu0 0.0
    %1836 = vmatpush1.msra.mxu0 0.0
    %1837 = vmatprep.subr.mxu0 0.0
    %1838 = vmatpush1.msra.mxu0 0.0
    %1839 = vmatprep.subr.mxu0 0.0
    %1840 = vmatpush1.msra.mxu0 0.0
    %1841 = vmatprep.subr.mxu0 0.0
    %1842 = vmatpush1.msra.mxu0 0.0
    %1843 = vmatprep.subr.mxu0 0.0
    %1844 = vmatpush1.msra.mxu0 0.0
    %1845 = vmatprep.subr.mxu0 0.0
    %1846 = vmatpush1.msra.mxu0 0.0
    %1847 = vmatprep.subr.mxu0 0.0
    %1848 = vmatpush1.msra.mxu0 0.0
    %1849 = vmatprep.subr.mxu0 0.0
    %1850 = vmatpush1.msra.mxu0 0.0
    %1851 = vmatprep.subr.mxu0 0.0
    %1852 = vmatpush1.msra.mxu0 0.0
    %1853 = vmatprep.subr.mxu0 0.0
    %1854 = vmatpush1.msra.mxu0 0.0
    %1855 = vmatprep.subr.mxu0 0.0
    %1856 = vmatpush1.msra.mxu0 0.0
    %1857 = vmatprep.subr.mxu0 0.0
    %1858 = vmatpush1.msra.mxu0 0.0
    %1859 = vmatprep.subr.mxu0 0.0
    %1860 = vmatpush1.msra.mxu0 0.0
    %1861 = vmatprep.subr.mxu0 0.0
    %1862 = vmatpush1.msra.mxu0 0.0
    %1863 = vmatprep.subr.mxu0 0.0
    %1864 = vmatpush1.msra.mxu0 0.0
    %1865 = vmatprep.subr.mxu0 0.0
    %1866 = vmatpush1.msra.mxu0 0.0
    %1867 = vmatprep.subr.mxu0 0.0
    %1868 = vmatpush1.msra.mxu0 0.0
    %1869 = vmatprep.subr.mxu0 0.0
    %1870 = vmatpush1.msra.mxu0 0.0
    %1871 = vmatprep.subr.mxu0 0.0
    %1872 = vmatpush1.msra.mxu0 0.0
    %1873 = vmatprep.subr.mxu0 0.0
    %1874 = vmatpush1.msra.mxu0 0.0
    %1875 = vmatprep.subr.mxu0 0.0
    %1876 = vmatpush1.msra.mxu0 0.0
    %1877 = vmatprep.subr.mxu0 0.0
    %1878 = vmatpush1.msra.mxu0 0.0
    %1879 = vmatprep.subr.mxu0 0.0
    %1880 = vmatpush1.msra.mxu0 0.0
    %1881 = vmatprep.subr.mxu0 0.0
    %1882 = vmatpush1.msra.mxu0 0.0
    %1883 = vmatprep.subr.mxu0 0.0
    %1884 = vmatpush1.msra.mxu0 0.0
    %1885 = vmatprep.mubr.f32.mxu0 0.0
    %1886 = vmatmul.mubr.f32.gmra.mrb[0].mxu0 %v1816
    %v1887 = vpop.f32.mrb[0].mxu0
    %v1888 = vadd.f32 %v1813, %v1887
    %v1889 = vpop.f32.mrb[0].mxu0
    %1890 = vmatprep.mubr.f32.mxu0 0.0
    %1891 = vmatmul.mubr.f32.gmra.mrb[0].mxu0 %v1819
    %v1892 = vpop.f32.mrb[0].mxu0
    %v1893 = vadd.f32 %v1813, %v1892
    %v1894 = vpop.f32.mrb[0].mxu0
    %1895 = vdwg.mxu0
    %v1896 = vadd.f32 %v317, %v1888
    %v1897 = vadd.f32 %v318, %v1893
    %v1898 = vld [vmem:[%s10] sm:$0x1]
    %v1899 = vld [vmem:[%s11] sm:$0x1]
    %v1900 = vsel %vm371, %v1896, 0.0
    %1901 = vadd.xlane.f32.xlu0 %v1900
    %v1902 = vpop.xlane.xlu0 %1901
    %v1903 = vsel %vm371, %v1897, 0.0
    %1904 = vadd.xlane.f32.xlu0 %v1903
    %v1905 = vpop.xlane.xlu0 %1904
    %v1906 = vrcp.pop 32.0
    %v1907 = vmul.f32 %v1902, %v1906
    %v1908 = vmul.f32 %v1905, %v1906
    %v1909 = vsub.f32 %v1896, %v1907
    %v1910 = vsub.f32 %v1897, %v1908
    %v1911 = vmul.f32 %v1909, %v1909
    %v1912 = vmul.f32 %v1910, %v1910
    %v1913 = vsel %vm371, %v1911, 0.0
    %1914 = vadd.xlane.f32.xlu0 %v1913
    %v1915 = vpop.xlane.xlu0 %1914
    %v1916 = vsel %vm371, %v1912, 0.0
    %1917 = vadd.xlane.f32.xlu0 %v1916
    %v1918 = vpop.xlane.xlu0 %1917
    %v1919 = vmul.f32 %v1915, %v1906
    %v1920 = vmul.f32 %v1918, %v1906
    %v1921 = vadd.f32 %v1919, 1e-05
    %v1922 = vadd.f32 %v1920, 1e-05
    %v1923 = vrsqrt.pop %v1921
    %v1924 = vrsqrt.pop %v1922
    %v1925 = vmul.f32 %v1909, %v1923
    %v1926 = vmul.f32 %v1910, %v1924
    %v1928 = vlaneseq
    %v1929 = vshrl.u32 %v1928, 7
    %v1930 = vsub.s32 0, %v1929
    %v1931 = vrot.slane %v1898, %v1930
    %v1933 = vmul.f32 %v1925, %v1931
    %v1934 = vmul.f32 %v1926, %v1931
    %v1936 = vlaneseq
    %v1937 = vshrl.u32 %v1936, 7
    %v1938 = vsub.s32 0, %v1937
    %v1939 = vrot.slane %v1899, %v1938
    %v1941 = vadd.f32 %v1933, %v1939
    %v1942 = vadd.f32 %v1934, %v1939
    %v1943 = vld [vmem:[%s12] sm:$0xff]
    %v1944 = vld [vmem:[%s12 + $0x8] sm:$0xff]
    %v1945 = vld [vmem:[%s12 + $0x10] sm:$0xff]
    %v1946 = vld [vmem:[%s12 + $0x18] sm:$0xff]
    %v1947 = vld [vmem:[#allocation5] sm:$0x1]
    %v1949 = vlaneseq
    %v1950 = vshrl.u32 %v1949, 7
    %v1951 = vsub.s32 0, %v1950
    %v1952 = vrot.slane %v1947, %v1951
    %v1955 = vsel %vm371, %v1941, 0
    %v1958 = vsel %vm371, %v1942, 0
    %1960 = vmatprep.subr.mxu0 0.0
    %1961 = vmatpush1.msra.mxu0 %v1943
    %1962 = vmatprep.subr.mxu0 0.0
    %1963 = vmatpush1.msra.mxu0 %v1944
    %1964 = vmatprep.subr.mxu0 0.0
    %1965 = vmatpush1.msra.mxu0 %v1945
    %1966 = vmatprep.subr.mxu0 0.0
    %1967 = vmatpush1.msra.mxu0 %v1946
    %1968 = vmatprep.subr.mxu0 0.0
    %1969 = vmatpush1.msra.mxu0 0.0
    %1970 = vmatprep.subr.mxu0 0.0
    %1971 = vmatpush1.msra.mxu0 0.0
    %1972 = vmatprep.subr.mxu0 0.0
    %1973 = vmatpush1.msra.mxu0 0.0
    %1974 = vmatprep.subr.mxu0 0.0
    %1975 = vmatpush1.msra.mxu0 0.0
    %1976 = vmatprep.subr.mxu0 0.0
    %1977 = vmatpush1.msra.mxu0 0.0
    %1978 = vmatprep.subr.mxu0 0.0
    %1979 = vmatpush1.msra.mxu0 0.0
    %1980 = vmatprep.subr.mxu0 0.0
    %1981 = vmatpush1.msra.mxu0 0.0
    %1982 = vmatprep.subr.mxu0 0.0
    %1983 = vmatpush1.msra.mxu0 0.0
    %1984 = vmatprep.subr.mxu0 0.0
    %1985 = vmatpush1.msra.mxu0 0.0
    %1986 = vmatprep.subr.mxu0 0.0
    %1987 = vmatpush1.msra.mxu0 0.0
    %1988 = vmatprep.subr.mxu0 0.0
    %1989 = vmatpush1.msra.mxu0 0.0
    %1990 = vmatprep.subr.mxu0 0.0
    %1991 = vmatpush1.msra.mxu0 0.0
    %1992 = vmatprep.subr.mxu0 0.0
    %1993 = vmatpush1.msra.mxu0 0.0
    %1994 = vmatprep.subr.mxu0 0.0
    %1995 = vmatpush1.msra.mxu0 0.0
    %1996 = vmatprep.subr.mxu0 0.0
    %1997 = vmatpush1.msra.mxu0 0.0
    %1998 = vmatprep.subr.mxu0 0.0
    %1999 = vmatpush1.msra.mxu0 0.0
    %2000 = vmatprep.subr.mxu0 0.0
    %2001 = vmatpush1.msra.mxu0 0.0
    %2002 = vmatprep.subr.mxu0 0.0
    %2003 = vmatpush1.msra.mxu0 0.0
    %2004 = vmatprep.subr.mxu0 0.0
    %2005 = vmatpush1.msra.mxu0 0.0
    %2006 = vmatprep.subr.mxu0 0.0
    %2007 = vmatpush1.msra.mxu0 0.0
    %2008 = vmatprep.subr.mxu0 0.0
    %2009 = vmatpush1.msra.mxu0 0.0
    %2010 = vmatprep.subr.mxu0 0.0
    %2011 = vmatpush1.msra.mxu0 0.0
    %2012 = vmatprep.subr.mxu0 0.0
    %2013 = vmatpush1.msra.mxu0 0.0
    %2014 = vmatprep.subr.mxu0 0.0
    %2015 = vmatpush1.msra.mxu0 0.0
    %2016 = vmatprep.subr.mxu0 0.0
    %2017 = vmatpush1.msra.mxu0 0.0
    %2018 = vmatprep.subr.mxu0 0.0
    %2019 = vmatpush1.msra.mxu0 0.0
    %2020 = vmatprep.subr.mxu0 0.0
    %2021 = vmatpush1.msra.mxu0 0.0
    %2022 = vmatprep.subr.mxu0 0.0
    %2023 = vmatpush1.msra.mxu0 0.0
    %2024 = vmatprep.mubr.f32.mxu0 0.0
    %2025 = vmatmul.mubr.f32.gmra.mrb[0].mxu0 %v1955
    %v2026 = vpop.f32.mrb[0].mxu0
    %v2027 = vadd.f32 %v1952, %v2026
    %v2028 = vpop.f32.mrb[0].mxu0
    %2029 = vmatprep.mubr.f32.mxu0 0.0
    %2030 = vmatmul.mubr.f32.gmra.mrb[0].mxu0 %v1958
    %v2031 = vpop.f32.mrb[0].mxu0
    %v2032 = vadd.f32 %v1952, %v2031
    %v2033 = vpop.f32.mrb[0].mxu0
    %2034 = vdwg.mxu0
    %v2035 = vmax.f32 %v2027, 0.0
    %v2036 = vmax.f32 %v2032, 0.0
    %v2037 = vld [vmem:[%s14] sm:$0xff]
    %v2038 = vld [vmem:[%s14 + $0x8] sm:$0xff]
    %v2039 = vld [vmem:[%s14 + $0x10] sm:$0xff]
    %v2040 = vld [vmem:[%s14 + $0x18] sm:$0xff]
    %v2041 = vld [vmem:[%s14 + $0x20] sm:$0xff]
    %v2042 = vld [vmem:[%s14 + $0x28] sm:$0xff]
    %v2043 = vld [vmem:[%s14 + $0x30] sm:$0xff]
    %v2044 = vld [vmem:[%s14 + $0x38] sm:$0xff]
    %v2045 = vld [vmem:[%s15] sm:$0x1]
    %v2047 = vlaneseq
    %v2048 = vshrl.u32 %v2047, 7
    %v2049 = vsub.s32 0, %v2048
    %v2050 = vrot.slane %v2045, %v2049
    %vm2052 = vcmask 523264
    %v2054 = vsel %vm2052, %v2035, 0
    %v2057 = vsel %vm2052, %v2036, 0
    %2059 = vmatprep.subr.mxu0 0.0
    %2060 = vmatpush1.msra.mxu0 %v2037
    %2061 = vmatprep.subr.mxu0 0.0
    %2062 = vmatpush1.msra.mxu0 %v2038
    %2063 = vmatprep.subr.mxu0 0.0
    %2064 = vmatpush1.msra.mxu0 %v2039
    %2065 = vmatprep.subr.mxu0 0.0
    %2066 = vmatpush1.msra.mxu0 %v2040
    %2067 = vmatprep.subr.mxu0 0.0
    %2068 = vmatpush1.msra.mxu0 %v2041
    %2069 = vmatprep.subr.mxu0 0.0
    %2070 = vmatpush1.msra.mxu0 %v2042
    %2071 = vmatprep.subr.mxu0 0.0
    %2072 = vmatpush1.msra.mxu0 %v2043
    %2073 = vmatprep.subr.mxu0 0.0
    %2074 = vmatpush1.msra.mxu0 %v2044
    %2075 = vmatprep.subr.mxu0 0.0
    %2076 = vmatpush1.msra.mxu0 0.0
    %2077 = vmatprep.subr.mxu0 0.0
    %2078 = vmatpush1.msra.mxu0 0.0
    %2079 = vmatprep.subr.mxu0 0.0
    %2080 = vmatpush1.msra.mxu0 0.0
    %2081 = vmatprep.subr.mxu0 0.0
    %2082 = vmatpush1.msra.mxu0 0.0
    %2083 = vmatprep.subr.mxu0 0.0
    %2084 = vmatpush1.msra.mxu0 0.0
    %2085 = vmatprep.subr.mxu0 0.0
    %2086 = vmatpush1.msra.mxu0 0.0
    %2087 = vmatprep.subr.mxu0 0.0
    %2088 = vmatpush1.msra.mxu0 0.0
    %2089 = vmatprep.subr.mxu0 0.0
    %2090 = vmatpush1.msra.mxu0 0.0
    %2091 = vmatprep.subr.mxu0 0.0
    %2092 = vmatpush1.msra.mxu0 0.0
    %2093 = vmatprep.subr.mxu0 0.0
    %2094 = vmatpush1.msra.mxu0 0.0
    %2095 = vmatprep.subr.mxu0 0.0
    %2096 = vmatpush1.msra.mxu0 0.0
    %2097 = vmatprep.subr.mxu0 0.0
    %2098 = vmatpush1.msra.mxu0 0.0
    %2099 = vmatprep.subr.mxu0 0.0
    %2100 = vmatpush1.msra.mxu0 0.0
    %2101 = vmatprep.subr.mxu0 0.0
    %2102 = vmatpush1.msra.mxu0 0.0
    %2103 = vmatprep.subr.mxu0 0.0
    %2104 = vmatpush1.msra.mxu0 0.0
    %2105 = vmatprep.subr.mxu0 0.0
    %2106 = vmatpush1.msra.mxu0 0.0
    %2107 = vmatprep.subr.mxu0 0.0
    %2108 = vmatpush1.msra.mxu0 0.0
    %2109 = vmatprep.subr.mxu0 0.0
    %2110 = vmatpush1.msra.mxu0 0.0
    %2111 = vmatprep.subr.mxu0 0.0
    %2112 = vmatpush1.msra.mxu0 0.0
    %2113 = vmatprep.subr.mxu0 0.0
    %2114 = vmatpush1.msra.mxu0 0.0
    %2115 = vmatprep.subr.mxu0 0.0
    %2116 = vmatpush1.msra.mxu0 0.0
    %2117 = vmatprep.subr.mxu0 0.0
    %2118 = vmatpush1.msra.mxu0 0.0
    %2119 = vmatprep.subr.mxu0 0.0
    %2120 = vmatpush1.msra.mxu0 0.0
    %2121 = vmatprep.subr.mxu0 0.0
    %2122 = vmatpush1.msra.mxu0 0.0
    %2123 = vmatprep.mubr.f32.mxu0 0.0
    %2124 = vmatmul.mubr.f32.gmra.mrb[0].mxu0 %v2054
    %v2125 = vpop.f32.mrb[0].mxu0
    %v2126 = vadd.f32 %v2050, %v2125
    %v2127 = vpop.f32.mrb[0].mxu0
    %2128 = vmatprep.mubr.f32.mxu0 0.0
    %2129 = vmatmul.mubr.f32.gmra.mrb[0].mxu0 %v2057
    %v2130 = vpop.f32.mrb[0].mxu0
    %v2131 = vadd.f32 %v2050, %v2130
    %v2132 = vpop.f32.mrb[0].mxu0
    %2133 = vdwg.mxu0
    %v2134 = vadd.f32 %v1941, %v2126
    %v2135 = vadd.f32 %v1942, %v2131
    %v2136 = vld [vmem:[%s16] sm:$0x1]
    %v2137 = vld [vmem:[%s17] sm:$0x1]
    %v2138 = vsel %vm371, %v2134, 0.0
    %2139 = vadd.xlane.f32.xlu0 %v2138
    %v2140 = vpop.xlane.xlu0 %2139
    %v2141 = vsel %vm371, %v2135, 0.0
    %2142 = vadd.xlane.f32.xlu0 %v2141
    %v2143 = vpop.xlane.xlu0 %2142
    %v2144 = vmul.f32 %v2140, %v1906
    %v2145 = vmul.f32 %v2143, %v1906
    %v2146 = vsub.f32 %v2134, %v2144
    %v2147 = vsub.f32 %v2135, %v2145
    %v2148 = vmul.f32 %v2146, %v2146
    %v2149 = vmul.f32 %v2147, %v2147
    %v2150 = vsel %vm371, %v2148, 0.0
    %2151 = vadd.xlane.f32.xlu0 %v2150
    %v2152 = vpop.xlane.xlu0 %2151
    %v2153 = vsel %vm371, %v2149, 0.0
    %2154 = vadd.xlane.f32.xlu0 %v2153
    %v2155 = vpop.xlane.xlu0 %2154
    %v2156 = vmul.f32 %v2152, %v1906
    %v2157 = vmul.f32 %v2155, %v1906
    %v2158 = vadd.f32 %v2156, 1e-05
    %v2159 = vadd.f32 %v2157, 1e-05
    %v2160 = vrsqrt.pop %v2158
    %v2161 = vrsqrt.pop %v2159
    %v2162 = vmul.f32 %v2146, %v2160
    %v2163 = vmul.f32 %v2147, %v2161
    %v2165 = vlaneseq
    %v2166 = vshrl.u32 %v2165, 7
    %v2167 = vsub.s32 0, %v2166
    %v2168 = vrot.slane %v2136, %v2167
    %v2170 = vmul.f32 %v2162, %v2168
    %v2171 = vmul.f32 %v2163, %v2168
    %v2173 = vlaneseq
    %v2174 = vshrl.u32 %v2173, 7
    %v2175 = vsub.s32 0, %v2174
    %v2176 = vrot.slane %v2137, %v2175
    %v2178 = vadd.f32 %v2170, %v2176
    %v2179 = vadd.f32 %v2171, %v2176
    %s2180 = scalar_lea.vmem %s6, 32
    %v2181 = vld [vmem:[%s2180] sm:$0xff]
    %v2182 = vld [vmem:[%s2180 + $0x8] sm:$0xff]
    %v2183 = vld [vmem:[%s2180 + $0x10] sm:$0xff]
    %v2184 = vld [vmem:[%s2180 + $0x18] sm:$0xff]
    %s2185 = scalar_lea.vmem %s7, 1
    %v2186 = vld [vmem:[%s2185] sm:$0x1]
    %v2188 = vlaneseq
    %v2189 = vshrl.u32 %v2188, 7
    %v2190 = vsub.s32 0, %v2189
    %v2191 = vrot.slane %v2186, %v2190
    %v2194 = vsel %vm371, %v2178, 0
    %v2197 = vsel %vm371, %v2179, 0
    %2199 = vmatprep.subr.mxu0 0.0
    %2200 = vmatpush1.msra.mxu0 %v2181
    %2201 = vmatprep.subr.mxu0 0.0
    %2202 = vmatpush1.msra.mxu0 %v2182
    %2203 = vmatprep.subr.mxu0 0.0
    %2204 = vmatpush1.msra.mxu0 %v2183
    %2205 = vmatprep.subr.mxu0 0.0
    %2206 = vmatpush1.msra.mxu0 %v2184
    %2207 = vmatprep.subr.mxu0 0.0
    %2208 = vmatpush1.msra.mxu0 0.0
    %2209 = vmatprep.subr.mxu0 0.0
    %2210 = vmatpush1.msra.mxu0 0.0
    %2211 = vmatprep.subr.mxu0 0.0
    %2212 = vmatpush1.msra.mxu0 0.0
    %2213 = vmatprep.subr.mxu0 0.0
    %2214 = vmatpush1.msra.mxu0 0.0
    %2215 = vmatprep.subr.mxu0 0.0
    %2216 = vmatpush1.msra.mxu0 0.0
    %2217 = vmatprep.subr.mxu0 0.0
    %2218 = vmatpush1.msra.mxu0 0.0
    %2219 = vmatprep.subr.mxu0 0.0
    %2220 = vmatpush1.msra.mxu0 0.0
    %2221 = vmatprep.subr.mxu0 0.0
    %2222 = vmatpush1.msra.mxu0 0.0
    %2223 = vmatprep.subr.mxu0 0.0
    %2224 = vmatpush1.msra.mxu0 0.0
    %2225 = vmatprep.subr.mxu0 0.0
    %2226 = vmatpush1.msra.mxu0 0.0
    %2227 = vmatprep.subr.mxu0 0.0
    %2228 = vmatpush1.msra.mxu0 0.0
    %2229 = vmatprep.subr.mxu0 0.0
    %2230 = vmatpush1.msra.mxu0 0.0
    %2231 = vmatprep.subr.mxu0 0.0
    %2232 = vmatpush1.msra.mxu0 0.0
    %2233 = vmatprep.subr.mxu0 0.0
    %2234 = vmatpush1.msra.mxu0 0.0
    %2235 = vmatprep.subr.mxu0 0.0
    %2236 = vmatpush1.msra.mxu0 0.0
    %2237 = vmatprep.subr.mxu0 0.0
    %2238 = vmatpush1.msra.mxu0 0.0
    %2239 = vmatprep.subr.mxu0 0.0
    %2240 = vmatpush1.msra.mxu0 0.0
    %2241 = vmatprep.subr.mxu0 0.0
    %2242 = vmatpush1.msra.mxu0 0.0
    %2243 = vmatprep.subr.mxu0 0.0
    %2244 = vmatpush1.msra.mxu0 0.0
    %2245 = vmatprep.subr.mxu0 0.0
    %2246 = vmatpush1.msra.mxu0 0.0
    %2247 = vmatprep.subr.mxu0 0.0
    %2248 = vmatpush1.msra.mxu0 0.0
    %2249 = vmatprep.subr.mxu0 0.0
    %2250 = vmatpush1.msra.mxu0 0.0
    %2251 = vmatprep.subr.mxu0 0.0
    %2252 = vmatpush1.msra.mxu0 0.0
    %2253 = vmatprep.subr.mxu0 0.0
    %2254 = vmatpush1.msra.mxu0 0.0
    %2255 = vmatprep.subr.mxu0 0.0
    %2256 = vmatpush1.msra.mxu0 0.0
    %2257 = vmatprep.subr.mxu0 0.0
    %2258 = vmatpush1.msra.mxu0 0.0
    %2259 = vmatprep.subr.mxu0 0.0
    %2260 = vmatpush1.msra.mxu0 0.0
    %2261 = vmatprep.subr.mxu0 0.0
    %2262 = vmatpush1.msra.mxu0 0.0
    %2263 = vmatprep.mubr.f32.mxu0 0.0
    %2264 = vmatmul.mubr.f32.gmra.mrb[0].mxu0 %v2194
    %v2265 = vpop.f32.mrb[0].mxu0
    %v2266 = vadd.f32 %v2191, %v2265
    %v2267 = vpop.f32.mrb[0].mxu0
    %2268 = vmatprep.mubr.f32.mxu0 0.0
    %2269 = vmatmul.mubr.f32.gmra.mrb[0].mxu0 %v2197
    %v2270 = vpop.f32.mrb[0].mxu0
    %v2271 = vadd.f32 %v2191, %v2270
    %v2272 = vpop.f32.mrb[0].mxu0
    %2273 = vdwg.mxu0
    %2275 = vrot.lane.b32.xlu0 %v2266, 96
    %v2276 = vpop.permute.xlu0 %2275
    %v2277 = vsel %vm456, %v2266, 0
    %v2279 = vsel %vm456, %v2276, 0
    %2281 = vmatprep.subr.mxu0 0.0
    %2282 = vmatpush1.xpose.msra.mxu0 %v2279
    %2283 = vmatprep.subr.mxu0 0.0
    %2284 = vmatpush1.xpose.msra.mxu0 0.0
    %2285 = vmatprep.subr.mxu0 0.0
    %2286 = vmatpush1.xpose.msra.mxu0 0.0
    %2287 = vmatprep.subr.mxu0 0.0
    %2288 = vmatpush1.xpose.msra.mxu0 0.0
    %2289 = vmatprep.subr.mxu0 0.0
    %2290 = vmatpush1.xpose.msra.mxu0 0.0
    %2291 = vmatprep.subr.mxu0 0.0
    %2292 = vmatpush1.xpose.msra.mxu0 0.0
    %2293 = vmatprep.subr.mxu0 0.0
    %2294 = vmatpush1.xpose.msra.mxu0 0.0
    %2295 = vmatprep.subr.mxu0 0.0
    %2296 = vmatpush1.xpose.msra.mxu0 0.0
    %2297 = vmatprep.subr.mxu0 0.0
    %2298 = vmatpush1.xpose.msra.mxu0 0.0
    %2299 = vmatprep.subr.mxu0 0.0
    %2300 = vmatpush1.xpose.msra.mxu0 0.0
    %2301 = vmatprep.subr.mxu0 0.0
    %2302 = vmatpush1.xpose.msra.mxu0 0.0
    %2303 = vmatprep.subr.mxu0 0.0
    %2304 = vmatpush1.xpose.msra.mxu0 0.0
    %2305 = vmatprep.subr.mxu0 0.0
    %2306 = vmatpush1.xpose.msra.mxu0 0.0
    %2307 = vmatprep.subr.mxu0 0.0
    %2308 = vmatpush1.xpose.msra.mxu0 0.0
    %2309 = vmatprep.subr.mxu0 0.0
    %2310 = vmatpush1.xpose.msra.mxu0 0.0
    %2311 = vmatprep.subr.mxu0 0.0
    %2312 = vmatpush1.xpose.msra.mxu0 0.0
    %2313 = vmatprep.subr.mxu0 0.0
    %2314 = vmatpush1.xpose.msra.mxu0 0.0
    %2315 = vmatprep.subr.mxu0 0.0
    %2316 = vmatpush1.xpose.msra.mxu0 0.0
    %2317 = vmatprep.subr.mxu0 0.0
    %2318 = vmatpush1.xpose.msra.mxu0 0.0
    %2319 = vmatprep.subr.mxu0 0.0
    %2320 = vmatpush1.xpose.msra.mxu0 0.0
    %2321 = vmatprep.subr.mxu0 0.0
    %2322 = vmatpush1.xpose.msra.mxu0 0.0
    %2323 = vmatprep.subr.mxu0 0.0
    %2324 = vmatpush1.xpose.msra.mxu0 0.0
    %2325 = vmatprep.subr.mxu0 0.0
    %2326 = vmatpush1.xpose.msra.mxu0 0.0
    %2327 = vmatprep.subr.mxu0 0.0
    %2328 = vmatpush1.xpose.msra.mxu0 0.0
    %2329 = vmatprep.subr.mxu0 0.0
    %2330 = vmatpush1.xpose.msra.mxu0 0.0
    %2331 = vmatprep.subr.mxu0 0.0
    %2332 = vmatpush1.xpose.msra.mxu0 0.0
    %2333 = vmatprep.subr.mxu0 0.0
    %2334 = vmatpush1.xpose.msra.mxu0 0.0
    %2335 = vmatprep.subr.mxu0 0.0
    %2336 = vmatpush1.xpose.msra.mxu0 0.0
    %2337 = vmatprep.subr.mxu0 0.0
    %2338 = vmatpush1.xpose.msra.mxu0 0.0
    %2339 = vmatprep.subr.mxu0 0.0
    %2340 = vmatpush1.xpose.msra.mxu0 0.0
    %2341 = vmatprep.subr.mxu0 0.0
    %2342 = vmatpush1.xpose.msra.mxu0 0.0
    %2343 = vmatprep.subr.mxu0 0.0
    %2344 = vmatpush1.xpose.msra.mxu0 0.0
    %2345 = vmatprep.mubr.f32.mxu0 0.0
    %2346 = vmatmul.mubr.f32.gmra.mrb[0].mxu0 %v2277
    %v2347 = vpop.f32.mrb[0].mxu0
    %v2348 = vadd.f32 %v358, %v2347
    %v2349 = vpop.f32.mrb[0].mxu0
    %2350 = vdwg.mxu0
    %2352 = vrot.lane.b32.xlu0 %v2271, 96
    %v2353 = vpop.permute.xlu0 %2352
    %v2354 = vsel %vm456, %v2271, 0
    %v2356 = vsel %vm456, %v2353, 0
    %2358 = vmatprep.subr.mxu0 0.0
    %2359 = vmatpush1.xpose.msra.mxu0 %v2356
    %2360 = vmatprep.subr.mxu0 0.0
    %2361 = vmatpush1.xpose.msra.mxu0 0.0
    %2362 = vmatprep.subr.mxu0 0.0
    %2363 = vmatpush1.xpose.msra.mxu0 0.0
    %2364 = vmatprep.subr.mxu0 0.0
    %2365 = vmatpush1.xpose.msra.mxu0 0.0
    %2366 = vmatprep.subr.mxu0 0.0
    %2367 = vmatpush1.xpose.msra.mxu0 0.0
    %2368 = vmatprep.subr.mxu0 0.0
    %2369 = vmatpush1.xpose.msra.mxu0 0.0
    %2370 = vmatprep.subr.mxu0 0.0
    %2371 = vmatpush1.xpose.msra.mxu0 0.0
    %2372 = vmatprep.subr.mxu0 0.0
    %2373 = vmatpush1.xpose.msra.mxu0 0.0
    %2374 = vmatprep.subr.mxu0 0.0
    %2375 = vmatpush1.xpose.msra.mxu0 0.0
    %2376 = vmatprep.subr.mxu0 0.0
    %2377 = vmatpush1.xpose.msra.mxu0 0.0
    %2378 = vmatprep.subr.mxu0 0.0
    %2379 = vmatpush1.xpose.msra.mxu0 0.0
    %2380 = vmatprep.subr.mxu0 0.0
    %2381 = vmatpush1.xpose.msra.mxu0 0.0
    %2382 = vmatprep.subr.mxu0 0.0
    %2383 = vmatpush1.xpose.msra.mxu0 0.0
    %2384 = vmatprep.subr.mxu0 0.0
    %2385 = vmatpush1.xpose.msra.mxu0 0.0
    %2386 = vmatprep.subr.mxu0 0.0
    %2387 = vmatpush1.xpose.msra.mxu0 0.0
    %2388 = vmatprep.subr.mxu0 0.0
    %2389 = vmatpush1.xpose.msra.mxu0 0.0
    %2390 = vmatprep.subr.mxu0 0.0
    %2391 = vmatpush1.xpose.msra.mxu0 0.0
    %2392 = vmatprep.subr.mxu0 0.0
    %2393 = vmatpush1.xpose.msra.mxu0 0.0
    %2394 = vmatprep.subr.mxu0 0.0
    %2395 = vmatpush1.xpose.msra.mxu0 0.0
    %2396 = vmatprep.subr.mxu0 0.0
    %2397 = vmatpush1.xpose.msra.mxu0 0.0
    %2398 = vmatprep.subr.mxu0 0.0
    %2399 = vmatpush1.xpose.msra.mxu0 0.0
    %2400 = vmatprep.subr.mxu0 0.0
    %2401 = vmatpush1.xpose.msra.mxu0 0.0
    %2402 = vmatprep.subr.mxu0 0.0
    %2403 = vmatpush1.xpose.msra.mxu0 0.0
    %2404 = vmatprep.subr.mxu0 0.0
    %2405 = vmatpush1.xpose.msra.mxu0 0.0
    %2406 = vmatprep.subr.mxu0 0.0
    %2407 = vmatpush1.xpose.msra.mxu0 0.0
    %2408 = vmatprep.subr.mxu0 0.0
    %2409 = vmatpush1.xpose.msra.mxu0 0.0
    %2410 = vmatprep.subr.mxu0 0.0
    %2411 = vmatpush1.xpose.msra.mxu0 0.0
    %2412 = vmatprep.subr.mxu0 0.0
    %2413 = vmatpush1.xpose.msra.mxu0 0.0
    %2414 = vmatprep.subr.mxu0 0.0
    %2415 = vmatpush1.xpose.msra.mxu0 0.0
    %2416 = vmatprep.subr.mxu0 0.0
    %2417 = vmatpush1.xpose.msra.mxu0 0.0
    %2418 = vmatprep.subr.mxu0 0.0
    %2419 = vmatpush1.xpose.msra.mxu0 0.0
    %2420 = vmatprep.subr.mxu0 0.0
    %2421 = vmatpush1.xpose.msra.mxu0 0.0
    %2422 = vmatprep.mubr.f32.mxu0 0.0
    %2423 = vmatmul.mubr.f32.gmra.mrb[0].mxu0 %v2354
    %v2424 = vpop.f32.mrb[0].mxu0
    %v2425 = vadd.f32 %v359, %v2424
    %v2426 = vpop.f32.mrb[0].mxu0
    %2427 = vdwg.mxu0
    %v2428 = vsel %vm456, %v2348, -inf
    %2429 = vmax.xlane.f32.xlu0 %v2428
    %v2430 = vpop.xlane.xlu0 %2429
    %v2431 = vsel %vm456, %v2425, -inf
    %2432 = vmax.xlane.f32.xlu0 %v2431
    %v2433 = vpop.xlane.xlu0 %2432
    %v2434 = vsub.f32 %v2348, %v2430
    %v2435 = vsub.f32 %v2425, %v2433
    %v2436 = vmul.f32 %v2434, 1.442695
    %v2437 = vpow.pop %v2436
    %v2438 = vmul.f32 %v2435, 1.442695
    %v2439 = vpow.pop %v2438
    %v2440 = vsel %vm456, %v2437, 0.0
    %2441 = vadd.xlane.f32.xlu0 %v2440
    %v2442 = vpop.xlane.xlu0 %2441
    %v2443 = vsel %vm456, %v2439, 0.0
    %2444 = vadd.xlane.f32.xlu0 %v2443
    %v2445 = vpop.xlane.xlu0 %2444
    %v2446 = vrcp.pop %v2442
    %v2447 = vrcp.pop %v2445
    %v2448 = vmul.f32 %v2437, %v2446
    %v2449 = vmul.f32 %v2439, %v2447
    %2450 = vrot.lane.b32.xlu0 %v2266, 64
    %v2451 = vpop.permute.xlu0 %2450
    %v2454 = vsel %vm456, %v2448, 0
    %2456 = vmatprep.subr.mxu0 0.0
    %2457 = vmatpush1.msra.mxu0 %v2451
    %2458 = vmatprep.subr.mxu0 0.0
    %2459 = vmatpush1.msra.mxu0 0.0
    %2460 = vmatprep.subr.mxu0 0.0
    %2461 = vmatpush1.msra.mxu0 0.0
    %2462 = vmatprep.subr.mxu0 0.0
    %2463 = vmatpush1.msra.mxu0 0.0
    %2464 = vmatprep.subr.mxu0 0.0
    %2465 = vmatpush1.msra.mxu0 0.0
    %2466 = vmatprep.subr.mxu0 0.0
    %2467 = vmatpush1.msra.mxu0 0.0
    %2468 = vmatprep.subr.mxu0 0.0
    %2469 = vmatpush1.msra.mxu0 0.0
    %2470 = vmatprep.subr.mxu0 0.0
    %2471 = vmatpush1.msra.mxu0 0.0
    %2472 = vmatprep.subr.mxu0 0.0
    %2473 = vmatpush1.msra.mxu0 0.0
    %2474 = vmatprep.subr.mxu0 0.0
    %2475 = vmatpush1.msra.mxu0 0.0
    %2476 = vmatprep.subr.mxu0 0.0
    %2477 = vmatpush1.msra.mxu0 0.0
    %2478 = vmatprep.subr.mxu0 0.0
    %2479 = vmatpush1.msra.mxu0 0.0
    %2480 = vmatprep.subr.mxu0 0.0
    %2481 = vmatpush1.msra.mxu0 0.0
    %2482 = vmatprep.subr.mxu0 0.0
    %2483 = vmatpush1.msra.mxu0 0.0
    %2484 = vmatprep.subr.mxu0 0.0
    %2485 = vmatpush1.msra.mxu0 0.0
    %2486 = vmatprep.subr.mxu0 0.0
    %2487 = vmatpush1.msra.mxu0 0.0
    %2488 = vmatprep.subr.mxu0 0.0
    %2489 = vmatpush1.msra.mxu0 0.0
    %2490 = vmatprep.subr.mxu0 0.0
    %2491 = vmatpush1.msra.mxu0 0.0
    %2492 = vmatprep.subr.mxu0 0.0
    %2493 = vmatpush1.msra.mxu0 0.0
    %2494 = vmatprep.subr.mxu0 0.0
    %2495 = vmatpush1.msra.mxu0 0.0
    %2496 = vmatprep.subr.mxu0 0.0
    %2497 = vmatpush1.msra.mxu0 0.0
    %2498 = vmatprep.subr.mxu0 0.0
    %2499 = vmatpush1.msra.mxu0 0.0
    %2500 = vmatprep.subr.mxu0 0.0
    %2501 = vmatpush1.msra.mxu0 0.0
    %2502 = vmatprep.subr.mxu0 0.0
    %2503 = vmatpush1.msra.mxu0 0.0
    %2504 = vmatprep.subr.mxu0 0.0
    %2505 = vmatpush1.msra.mxu0 0.0
    %2506 = vmatprep.subr.mxu0 0.0
    %2507 = vmatpush1.msra.mxu0 0.0
    %2508 = vmatprep.subr.mxu0 0.0
    %2509 = vmatpush1.msra.mxu0 0.0
    %2510 = vmatprep.subr.mxu0 0.0
    %2511 = vmatpush1.msra.mxu0 0.0
    %2512 = vmatprep.subr.mxu0 0.0
    %2513 = vmatpush1.msra.mxu0 0.0
    %2514 = vmatprep.subr.mxu0 0.0
    %2515 = vmatpush1.msra.mxu0 0.0
    %2516 = vmatprep.subr.mxu0 0.0
    %2517 = vmatpush1.msra.mxu0 0.0
    %2518 = vmatprep.subr.mxu0 0.0
    %2519 = vmatpush1.msra.mxu0 0.0
    %2520 = vmatprep.mubr.f32.mxu0 0.0
    %2521 = vmatmul.mubr.f32.gmra.mrb[0].mxu0 %v2454
    %v2522 = vpop.f32.mrb[0].mxu0
    %v2523 = vadd.f32 0.0, %v2522
    %v2524 = vpop.f32.mrb[0].mxu0
    %2525 = vdwg.mxu0
    %2526 = vrot.lane.b32.xlu0 %v2271, 64
    %v2527 = vpop.permute.xlu0 %2526
    %v2530 = vsel %vm456, %v2449, 0
    %2532 = vmatprep.subr.mxu0 0.0
    %2533 = vmatpush1.msra.mxu0 %v2527
    %2534 = vmatprep.subr.mxu0 0.0
    %2535 = vmatpush1.msra.mxu0 0.0
    %2536 = vmatprep.subr.mxu0 0.0
    %2537 = vmatpush1.msra.mxu0 0.0
    %2538 = vmatprep.subr.mxu0 0.0
    %2539 = vmatpush1.msra.mxu0 0.0
    %2540 = vmatprep.subr.mxu0 0.0
    %2541 = vmatpush1.msra.mxu0 0.0
    %2542 = vmatprep.subr.mxu0 0.0
    %2543 = vmatpush1.msra.mxu0 0.0
    %2544 = vmatprep.subr.mxu0 0.0
    %2545 = vmatpush1.msra.mxu0 0.0
    %2546 = vmatprep.subr.mxu0 0.0
    %2547 = vmatpush1.msra.mxu0 0.0
    %2548 = vmatprep.subr.mxu0 0.0
    %2549 = vmatpush1.msra.mxu0 0.0
    %2550 = vmatprep.subr.mxu0 0.0
    %2551 = vmatpush1.msra.mxu0 0.0
    %2552 = vmatprep.subr.mxu0 0.0
    %2553 = vmatpush1.msra.mxu0 0.0
    %2554 = vmatprep.subr.mxu0 0.0
    %2555 = vmatpush1.msra.mxu0 0.0
    %2556 = vmatprep.subr.mxu0 0.0
    %2557 = vmatpush1.msra.mxu0 0.0
    %2558 = vmatprep.subr.mxu0 0.0
    %2559 = vmatpush1.msra.mxu0 0.0
    %2560 = vmatprep.subr.mxu0 0.0
    %2561 = vmatpush1.msra.mxu0 0.0
    %2562 = vmatprep.subr.mxu0 0.0
    %2563 = vmatpush1.msra.mxu0 0.0
    %2564 = vmatprep.subr.mxu0 0.0
    %2565 = vmatpush1.msra.mxu0 0.0
    %2566 = vmatprep.subr.mxu0 0.0
    %2567 = vmatpush1.msra.mxu0 0.0
    %2568 = vmatprep.subr.mxu0 0.0
    %2569 = vmatpush1.msra.mxu0 0.0
    %2570 = vmatprep.subr.mxu0 0.0
    %2571 = vmatpush1.msra.mxu0 0.0
    %2572 = vmatprep.subr.mxu0 0.0
    %2573 = vmatpush1.msra.mxu0 0.0
    %2574 = vmatprep.subr.mxu0 0.0
    %2575 = vmatpush1.msra.mxu0 0.0
    %2576 = vmatprep.subr.mxu0 0.0
    %2577 = vmatpush1.msra.mxu0 0.0
    %2578 = vmatprep.subr.mxu0 0.0
    %2579 = vmatpush1.msra.mxu0 0.0
    %2580 = vmatprep.subr.mxu0 0.0
    %2581 = vmatpush1.msra.mxu0 0.0
    %2582 = vmatprep.subr.mxu0 0.0
    %2583 = vmatpush1.msra.mxu0 0.0
    %2584 = vmatprep.subr.mxu0 0.0
    %2585 = vmatpush1.msra.mxu0 0.0
    %2586 = vmatprep.subr.mxu0 0.0
    %2587 = vmatpush1.msra.mxu0 0.0
    %2588 = vmatprep.subr.mxu0 0.0
    %2589 = vmatpush1.msra.mxu0 0.0
    %2590 = vmatprep.subr.mxu0 0.0
    %2591 = vmatpush1.msra.mxu0 0.0
    %2592 = vmatprep.subr.mxu0 0.0
    %2593 = vmatpush1.msra.mxu0 0.0
    %2594 = vmatprep.subr.mxu0 0.0
    %2595 = vmatpush1.msra.mxu0 0.0
    %2596 = vmatprep.mubr.f32.mxu0 0.0
    %2597 = vmatmul.mubr.f32.gmra.mrb[0].mxu0 %v2530
    %v2598 = vpop.f32.mrb[0].mxu0
    %v2599 = vadd.f32 0.0, %v2598
    %v2600 = vpop.f32.mrb[0].mxu0
    %2601 = vdwg.mxu0
    %2602 = vrot.lane.b32.xlu0 %v2266, 120
    %v2603 = vpop.permute.xlu0 %2602
    %2604 = vrot.lane.b32.xlu0 %v2266, 88
    %v2605 = vpop.permute.xlu0 %2604
    %v2606 = vsel %vm456, %v2603, 0
    %v2608 = vsel %vm456, %v2605, 0
    %2610 = vmatprep.subr.mxu0 0.0
    %2611 = vmatpush1.xpose.msra.mxu0 %v2608
    %2612 = vmatprep.subr.mxu0 0.0
    %2613 = vmatpush1.xpose.msra.mxu0 0.0
    %2614 = vmatprep.subr.mxu0 0.0
    %2615 = vmatpush1.xpose.msra.mxu0 0.0
    %2616 = vmatprep.subr.mxu0 0.0
    %2617 = vmatpush1.xpose.msra.mxu0 0.0
    %2618 = vmatprep.subr.mxu0 0.0
    %2619 = vmatpush1.xpose.msra.mxu0 0.0
    %2620 = vmatprep.subr.mxu0 0.0
    %2621 = vmatpush1.xpose.msra.mxu0 0.0
    %2622 = vmatprep.subr.mxu0 0.0
    %2623 = vmatpush1.xpose.msra.mxu0 0.0
    %2624 = vmatprep.subr.mxu0 0.0
    %2625 = vmatpush1.xpose.msra.mxu0 0.0
    %2626 = vmatprep.subr.mxu0 0.0
    %2627 = vmatpush1.xpose.msra.mxu0 0.0
    %2628 = vmatprep.subr.mxu0 0.0
    %2629 = vmatpush1.xpose.msra.mxu0 0.0
    %2630 = vmatprep.subr.mxu0 0.0
    %2631 = vmatpush1.xpose.msra.mxu0 0.0
    %2632 = vmatprep.subr.mxu0 0.0
    %2633 = vmatpush1.xpose.msra.mxu0 0.0
    %2634 = vmatprep.subr.mxu0 0.0
    %2635 = vmatpush1.xpose.msra.mxu0 0.0
    %2636 = vmatprep.subr.mxu0 0.0
    %2637 = vmatpush1.xpose.msra.mxu0 0.0
    %2638 = vmatprep.subr.mxu0 0.0
    %2639 = vmatpush1.xpose.msra.mxu0 0.0
    %2640 = vmatprep.subr.mxu0 0.0
    %2641 = vmatpush1.xpose.msra.mxu0 0.0
    %2642 = vmatprep.subr.mxu0 0.0
    %2643 = vmatpush1.xpose.msra.mxu0 0.0
    %2644 = vmatprep.subr.mxu0 0.0
    %2645 = vmatpush1.xpose.msra.mxu0 0.0
    %2646 = vmatprep.subr.mxu0 0.0
    %2647 = vmatpush1.xpose.msra.mxu0 0.0
    %2648 = vmatprep.subr.mxu0 0.0
    %2649 = vmatpush1.xpose.msra.mxu0 0.0
    %2650 = vmatprep.subr.mxu0 0.0
    %2651 = vmatpush1.xpose.msra.mxu0 0.0
    %2652 = vmatprep.subr.mxu0 0.0
    %2653 = vmatpush1.xpose.msra.mxu0 0.0
    %2654 = vmatprep.subr.mxu0 0.0
    %2655 = vmatpush1.xpose.msra.mxu0 0.0
    %2656 = vmatprep.subr.mxu0 0.0
    %2657 = vmatpush1.xpose.msra.mxu0 0.0
    %2658 = vmatprep.subr.mxu0 0.0
    %2659 = vmatpush1.xpose.msra.mxu0 0.0
    %2660 = vmatprep.subr.mxu0 0.0
    %2661 = vmatpush1.xpose.msra.mxu0 0.0
    %2662 = vmatprep.subr.mxu0 0.0
    %2663 = vmatpush1.xpose.msra.mxu0 0.0
    %2664 = vmatprep.subr.mxu0 0.0
    %2665 = vmatpush1.xpose.msra.mxu0 0.0
    %2666 = vmatprep.subr.mxu0 0.0
    %2667 = vmatpush1.xpose.msra.mxu0 0.0
    %2668 = vmatprep.subr.mxu0 0.0
    %2669 = vmatpush1.xpose.msra.mxu0 0.0
    %2670 = vmatprep.subr.mxu0 0.0
    %2671 = vmatpush1.xpose.msra.mxu0 0.0
    %2672 = vmatprep.subr.mxu0 0.0
    %2673 = vmatpush1.xpose.msra.mxu0 0.0
    %2674 = vmatprep.mubr.f32.mxu0 0.0
    %2675 = vmatmul.mubr.f32.gmra.mrb[0].mxu0 %v2606
    %v2676 = vpop.f32.mrb[0].mxu0
    %v2677 = vadd.f32 %v358, %v2676
    %v2678 = vpop.f32.mrb[0].mxu0
    %2679 = vdwg.mxu0
    %2680 = vrot.lane.b32.xlu0 %v2271, 120
    %v2681 = vpop.permute.xlu0 %2680
    %2682 = vrot.lane.b32.xlu0 %v2271, 88
    %v2683 = vpop.permute.xlu0 %2682
    %v2684 = vsel %vm456, %v2681, 0
    %v2686 = vsel %vm456, %v2683, 0
    %2688 = vmatprep.subr.mxu0 0.0
    %2689 = vmatpush1.xpose.msra.mxu0 %v2686
    %2690 = vmatprep.subr.mxu0 0.0
    %2691 = vmatpush1.xpose.msra.mxu0 0.0
    %2692 = vmatprep.subr.mxu0 0.0
    %2693 = vmatpush1.xpose.msra.mxu0 0.0
    %2694 = vmatprep.subr.mxu0 0.0
    %2695 = vmatpush1.xpose.msra.mxu0 0.0
    %2696 = vmatprep.subr.mxu0 0.0
    %2697 = vmatpush1.xpose.msra.mxu0 0.0
    %2698 = vmatprep.subr.mxu0 0.0
    %2699 = vmatpush1.xpose.msra.mxu0 0.0
    %2700 = vmatprep.subr.mxu0 0.0
    %2701 = vmatpush1.xpose.msra.mxu0 0.0
    %2702 = vmatprep.subr.mxu0 0.0
    %2703 = vmatpush1.xpose.msra.mxu0 0.0
    %2704 = vmatprep.subr.mxu0 0.0
    %2705 = vmatpush1.xpose.msra.mxu0 0.0
    %2706 = vmatprep.subr.mxu0 0.0
    %2707 = vmatpush1.xpose.msra.mxu0 0.0
    %2708 = vmatprep.subr.mxu0 0.0
    %2709 = vmatpush1.xpose.msra.mxu0 0.0
    %2710 = vmatprep.subr.mxu0 0.0
    %2711 = vmatpush1.xpose.msra.mxu0 0.0
    %2712 = vmatprep.subr.mxu0 0.0
    %2713 = vmatpush1.xpose.msra.mxu0 0.0
    %2714 = vmatprep.subr.mxu0 0.0
    %2715 = vmatpush1.xpose.msra.mxu0 0.0
    %2716 = vmatprep.subr.mxu0 0.0
    %2717 = vmatpush1.xpose.msra.mxu0 0.0
    %2718 = vmatprep.subr.mxu0 0.0
    %2719 = vmatpush1.xpose.msra.mxu0 0.0
    %2720 = vmatprep.subr.mxu0 0.0
    %2721 = vmatpush1.xpose.msra.mxu0 0.0
    %2722 = vmatprep.subr.mxu0 0.0
    %2723 = vmatpush1.xpose.msra.mxu0 0.0
    %2724 = vmatprep.subr.mxu0 0.0
    %2725 = vmatpush1.xpose.msra.mxu0 0.0
    %2726 = vmatprep.subr.mxu0 0.0
    %2727 = vmatpush1.xpose.msra.mxu0 0.0
    %2728 = vmatprep.subr.mxu0 0.0
    %2729 = vmatpush1.xpose.msra.mxu0 0.0
    %2730 = vmatprep.subr.mxu0 0.0
    %2731 = vmatpush1.xpose.msra.mxu0 0.0
    %2732 = vmatprep.subr.mxu0 0.0
    %2733 = vmatpush1.xpose.msra.mxu0 0.0
    %2734 = vmatprep.subr.mxu0 0.0
    %2735 = vmatpush1.xpose.msra.mxu0 0.0
    %2736 = vmatprep.subr.mxu0 0.0
    %2737 = vmatpush1.xpose.msra.mxu0 0.0
    %2738 = vmatprep.subr.mxu0 0.0
    %2739 = vmatpush1.xpose.msra.mxu0 0.0
    %2740 = vmatprep.subr.mxu0 0.0
    %2741 = vmatpush1.xpose.msra.mxu0 0.0
    %2742 = vmatprep.subr.mxu0 0.0
    %2743 = vmatpush1.xpose.msra.mxu0 0.0
    %2744 = vmatprep.subr.mxu0 0.0
    %2745 = vmatpush1.xpose.msra.mxu0 0.0
    %2746 = vmatprep.subr.mxu0 0.0
    %2747 = vmatpush1.xpose.msra.mxu0 0.0
    %2748 = vmatprep.subr.mxu0 0.0
    %2749 = vmatpush1.xpose.msra.mxu0 0.0
    %2750 = vmatprep.subr.mxu0 0.0
    %2751 = vmatpush1.xpose.msra.mxu0 0.0
    %2752 = vmatprep.mubr.f32.mxu0 0.0
    %2753 = vmatmul.mubr.f32.gmra.mrb[0].mxu0 %v2684
    %v2754 = vpop.f32.mrb[0].mxu0
    %v2755 = vadd.f32 %v359, %v2754
    %v2756 = vpop.f32.mrb[0].mxu0
    %2757 = vdwg.mxu0
    %v2758 = vsel %vm456, %v2677, -inf
    %2759 = vmax.xlane.f32.xlu0 %v2758
    %v2760 = vpop.xlane.xlu0 %2759
    %v2761 = vsel %vm456, %v2755, -inf
    %2762 = vmax.xlane.f32.xlu0 %v2761
    %v2763 = vpop.xlane.xlu0 %2762
    %v2764 = vsub.f32 %v2677, %v2760
    %v2765 = vsub.f32 %v2755, %v2763
    %v2766 = vmul.f32 %v2764, 1.442695
    %v2767 = vpow.pop %v2766
    %v2768 = vmul.f32 %v2765, 1.442695
    %v2769 = vpow.pop %v2768
    %v2770 = vsel %vm456, %v2767, 0.0
    %2771 = vadd.xlane.f32.xlu0 %v2770
    %v2772 = vpop.xlane.xlu0 %2771
    %v2773 = vsel %vm456, %v2769, 0.0
    %2774 = vadd.xlane.f32.xlu0 %v2773
    %v2775 = vpop.xlane.xlu0 %2774
    %v2776 = vrcp.pop %v2772
    %v2777 = vrcp.pop %v2775
    %v2778 = vmul.f32 %v2767, %v2776
    %v2779 = vmul.f32 %v2769, %v2777
    %2780 = vrot.lane.b32.xlu0 %v2266, 56
    %v2781 = vpop.permute.xlu0 %2780
    %v2784 = vsel %vm456, %v2778, 0
    %2786 = vmatprep.subr.mxu0 0.0
    %2787 = vmatpush1.msra.mxu0 %v2781
    %2788 = vmatprep.subr.mxu0 0.0
    %2789 = vmatpush1.msra.mxu0 0.0
    %2790 = vmatprep.subr.mxu0 0.0
    %2791 = vmatpush1.msra.mxu0 0.0
    %2792 = vmatprep.subr.mxu0 0.0
    %2793 = vmatpush1.msra.mxu0 0.0
    %2794 = vmatprep.subr.mxu0 0.0
    %2795 = vmatpush1.msra.mxu0 0.0
    %2796 = vmatprep.subr.mxu0 0.0
    %2797 = vmatpush1.msra.mxu0 0.0
    %2798 = vmatprep.subr.mxu0 0.0
    %2799 = vmatpush1.msra.mxu0 0.0
    %2800 = vmatprep.subr.mxu0 0.0
    %2801 = vmatpush1.msra.mxu0 0.0
    %2802 = vmatprep.subr.mxu0 0.0
    %2803 = vmatpush1.msra.mxu0 0.0
    %2804 = vmatprep.subr.mxu0 0.0
    %2805 = vmatpush1.msra.mxu0 0.0
    %2806 = vmatprep.subr.mxu0 0.0
    %2807 = vmatpush1.msra.mxu0 0.0
    %2808 = vmatprep.subr.mxu0 0.0
    %2809 = vmatpush1.msra.mxu0 0.0
    %2810 = vmatprep.subr.mxu0 0.0
    %2811 = vmatpush1.msra.mxu0 0.0
    %2812 = vmatprep.subr.mxu0 0.0
    %2813 = vmatpush1.msra.mxu0 0.0
    %2814 = vmatprep.subr.mxu0 0.0
    %2815 = vmatpush1.msra.mxu0 0.0
    %2816 = vmatprep.subr.mxu0 0.0
    %2817 = vmatpush1.msra.mxu0 0.0
    %2818 = vmatprep.subr.mxu0 0.0
    %2819 = vmatpush1.msra.mxu0 0.0
    %2820 = vmatprep.subr.mxu0 0.0
    %2821 = vmatpush1.msra.mxu0 0.0
    %2822 = vmatprep.subr.mxu0 0.0
    %2823 = vmatpush1.msra.mxu0 0.0
    %2824 = vmatprep.subr.mxu0 0.0
    %2825 = vmatpush1.msra.mxu0 0.0
    %2826 = vmatprep.subr.mxu0 0.0
    %2827 = vmatpush1.msra.mxu0 0.0
    %2828 = vmatprep.subr.mxu0 0.0
    %2829 = vmatpush1.msra.mxu0 0.0
    %2830 = vmatprep.subr.mxu0 0.0
    %2831 = vmatpush1.msra.mxu0 0.0
    %2832 = vmatprep.subr.mxu0 0.0
    %2833 = vmatpush1.msra.mxu0 0.0
    %2834 = vmatprep.subr.mxu0 0.0
    %2835 = vmatpush1.msra.mxu0 0.0
    %2836 = vmatprep.subr.mxu0 0.0
    %2837 = vmatpush1.msra.mxu0 0.0
    %2838 = vmatprep.subr.mxu0 0.0
    %2839 = vmatpush1.msra.mxu0 0.0
    %2840 = vmatprep.subr.mxu0 0.0
    %2841 = vmatpush1.msra.mxu0 0.0
    %2842 = vmatprep.subr.mxu0 0.0
    %2843 = vmatpush1.msra.mxu0 0.0
    %2844 = vmatprep.subr.mxu0 0.0
    %2845 = vmatpush1.msra.mxu0 0.0
    %2846 = vmatprep.subr.mxu0 0.0
    %2847 = vmatpush1.msra.mxu0 0.0
    %2848 = vmatprep.subr.mxu0 0.0
    %2849 = vmatpush1.msra.mxu0 0.0
    %2850 = vmatprep.mubr.f32.mxu0 0.0
    %2851 = vmatmul.mubr.f32.gmra.mrb[0].mxu0 %v2784
    %v2852 = vpop.f32.mrb[0].mxu0
    %v2853 = vadd.f32 0.0, %v2852
    %v2854 = vpop.f32.mrb[0].mxu0
    %2855 = vdwg.mxu0
    %2856 = vrot.lane.b32.xlu0 %v2271, 56
    %v2857 = vpop.permute.xlu0 %2856
    %v2860 = vsel %vm456, %v2779, 0
    %2862 = vmatprep.subr.mxu0 0.0
    %2863 = vmatpush1.msra.mxu0 %v2857
    %2864 = vmatprep.subr.mxu0 0.0
    %2865 = vmatpush1.msra.mxu0 0.0
    %2866 = vmatprep.subr.mxu0 0.0
    %2867 = vmatpush1.msra.mxu0 0.0
    %2868 = vmatprep.subr.mxu0 0.0
    %2869 = vmatpush1.msra.mxu0 0.0
    %2870 = vmatprep.subr.mxu0 0.0
    %2871 = vmatpush1.msra.mxu0 0.0
    %2872 = vmatprep.subr.mxu0 0.0
    %2873 = vmatpush1.msra.mxu0 0.0
    %2874 = vmatprep.subr.mxu0 0.0
    %2875 = vmatpush1.msra.mxu0 0.0
    %2876 = vmatprep.subr.mxu0 0.0
    %2877 = vmatpush1.msra.mxu0 0.0
    %2878 = vmatprep.subr.mxu0 0.0
    %2879 = vmatpush1.msra.mxu0 0.0
    %2880 = vmatprep.subr.mxu0 0.0
    %2881 = vmatpush1.msra.mxu0 0.0
    %2882 = vmatprep.subr.mxu0 0.0
    %2883 = vmatpush1.msra.mxu0 0.0
    %2884 = vmatprep.subr.mxu0 0.0
    %2885 = vmatpush1.msra.mxu0 0.0
    %2886 = vmatprep.subr.mxu0 0.0
    %2887 = vmatpush1.msra.mxu0 0.0
    %2888 = vmatprep.subr.mxu0 0.0
    %2889 = vmatpush1.msra.mxu0 0.0
    %2890 = vmatprep.subr.mxu0 0.0
    %2891 = vmatpush1.msra.mxu0 0.0
    %2892 = vmatprep.subr.mxu0 0.0
    %2893 = vmatpush1.msra.mxu0 0.0
    %2894 = vmatprep.subr.mxu0 0.0
    %2895 = vmatpush1.msra.mxu0 0.0
    %2896 = vmatprep.subr.mxu0 0.0
    %2897 = vmatpush1.msra.mxu0 0.0
    %2898 = vmatprep.subr.mxu0 0.0
    %2899 = vmatpush1.msra.mxu0 0.0
    %2900 = vmatprep.subr.mxu0 0.0
    %2901 = vmatpush1.msra.mxu0 0.0
    %2902 = vmatprep.subr.mxu0 0.0
    %2903 = vmatpush1.msra.mxu0 0.0
    %2904 = vmatprep.subr.mxu0 0.0
    %2905 = vmatpush1.msra.mxu0 0.0
    %2906 = vmatprep.subr.mxu0 0.0
    %2907 = vmatpush1.msra.mxu0 0.0
    %2908 = vmatprep.subr.mxu0 0.0
    %2909 = vmatpush1.msra.mxu0 0.0
    %2910 = vmatprep.subr.mxu0 0.0
    %2911 = vmatpush1.msra.mxu0 0.0
    %2912 = vmatprep.subr.mxu0 0.0
    %2913 = vmatpush1.msra.mxu0 0.0
    %2914 = vmatprep.subr.mxu0 0.0
    %2915 = vmatpush1.msra.mxu0 0.0
    %2916 = vmatprep.subr.mxu0 0.0
    %2917 = vmatpush1.msra.mxu0 0.0
    %2918 = vmatprep.subr.mxu0 0.0
    %2919 = vmatpush1.msra.mxu0 0.0
    %2920 = vmatprep.subr.mxu0 0.0
    %2921 = vmatpush1.msra.mxu0 0.0
    %2922 = vmatprep.subr.mxu0 0.0
    %2923 = vmatpush1.msra.mxu0 0.0
    %2924 = vmatprep.subr.mxu0 0.0
    %2925 = vmatpush1.msra.mxu0 0.0
    %2926 = vmatprep.mubr.f32.mxu0 0.0
    %2927 = vmatmul.mubr.f32.gmra.mrb[0].mxu0 %v2860
    %v2928 = vpop.f32.mrb[0].mxu0
    %v2929 = vadd.f32 0.0, %v2928
    %v2930 = vpop.f32.mrb[0].mxu0
    %2931 = vdwg.mxu0
    %2932 = vrot.lane.b32.xlu0 %v2266, 112
    %v2933 = vpop.permute.xlu0 %2932
    %2934 = vrot.lane.b32.xlu0 %v2266, 80
    %v2935 = vpop.permute.xlu0 %2934
    %v2936 = vsel %vm456, %v2933, 0
    %v2938 = vsel %vm456, %v2935, 0
    %2940 = vmatprep.subr.mxu0 0.0
    %2941 = vmatpush1.xpose.msra.mxu0 %v2938
    %2942 = vmatprep.subr.mxu0 0.0
    %2943 = vmatpush1.xpose.msra.mxu0 0.0
    %2944 = vmatprep.subr.mxu0 0.0
    %2945 = vmatpush1.xpose.msra.mxu0 0.0
    %2946 = vmatprep.subr.mxu0 0.0
    %2947 = vmatpush1.xpose.msra.mxu0 0.0
    %2948 = vmatprep.subr.mxu0 0.0
    %2949 = vmatpush1.xpose.msra.mxu0 0.0
    %2950 = vmatprep.subr.mxu0 0.0
    %2951 = vmatpush1.xpose.msra.mxu0 0.0
    %2952 = vmatprep.subr.mxu0 0.0
    %2953 = vmatpush1.xpose.msra.mxu0 0.0
    %2954 = vmatprep.subr.mxu0 0.0
    %2955 = vmatpush1.xpose.msra.mxu0 0.0
    %2956 = vmatprep.subr.mxu0 0.0
    %2957 = vmatpush1.xpose.msra.mxu0 0.0
    %2958 = vmatprep.subr.mxu0 0.0
    %2959 = vmatpush1.xpose.msra.mxu0 0.0
    %2960 = vmatprep.subr.mxu0 0.0
    %2961 = vmatpush1.xpose.msra.mxu0 0.0
    %2962 = vmatprep.subr.mxu0 0.0
    %2963 = vmatpush1.xpose.msra.mxu0 0.0
    %2964 = vmatprep.subr.mxu0 0.0
    %2965 = vmatpush1.xpose.msra.mxu0 0.0
    %2966 = vmatprep.subr.mxu0 0.0
    %2967 = vmatpush1.xpose.msra.mxu0 0.0
    %2968 = vmatprep.subr.mxu0 0.0
    %2969 = vmatpush1.xpose.msra.mxu0 0.0
    %2970 = vmatprep.subr.mxu0 0.0
    %2971 = vmatpush1.xpose.msra.mxu0 0.0
    %2972 = vmatprep.subr.mxu0 0.0
    %2973 = vmatpush1.xpose.msra.mxu0 0.0
    %2974 = vmatprep.subr.mxu0 0.0
    %2975 = vmatpush1.xpose.msra.mxu0 0.0
    %2976 = vmatprep.subr.mxu0 0.0
    %2977 = vmatpush1.xpose.msra.mxu0 0.0
    %2978 = vmatprep.subr.mxu0 0.0
    %2979 = vmatpush1.xpose.msra.mxu0 0.0
    %2980 = vmatprep.subr.mxu0 0.0
    %2981 = vmatpush1.xpose.msra.mxu0 0.0
    %2982 = vmatprep.subr.mxu0 0.0
    %2983 = vmatpush1.xpose.msra.mxu0 0.0
    %2984 = vmatprep.subr.mxu0 0.0
    %2985 = vmatpush1.xpose.msra.mxu0 0.0
    %2986 = vmatprep.subr.mxu0 0.0
    %2987 = vmatpush1.xpose.msra.mxu0 0.0
    %2988 = vmatprep.subr.mxu0 0.0
    %2989 = vmatpush1.xpose.msra.mxu0 0.0
    %2990 = vmatprep.subr.mxu0 0.0
    %2991 = vmatpush1.xpose.msra.mxu0 0.0
    %2992 = vmatprep.subr.mxu0 0.0
    %2993 = vmatpush1.xpose.msra.mxu0 0.0
    %2994 = vmatprep.subr.mxu0 0.0
    %2995 = vmatpush1.xpose.msra.mxu0 0.0
    %2996 = vmatprep.subr.mxu0 0.0
    %2997 = vmatpush1.xpose.msra.mxu0 0.0
    %2998 = vmatprep.subr.mxu0 0.0
    %2999 = vmatpush1.xpose.msra.mxu0 0.0
    %3000 = vmatprep.subr.mxu0 0.0
    %3001 = vmatpush1.xpose.msra.mxu0 0.0
    %3002 = vmatprep.subr.mxu0 0.0
    %3003 = vmatpush1.xpose.msra.mxu0 0.0
    %3004 = vmatprep.mubr.f32.mxu0 0.0
    %3005 = vmatmul.mubr.f32.gmra.mrb[0].mxu0 %v2936
    %v3006 = vpop.f32.mrb[0].mxu0
    %v3007 = vadd.f32 %v358, %v3006
    %v3008 = vpop.f32.mrb[0].mxu0
    %3009 = vdwg.mxu0
    %3010 = vrot.lane.b32.xlu0 %v2271, 112
    %v3011 = vpop.permute.xlu0 %3010
    %3012 = vrot.lane.b32.xlu0 %v2271, 80
    %v3013 = vpop.permute.xlu0 %3012
    %v3014 = vsel %vm456, %v3011, 0
    %v3016 = vsel %vm456, %v3013, 0
    %3018 = vmatprep.subr.mxu0 0.0
    %3019 = vmatpush1.xpose.msra.mxu0 %v3016
    %3020 = vmatprep.subr.mxu0 0.0
    %3021 = vmatpush1.xpose.msra.mxu0 0.0
    %3022 = vmatprep.subr.mxu0 0.0
    %3023 = vmatpush1.xpose.msra.mxu0 0.0
    %3024 = vmatprep.subr.mxu0 0.0
    %3025 = vmatpush1.xpose.msra.mxu0 0.0
    %3026 = vmatprep.subr.mxu0 0.0
    %3027 = vmatpush1.xpose.msra.mxu0 0.0
    %3028 = vmatprep.subr.mxu0 0.0
    %3029 = vmatpush1.xpose.msra.mxu0 0.0
    %3030 = vmatprep.subr.mxu0 0.0
    %3031 = vmatpush1.xpose.msra.mxu0 0.0
    %3032 = vmatprep.subr.mxu0 0.0
    %3033 = vmatpush1.xpose.msra.mxu0 0.0
    %3034 = vmatprep.subr.mxu0 0.0
    %3035 = vmatpush1.xpose.msra.mxu0 0.0
    %3036 = vmatprep.subr.mxu0 0.0
    %3037 = vmatpush1.xpose.msra.mxu0 0.0
    %3038 = vmatprep.subr.mxu0 0.0
    %3039 = vmatpush1.xpose.msra.mxu0 0.0
    %3040 = vmatprep.subr.mxu0 0.0
    %3041 = vmatpush1.xpose.msra.mxu0 0.0
    %3042 = vmatprep.subr.mxu0 0.0
    %3043 = vmatpush1.xpose.msra.mxu0 0.0
    %3044 = vmatprep.subr.mxu0 0.0
    %3045 = vmatpush1.xpose.msra.mxu0 0.0
    %3046 = vmatprep.subr.mxu0 0.0
    %3047 = vmatpush1.xpose.msra.mxu0 0.0
    %3048 = vmatprep.subr.mxu0 0.0
    %3049 = vmatpush1.xpose.msra.mxu0 0.0
    %3050 = vmatprep.subr.mxu0 0.0
    %3051 = vmatpush1.xpose.msra.mxu0 0.0
    %3052 = vmatprep.subr.mxu0 0.0
    %3053 = vmatpush1.xpose.msra.mxu0 0.0
    %3054 = vmatprep.subr.mxu0 0.0
    %3055 = vmatpush1.xpose.msra.mxu0 0.0
    %3056 = vmatprep.subr.mxu0 0.0
    %3057 = vmatpush1.xpose.msra.mxu0 0.0
    %3058 = vmatprep.subr.mxu0 0.0
    %3059 = vmatpush1.xpose.msra.mxu0 0.0
    %3060 = vmatprep.subr.mxu0 0.0
    %3061 = vmatpush1.xpose.msra.mxu0 0.0
    %3062 = vmatprep.subr.mxu0 0.0
    %3063 = vmatpush1.xpose.msra.mxu0 0.0
    %3064 = vmatprep.subr.mxu0 0.0
    %3065 = vmatpush1.xpose.msra.mxu0 0.0
    %3066 = vmatprep.subr.mxu0 0.0
    %3067 = vmatpush1.xpose.msra.mxu0 0.0
    %3068 = vmatprep.subr.mxu0 0.0
    %3069 = vmatpush1.xpose.msra.mxu0 0.0
    %3070 = vmatprep.subr.mxu0 0.0
    %3071 = vmatpush1.xpose.msra.mxu0 0.0
    %3072 = vmatprep.subr.mxu0 0.0
    %3073 = vmatpush1.xpose.msra.mxu0 0.0
    %3074 = vmatprep.subr.mxu0 0.0
    %3075 = vmatpush1.xpose.msra.mxu0 0.0
    %3076 = vmatprep.subr.mxu0 0.0
    %3077 = vmatpush1.xpose.msra.mxu0 0.0
    %3078 = vmatprep.subr.mxu0 0.0
    %3079 = vmatpush1.xpose.msra.mxu0 0.0
    %3080 = vmatprep.subr.mxu0 0.0
    %3081 = vmatpush1.xpose.msra.mxu0 0.0
    %3082 = vmatprep.mubr.f32.mxu0 0.0
    %3083 = vmatmul.mubr.f32.gmra.mrb[0].mxu0 %v3014
    %v3084 = vpop.f32.mrb[0].mxu0
    %v3085 = vadd.f32 %v359, %v3084
    %v3086 = vpop.f32.mrb[0].mxu0
    %3087 = vdwg.mxu0
    %v3088 = vsel %vm456, %v3007, -inf
    %3089 = vmax.xlane.f32.xlu0 %v3088
    %v3090 = vpop.xlane.xlu0 %3089
    %v3091 = vsel %vm456, %v3085, -inf
    %3092 = vmax.xlane.f32.xlu0 %v3091
    %v3093 = vpop.xlane.xlu0 %3092
    %v3094 = vsub.f32 %v3007, %v3090
    %v3095 = vsub.f32 %v3085, %v3093
    %v3096 = vmul.f32 %v3094, 1.442695
    %v3097 = vpow.pop %v3096
    %v3098 = vmul.f32 %v3095, 1.442695
    %v3099 = vpow.pop %v3098
    %v3100 = vsel %vm456, %v3097, 0.0
    %3101 = vadd.xlane.f32.xlu0 %v3100
    %v3102 = vpop.xlane.xlu0 %3101
    %v3103 = vsel %vm456, %v3099, 0.0
    %3104 = vadd.xlane.f32.xlu0 %v3103
    %v3105 = vpop.xlane.xlu0 %3104
    %v3106 = vrcp.pop %v3102
    %v3107 = vrcp.pop %v3105
    %v3108 = vmul.f32 %v3097, %v3106
    %v3109 = vmul.f32 %v3099, %v3107
    %3110 = vrot.lane.b32.xlu0 %v2266, 48
    %v3111 = vpop.permute.xlu0 %3110
    %v3114 = vsel %vm456, %v3108, 0
    %3116 = vmatprep.subr.mxu0 0.0
    %3117 = vmatpush1.msra.mxu0 %v3111
    %3118 = vmatprep.subr.mxu0 0.0
    %3119 = vmatpush1.msra.mxu0 0.0
    %3120 = vmatprep.subr.mxu0 0.0
    %3121 = vmatpush1.msra.mxu0 0.0
    %3122 = vmatprep.subr.mxu0 0.0
    %3123 = vmatpush1.msra.mxu0 0.0
    %3124 = vmatprep.subr.mxu0 0.0
    %3125 = vmatpush1.msra.mxu0 0.0
    %3126 = vmatprep.subr.mxu0 0.0
    %3127 = vmatpush1.msra.mxu0 0.0
    %3128 = vmatprep.subr.mxu0 0.0
    %3129 = vmatpush1.msra.mxu0 0.0
    %3130 = vmatprep.subr.mxu0 0.0
    %3131 = vmatpush1.msra.mxu0 0.0
    %3132 = vmatprep.subr.mxu0 0.0
    %3133 = vmatpush1.msra.mxu0 0.0
    %3134 = vmatprep.subr.mxu0 0.0
    %3135 = vmatpush1.msra.mxu0 0.0
    %3136 = vmatprep.subr.mxu0 0.0
    %3137 = vmatpush1.msra.mxu0 0.0
    %3138 = vmatprep.subr.mxu0 0.0
    %3139 = vmatpush1.msra.mxu0 0.0
    %3140 = vmatprep.subr.mxu0 0.0
    %3141 = vmatpush1.msra.mxu0 0.0
    %3142 = vmatprep.subr.mxu0 0.0
    %3143 = vmatpush1.msra.mxu0 0.0
    %3144 = vmatprep.subr.mxu0 0.0
    %3145 = vmatpush1.msra.mxu0 0.0
    %3146 = vmatprep.subr.mxu0 0.0
    %3147 = vmatpush1.msra.mxu0 0.0
    %3148 = vmatprep.subr.mxu0 0.0
    %3149 = vmatpush1.msra.mxu0 0.0
    %3150 = vmatprep.subr.mxu0 0.0
    %3151 = vmatpush1.msra.mxu0 0.0
    %3152 = vmatprep.subr.mxu0 0.0
    %3153 = vmatpush1.msra.mxu0 0.0
    %3154 = vmatprep.subr.mxu0 0.0
    %3155 = vmatpush1.msra.mxu0 0.0
    %3156 = vmatprep.subr.mxu0 0.0
    %3157 = vmatpush1.msra.mxu0 0.0
    %3158 = vmatprep.subr.mxu0 0.0
    %3159 = vmatpush1.msra.mxu0 0.0
    %3160 = vmatprep.subr.mxu0 0.0
    %3161 = vmatpush1.msra.mxu0 0.0
    %3162 = vmatprep.subr.mxu0 0.0
    %3163 = vmatpush1.msra.mxu0 0.0
    %3164 = vmatprep.subr.mxu0 0.0
    %3165 = vmatpush1.msra.mxu0 0.0
    %3166 = vmatprep.subr.mxu0 0.0
    %3167 = vmatpush1.msra.mxu0 0.0
    %3168 = vmatprep.subr.mxu0 0.0
    %3169 = vmatpush1.msra.mxu0 0.0
    %3170 = vmatprep.subr.mxu0 0.0
    %3171 = vmatpush1.msra.mxu0 0.0
    %3172 = vmatprep.subr.mxu0 0.0
    %3173 = vmatpush1.msra.mxu0 0.0
    %3174 = vmatprep.subr.mxu0 0.0
    %3175 = vmatpush1.msra.mxu0 0.0
    %3176 = vmatprep.subr.mxu0 0.0
    %3177 = vmatpush1.msra.mxu0 0.0
    %3178 = vmatprep.subr.mxu0 0.0
    %3179 = vmatpush1.msra.mxu0 0.0
    %3180 = vmatprep.mubr.f32.mxu0 0.0
    %3181 = vmatmul.mubr.f32.gmra.mrb[0].mxu0 %v3114
    %v3182 = vpop.f32.mrb[0].mxu0
    %v3183 = vadd.f32 0.0, %v3182
    %v3184 = vpop.f32.mrb[0].mxu0
    %3185 = vdwg.mxu0
    %3186 = vrot.lane.b32.xlu0 %v2271, 48
    %v3187 = vpop.permute.xlu0 %3186
    %v3190 = vsel %vm456, %v3109, 0
    %3192 = vmatprep.subr.mxu0 0.0
    %3193 = vmatpush1.msra.mxu0 %v3187
    %3194 = vmatprep.subr.mxu0 0.0
    %3195 = vmatpush1.msra.mxu0 0.0
    %3196 = vmatprep.subr.mxu0 0.0
    %3197 = vmatpush1.msra.mxu0 0.0
    %3198 = vmatprep.subr.mxu0 0.0
    %3199 = vmatpush1.msra.mxu0 0.0
    %3200 = vmatprep.subr.mxu0 0.0
    %3201 = vmatpush1.msra.mxu0 0.0
    %3202 = vmatprep.subr.mxu0 0.0
    %3203 = vmatpush1.msra.mxu0 0.0
    %3204 = vmatprep.subr.mxu0 0.0
    %3205 = vmatpush1.msra.mxu0 0.0
    %3206 = vmatprep.subr.mxu0 0.0
    %3207 = vmatpush1.msra.mxu0 0.0
    %3208 = vmatprep.subr.mxu0 0.0
    %3209 = vmatpush1.msra.mxu0 0.0
    %3210 = vmatprep.subr.mxu0 0.0
    %3211 = vmatpush1.msra.mxu0 0.0
    %3212 = vmatprep.subr.mxu0 0.0
    %3213 = vmatpush1.msra.mxu0 0.0
    %3214 = vmatprep.subr.mxu0 0.0
    %3215 = vmatpush1.msra.mxu0 0.0
    %3216 = vmatprep.subr.mxu0 0.0
    %3217 = vmatpush1.msra.mxu0 0.0
    %3218 = vmatprep.subr.mxu0 0.0
    %3219 = vmatpush1.msra.mxu0 0.0
    %3220 = vmatprep.subr.mxu0 0.0
    %3221 = vmatpush1.msra.mxu0 0.0
    %3222 = vmatprep.subr.mxu0 0.0
    %3223 = vmatpush1.msra.mxu0 0.0
    %3224 = vmatprep.subr.mxu0 0.0
    %3225 = vmatpush1.msra.mxu0 0.0
    %3226 = vmatprep.subr.mxu0 0.0
    %3227 = vmatpush1.msra.mxu0 0.0
    %3228 = vmatprep.subr.mxu0 0.0
    %3229 = vmatpush1.msra.mxu0 0.0
    %3230 = vmatprep.subr.mxu0 0.0
    %3231 = vmatpush1.msra.mxu0 0.0
    %3232 = vmatprep.subr.mxu0 0.0
    %3233 = vmatpush1.msra.mxu0 0.0
    %3234 = vmatprep.subr.mxu0 0.0
    %3235 = vmatpush1.msra.mxu0 0.0
    %3236 = vmatprep.subr.mxu0 0.0
    %3237 = vmatpush1.msra.mxu0 0.0
    %3238 = vmatprep.subr.mxu0 0.0
    %3239 = vmatpush1.msra.mxu0 0.0
    %3240 = vmatprep.subr.mxu0 0.0
    %3241 = vmatpush1.msra.mxu0 0.0
    %3242 = vmatprep.subr.mxu0 0.0
    %3243 = vmatpush1.msra.mxu0 0.0
    %3244 = vmatprep.subr.mxu0 0.0
    %3245 = vmatpush1.msra.mxu0 0.0
    %3246 = vmatprep.subr.mxu0 0.0
    %3247 = vmatpush1.msra.mxu0 0.0
    %3248 = vmatprep.subr.mxu0 0.0
    %3249 = vmatpush1.msra.mxu0 0.0
    %3250 = vmatprep.subr.mxu0 0.0
    %3251 = vmatpush1.msra.mxu0 0.0
    %3252 = vmatprep.subr.mxu0 0.0
    %3253 = vmatpush1.msra.mxu0 0.0
    %3254 = vmatprep.subr.mxu0 0.0
    %3255 = vmatpush1.msra.mxu0 0.0
    %3256 = vmatprep.mubr.f32.mxu0 0.0
    %3257 = vmatmul.mubr.f32.gmra.mrb[0].mxu0 %v3190
    %v3258 = vpop.f32.mrb[0].mxu0
    %v3259 = vadd.f32 0.0, %v3258
    %v3260 = vpop.f32.mrb[0].mxu0
    %3261 = vdwg.mxu0
    %3262 = vrot.lane.b32.xlu0 %v2266, 104
    %v3263 = vpop.permute.xlu0 %3262
    %3264 = vrot.lane.b32.xlu0 %v2266, 72
    %v3265 = vpop.permute.xlu0 %3264
    %v3266 = vsel %vm456, %v3263, 0
    %v3268 = vsel %vm456, %v3265, 0
    %3270 = vmatprep.subr.mxu0 0.0
    %3271 = vmatpush1.xpose.msra.mxu0 %v3268
    %3272 = vmatprep.subr.mxu0 0.0
    %3273 = vmatpush1.xpose.msra.mxu0 0.0
    %3274 = vmatprep.subr.mxu0 0.0
    %3275 = vmatpush1.xpose.msra.mxu0 0.0
    %3276 = vmatprep.subr.mxu0 0.0
    %3277 = vmatpush1.xpose.msra.mxu0 0.0
    %3278 = vmatprep.subr.mxu0 0.0
    %3279 = vmatpush1.xpose.msra.mxu0 0.0
    %3280 = vmatprep.subr.mxu0 0.0
    %3281 = vmatpush1.xpose.msra.mxu0 0.0
    %3282 = vmatprep.subr.mxu0 0.0
    %3283 = vmatpush1.xpose.msra.mxu0 0.0
    %3284 = vmatprep.subr.mxu0 0.0
    %3285 = vmatpush1.xpose.msra.mxu0 0.0
    %3286 = vmatprep.subr.mxu0 0.0
    %3287 = vmatpush1.xpose.msra.mxu0 0.0
    %3288 = vmatprep.subr.mxu0 0.0
    %3289 = vmatpush1.xpose.msra.mxu0 0.0
    %3290 = vmatprep.subr.mxu0 0.0
    %3291 = vmatpush1.xpose.msra.mxu0 0.0
    %3292 = vmatprep.subr.mxu0 0.0
    %3293 = vmatpush1.xpose.msra.mxu0 0.0
    %3294 = vmatprep.subr.mxu0 0.0
    %3295 = vmatpush1.xpose.msra.mxu0 0.0
    %3296 = vmatprep.subr.mxu0 0.0
    %3297 = vmatpush1.xpose.msra.mxu0 0.0
    %3298 = vmatprep.subr.mxu0 0.0
    %3299 = vmatpush1.xpose.msra.mxu0 0.0
    %3300 = vmatprep.subr.mxu0 0.0
    %3301 = vmatpush1.xpose.msra.mxu0 0.0
    %3302 = vmatprep.subr.mxu0 0.0
    %3303 = vmatpush1.xpose.msra.mxu0 0.0
    %3304 = vmatprep.subr.mxu0 0.0
    %3305 = vmatpush1.xpose.msra.mxu0 0.0
    %3306 = vmatprep.subr.mxu0 0.0
    %3307 = vmatpush1.xpose.msra.mxu0 0.0
    %3308 = vmatprep.subr.mxu0 0.0
    %3309 = vmatpush1.xpose.msra.mxu0 0.0
    %3310 = vmatprep.subr.mxu0 0.0
    %3311 = vmatpush1.xpose.msra.mxu0 0.0
    %3312 = vmatprep.subr.mxu0 0.0
    %3313 = vmatpush1.xpose.msra.mxu0 0.0
    %3314 = vmatprep.subr.mxu0 0.0
    %3315 = vmatpush1.xpose.msra.mxu0 0.0
    %3316 = vmatprep.subr.mxu0 0.0
    %3317 = vmatpush1.xpose.msra.mxu0 0.0
    %3318 = vmatprep.subr.mxu0 0.0
    %3319 = vmatpush1.xpose.msra.mxu0 0.0
    %3320 = vmatprep.subr.mxu0 0.0
    %3321 = vmatpush1.xpose.msra.mxu0 0.0
    %3322 = vmatprep.subr.mxu0 0.0
    %3323 = vmatpush1.xpose.msra.mxu0 0.0
    %3324 = vmatprep.subr.mxu0 0.0
    %3325 = vmatpush1.xpose.msra.mxu0 0.0
    %3326 = vmatprep.subr.mxu0 0.0
    %3327 = vmatpush1.xpose.msra.mxu0 0.0
    %3328 = vmatprep.subr.mxu0 0.0
    %3329 = vmatpush1.xpose.msra.mxu0 0.0
    %3330 = vmatprep.subr.mxu0 0.0
    %3331 = vmatpush1.xpose.msra.mxu0 0.0
    %3332 = vmatprep.subr.mxu0 0.0
    %3333 = vmatpush1.xpose.msra.mxu0 0.0
    %3334 = vmatprep.mubr.f32.mxu0 0.0
    %3335 = vmatmul.mubr.f32.gmra.mrb[0].mxu0 %v3266
    %v3336 = vpop.f32.mrb[0].mxu0
    %v3337 = vadd.f32 %v358, %v3336
    %v3338 = vpop.f32.mrb[0].mxu0
    %3339 = vdwg.mxu0
    %3340 = vrot.lane.b32.xlu0 %v2271, 104
    %v3341 = vpop.permute.xlu0 %3340
    %3342 = vrot.lane.b32.xlu0 %v2271, 72
    %v3343 = vpop.permute.xlu0 %3342
    %v3344 = vsel %vm456, %v3341, 0
    %v3346 = vsel %vm456, %v3343, 0
    %3348 = vmatprep.subr.mxu0 0.0
    %3349 = vmatpush1.xpose.msra.mxu0 %v3346
    %3350 = vmatprep.subr.mxu0 0.0
    %3351 = vmatpush1.xpose.msra.mxu0 0.0
    %3352 = vmatprep.subr.mxu0 0.0
    %3353 = vmatpush1.xpose.msra.mxu0 0.0
    %3354 = vmatprep.subr.mxu0 0.0
    %3355 = vmatpush1.xpose.msra.mxu0 0.0
    %3356 = vmatprep.subr.mxu0 0.0
    %3357 = vmatpush1.xpose.msra.mxu0 0.0
    %3358 = vmatprep.subr.mxu0 0.0
    %3359 = vmatpush1.xpose.msra.mxu0 0.0
    %3360 = vmatprep.subr.mxu0 0.0
    %3361 = vmatpush1.xpose.msra.mxu0 0.0
    %3362 = vmatprep.subr.mxu0 0.0
    %3363 = vmatpush1.xpose.msra.mxu0 0.0
    %3364 = vmatprep.subr.mxu0 0.0
    %3365 = vmatpush1.xpose.msra.mxu0 0.0
    %3366 = vmatprep.subr.mxu0 0.0
    %3367 = vmatpush1.xpose.msra.mxu0 0.0
    %3368 = vmatprep.subr.mxu0 0.0
    %3369 = vmatpush1.xpose.msra.mxu0 0.0
    %3370 = vmatprep.subr.mxu0 0.0
    %3371 = vmatpush1.xpose.msra.mxu0 0.0
    %3372 = vmatprep.subr.mxu0 0.0
    %3373 = vmatpush1.xpose.msra.mxu0 0.0
    %3374 = vmatprep.subr.mxu0 0.0
    %3375 = vmatpush1.xpose.msra.mxu0 0.0
    %3376 = vmatprep.subr.mxu0 0.0
    %3377 = vmatpush1.xpose.msra.mxu0 0.0
    %3378 = vmatprep.subr.mxu0 0.0
    %3379 = vmatpush1.xpose.msra.mxu0 0.0
    %3380 = vmatprep.subr.mxu0 0.0
    %3381 = vmatpush1.xpose.msra.mxu0 0.0
    %3382 = vmatprep.subr.mxu0 0.0
    %3383 = vmatpush1.xpose.msra.mxu0 0.0
    %3384 = vmatprep.subr.mxu0 0.0
    %3385 = vmatpush1.xpose.msra.mxu0 0.0
    %3386 = vmatprep.subr.mxu0 0.0
    %3387 = vmatpush1.xpose.msra.mxu0 0.0
    %3388 = vmatprep.subr.mxu0 0.0
    %3389 = vmatpush1.xpose.msra.mxu0 0.0
    %3390 = vmatprep.subr.mxu0 0.0
    %3391 = vmatpush1.xpose.msra.mxu0 0.0
    %3392 = vmatprep.subr.mxu0 0.0
    %3393 = vmatpush1.xpose.msra.mxu0 0.0
    %3394 = vmatprep.subr.mxu0 0.0
    %3395 = vmatpush1.xpose.msra.mxu0 0.0
    %3396 = vmatprep.subr.mxu0 0.0
    %3397 = vmatpush1.xpose.msra.mxu0 0.0
    %3398 = vmatprep.subr.mxu0 0.0
    %3399 = vmatpush1.xpose.msra.mxu0 0.0
    %3400 = vmatprep.subr.mxu0 0.0
    %3401 = vmatpush1.xpose.msra.mxu0 0.0
    %3402 = vmatprep.subr.mxu0 0.0
    %3403 = vmatpush1.xpose.msra.mxu0 0.0
    %3404 = vmatprep.subr.mxu0 0.0
    %3405 = vmatpush1.xpose.msra.mxu0 0.0
    %3406 = vmatprep.subr.mxu0 0.0
    %3407 = vmatpush1.xpose.msra.mxu0 0.0
    %3408 = vmatprep.subr.mxu0 0.0
    %3409 = vmatpush1.xpose.msra.mxu0 0.0
    %3410 = vmatprep.subr.mxu0 0.0
    %3411 = vmatpush1.xpose.msra.mxu0 0.0
    %3412 = vmatprep.mubr.f32.mxu0 0.0
    %3413 = vmatmul.mubr.f32.gmra.mrb[0].mxu0 %v3344
    %v3414 = vpop.f32.mrb[0].mxu0
    %v3415 = vadd.f32 %v359, %v3414
    %v3416 = vpop.f32.mrb[0].mxu0
    %3417 = vdwg.mxu0
    %v3418 = vsel %vm456, %v3337, -inf
    %3419 = vmax.xlane.f32.xlu0 %v3418
    %v3420 = vpop.xlane.xlu0 %3419
    %v3421 = vsel %vm456, %v3415, -inf
    %3422 = vmax.xlane.f32.xlu0 %v3421
    %v3423 = vpop.xlane.xlu0 %3422
    %v3424 = vsub.f32 %v3337, %v3420
    %v3425 = vsub.f32 %v3415, %v3423
    %v3426 = vmul.f32 %v3424, 1.442695
    %v3427 = vpow.pop %v3426
    %v3428 = vmul.f32 %v3425, 1.442695
    %v3429 = vpow.pop %v3428
    %v3430 = vsel %vm456, %v3427, 0.0
    %3431 = vadd.xlane.f32.xlu0 %v3430
    %v3432 = vpop.xlane.xlu0 %3431
    %v3433 = vsel %vm456, %v3429, 0.0
    %3434 = vadd.xlane.f32.xlu0 %v3433
    %v3435 = vpop.xlane.xlu0 %3434
    %v3436 = vrcp.pop %v3432
    %v3437 = vrcp.pop %v3435
    %v3438 = vmul.f32 %v3427, %v3436
    %v3439 = vmul.f32 %v3429, %v3437
    %3440 = vrot.lane.b32.xlu0 %v2266, 40
    %v3441 = vpop.permute.xlu0 %3440
    %v3444 = vsel %vm456, %v3438, 0
    %3446 = vmatprep.subr.mxu0 0.0
    %3447 = vmatpush1.msra.mxu0 %v3441
    %3448 = vmatprep.subr.mxu0 0.0
    %3449 = vmatpush1.msra.mxu0 0.0
    %3450 = vmatprep.subr.mxu0 0.0
    %3451 = vmatpush1.msra.mxu0 0.0
    %3452 = vmatprep.subr.mxu0 0.0
    %3453 = vmatpush1.msra.mxu0 0.0
    %3454 = vmatprep.subr.mxu0 0.0
    %3455 = vmatpush1.msra.mxu0 0.0
    %3456 = vmatprep.subr.mxu0 0.0
    %3457 = vmatpush1.msra.mxu0 0.0
    %3458 = vmatprep.subr.mxu0 0.0
    %3459 = vmatpush1.msra.mxu0 0.0
    %3460 = vmatprep.subr.mxu0 0.0
    %3461 = vmatpush1.msra.mxu0 0.0
    %3462 = vmatprep.subr.mxu0 0.0
    %3463 = vmatpush1.msra.mxu0 0.0
    %3464 = vmatprep.subr.mxu0 0.0
    %3465 = vmatpush1.msra.mxu0 0.0
    %3466 = vmatprep.subr.mxu0 0.0
    %3467 = vmatpush1.msra.mxu0 0.0
    %3468 = vmatprep.subr.mxu0 0.0
    %3469 = vmatpush1.msra.mxu0 0.0
    %3470 = vmatprep.subr.mxu0 0.0
    %3471 = vmatpush1.msra.mxu0 0.0
    %3472 = vmatprep.subr.mxu0 0.0
    %3473 = vmatpush1.msra.mxu0 0.0
    %3474 = vmatprep.subr.mxu0 0.0
    %3475 = vmatpush1.msra.mxu0 0.0
    %3476 = vmatprep.subr.mxu0 0.0
    %3477 = vmatpush1.msra.mxu0 0.0
    %3478 = vmatprep.subr.mxu0 0.0
    %3479 = vmatpush1.msra.mxu0 0.0
    %3480 = vmatprep.subr.mxu0 0.0
    %3481 = vmatpush1.msra.mxu0 0.0
    %3482 = vmatprep.subr.mxu0 0.0
    %3483 = vmatpush1.msra.mxu0 0.0
    %3484 = vmatprep.subr.mxu0 0.0
    %3485 = vmatpush1.msra.mxu0 0.0
    %3486 = vmatprep.subr.mxu0 0.0
    %3487 = vmatpush1.msra.mxu0 0.0
    %3488 = vmatprep.subr.mxu0 0.0
    %3489 = vmatpush1.msra.mxu0 0.0
    %3490 = vmatprep.subr.mxu0 0.0
    %3491 = vmatpush1.msra.mxu0 0.0
    %3492 = vmatprep.subr.mxu0 0.0
    %3493 = vmatpush1.msra.mxu0 0.0
    %3494 = vmatprep.subr.mxu0 0.0
    %3495 = vmatpush1.msra.mxu0 0.0
    %3496 = vmatprep.subr.mxu0 0.0
    %3497 = vmatpush1.msra.mxu0 0.0
    %3498 = vmatprep.subr.mxu0 0.0
    %3499 = vmatpush1.msra.mxu0 0.0
    %3500 = vmatprep.subr.mxu0 0.0
    %3501 = vmatpush1.msra.mxu0 0.0
    %3502 = vmatprep.subr.mxu0 0.0
    %3503 = vmatpush1.msra.mxu0 0.0
    %3504 = vmatprep.subr.mxu0 0.0
    %3505 = vmatpush1.msra.mxu0 0.0
    %3506 = vmatprep.subr.mxu0 0.0
    %3507 = vmatpush1.msra.mxu0 0.0
    %3508 = vmatprep.subr.mxu0 0.0
    %3509 = vmatpush1.msra.mxu0 0.0
    %3510 = vmatprep.mubr.f32.mxu0 0.0
    %3511 = vmatmul.mubr.f32.gmra.mrb[0].mxu0 %v3444
    %v3512 = vpop.f32.mrb[0].mxu0
    %v3513 = vadd.f32 0.0, %v3512
    %v3514 = vpop.f32.mrb[0].mxu0
    %3515 = vdwg.mxu0
    %3516 = vrot.lane.b32.xlu0 %v2271, 40
    %v3517 = vpop.permute.xlu0 %3516
    %v3520 = vsel %vm456, %v3439, 0
    %3522 = vmatprep.subr.mxu0 0.0
    %3523 = vmatpush1.msra.mxu0 %v3517
    %3524 = vmatprep.subr.mxu0 0.0
    %3525 = vmatpush1.msra.mxu0 0.0
    %3526 = vmatprep.subr.mxu0 0.0
    %3527 = vmatpush1.msra.mxu0 0.0
    %3528 = vmatprep.subr.mxu0 0.0
    %3529 = vmatpush1.msra.mxu0 0.0
    %3530 = vmatprep.subr.mxu0 0.0
    %3531 = vmatpush1.msra.mxu0 0.0
    %3532 = vmatprep.subr.mxu0 0.0
    %3533 = vmatpush1.msra.mxu0 0.0
    %3534 = vmatprep.subr.mxu0 0.0
    %3535 = vmatpush1.msra.mxu0 0.0
    %3536 = vmatprep.subr.mxu0 0.0
    %3537 = vmatpush1.msra.mxu0 0.0
    %3538 = vmatprep.subr.mxu0 0.0
    %3539 = vmatpush1.msra.mxu0 0.0
    %3540 = vmatprep.subr.mxu0 0.0
    %3541 = vmatpush1.msra.mxu0 0.0
    %3542 = vmatprep.subr.mxu0 0.0
    %3543 = vmatpush1.msra.mxu0 0.0
    %3544 = vmatprep.subr.mxu0 0.0
    %3545 = vmatpush1.msra.mxu0 0.0
    %3546 = vmatprep.subr.mxu0 0.0
    %3547 = vmatpush1.msra.mxu0 0.0
    %3548 = vmatprep.subr.mxu0 0.0
    %3549 = vmatpush1.msra.mxu0 0.0
    %3550 = vmatprep.subr.mxu0 0.0
    %3551 = vmatpush1.msra.mxu0 0.0
    %3552 = vmatprep.subr.mxu0 0.0
    %3553 = vmatpush1.msra.mxu0 0.0
    %3554 = vmatprep.subr.mxu0 0.0
    %3555 = vmatpush1.msra.mxu0 0.0
    %3556 = vmatprep.subr.mxu0 0.0
    %3557 = vmatpush1.msra.mxu0 0.0
    %3558 = vmatprep.subr.mxu0 0.0
    %3559 = vmatpush1.msra.mxu0 0.0
    %3560 = vmatprep.subr.mxu0 0.0
    %3561 = vmatpush1.msra.mxu0 0.0
    %3562 = vmatprep.subr.mxu0 0.0
    %3563 = vmatpush1.msra.mxu0 0.0
    %3564 = vmatprep.subr.mxu0 0.0
    %3565 = vmatpush1.msra.mxu0 0.0
    %3566 = vmatprep.subr.mxu0 0.0
    %3567 = vmatpush1.msra.mxu0 0.0
    %3568 = vmatprep.subr.mxu0 0.0
    %3569 = vmatpush1.msra.mxu0 0.0
    %3570 = vmatprep.subr.mxu0 0.0
    %3571 = vmatpush1.msra.mxu0 0.0
    %3572 = vmatprep.subr.mxu0 0.0
    %3573 = vmatpush1.msra.mxu0 0.0
    %3574 = vmatprep.subr.mxu0 0.0
    %3575 = vmatpush1.msra.mxu0 0.0
    %3576 = vmatprep.subr.mxu0 0.0
    %3577 = vmatpush1.msra.mxu0 0.0
    %3578 = vmatprep.subr.mxu0 0.0
    %3579 = vmatpush1.msra.mxu0 0.0
    %3580 = vmatprep.subr.mxu0 0.0
    %3581 = vmatpush1.msra.mxu0 0.0
    %3582 = vmatprep.subr.mxu0 0.0
    %3583 = vmatpush1.msra.mxu0 0.0
    %3584 = vmatprep.subr.mxu0 0.0
    %3585 = vmatpush1.msra.mxu0 0.0
    %3586 = vmatprep.mubr.f32.mxu0 0.0
    %3587 = vmatmul.mubr.f32.gmra.mrb[0].mxu0 %v3520
    %v3588 = vpop.f32.mrb[0].mxu0
    %v3589 = vadd.f32 0.0, %v3588
    %v3590 = vpop.f32.mrb[0].mxu0
    %3591 = vdwg.mxu0
    %3594 = vrot.lane.b32.xlu0 %v2853, 8
    %v3595 = vpop.permute.xlu0 %3594
    %3596 = vrot.lane.b32.xlu0 %v2929, 8
    %v3597 = vpop.permute.xlu0 %3596
    %3602 = vrot.lane.b32.xlu0 %v3183, 16
    %v3603 = vpop.permute.xlu0 %3602
    %3604 = vrot.lane.b32.xlu0 %v3259, 16
    %v3605 = vpop.permute.xlu0 %3604
    %3610 = vrot.lane.b32.xlu0 %v3513, 24
    %v3611 = vpop.permute.xlu0 %3610
    %3612 = vrot.lane.b32.xlu0 %v3589, 24
    %v3613 = vpop.permute.xlu0 %3612
    %v3616 = vsel %vm456, %v2523, %v3595
    %v3617 = vsel %vm456, %v2599, %v3597
    %v3618 = vsel %vm1798, %v3616, %v3603
    %v3619 = vsel %vm1798, %v3617, %v3605
    %v3620 = vsel %vm1801, %v3618, %v3611
    %v3621 = vsel %vm1801, %v3619, %v3613
    %s3622 = scalar_lea.vmem %s8, 32
    %v3623 = vld [vmem:[%s3622] sm:$0xff]
    %v3624 = vld [vmem:[%s3622 + $0x8] sm:$0xff]
    %v3625 = vld [vmem:[%s3622 + $0x10] sm:$0xff]
    %v3626 = vld [vmem:[%s3622 + $0x18] sm:$0xff]
    %s3627 = scalar_lea.vmem %s9, 1
    %v3628 = vld [vmem:[%s3627] sm:$0x1]
    %v3630 = vlaneseq
    %v3631 = vshrl.u32 %v3630, 7
    %v3632 = vsub.s32 0, %v3631
    %v3633 = vrot.slane %v3628, %v3632
    %v3636 = vsel %vm371, %v3620, 0
    %v3639 = vsel %vm371, %v3621, 0
    %3641 = vmatprep.subr.mxu0 0.0
    %3642 = vmatpush1.msra.mxu0 %v3623
    %3643 = vmatprep.subr.mxu0 0.0
    %3644 = vmatpush1.msra.mxu0 %v3624
    %3645 = vmatprep.subr.mxu0 0.0
    %3646 = vmatpush1.msra.mxu0 %v3625
    %3647 = vmatprep.subr.mxu0 0.0
    %3648 = vmatpush1.msra.mxu0 %v3626
    %3649 = vmatprep.subr.mxu0 0.0
    %3650 = vmatpush1.msra.mxu0 0.0
    %3651 = vmatprep.subr.mxu0 0.0
    %3652 = vmatpush1.msra.mxu0 0.0
    %3653 = vmatprep.subr.mxu0 0.0
    %3654 = vmatpush1.msra.mxu0 0.0
    %3655 = vmatprep.subr.mxu0 0.0
    %3656 = vmatpush1.msra.mxu0 0.0
    %3657 = vmatprep.subr.mxu0 0.0
    %3658 = vmatpush1.msra.mxu0 0.0
    %3659 = vmatprep.subr.mxu0 0.0
    %3660 = vmatpush1.msra.mxu0 0.0
    %3661 = vmatprep.subr.mxu0 0.0
    %3662 = vmatpush1.msra.mxu0 0.0
    %3663 = vmatprep.subr.mxu0 0.0
    %3664 = vmatpush1.msra.mxu0 0.0
    %3665 = vmatprep.subr.mxu0 0.0
    %3666 = vmatpush1.msra.mxu0 0.0
    %3667 = vmatprep.subr.mxu0 0.0
    %3668 = vmatpush1.msra.mxu0 0.0
    %3669 = vmatprep.subr.mxu0 0.0
    %3670 = vmatpush1.msra.mxu0 0.0
    %3671 = vmatprep.subr.mxu0 0.0
    %3672 = vmatpush1.msra.mxu0 0.0
    %3673 = vmatprep.subr.mxu0 0.0
    %3674 = vmatpush1.msra.mxu0 0.0
    %3675 = vmatprep.subr.mxu0 0.0
    %3676 = vmatpush1.msra.mxu0 0.0
    %3677 = vmatprep.subr.mxu0 0.0
    %3678 = vmatpush1.msra.mxu0 0.0
    %3679 = vmatprep.subr.mxu0 0.0
    %3680 = vmatpush1.msra.mxu0 0.0
    %3681 = vmatprep.subr.mxu0 0.0
    %3682 = vmatpush1.msra.mxu0 0.0
    %3683 = vmatprep.subr.mxu0 0.0
    %3684 = vmatpush1.msra.mxu0 0.0
    %3685 = vmatprep.subr.mxu0 0.0
    %3686 = vmatpush1.msra.mxu0 0.0
    %3687 = vmatprep.subr.mxu0 0.0
    %3688 = vmatpush1.msra.mxu0 0.0
    %3689 = vmatprep.subr.mxu0 0.0
    %3690 = vmatpush1.msra.mxu0 0.0
    %3691 = vmatprep.subr.mxu0 0.0
    %3692 = vmatpush1.msra.mxu0 0.0
    %3693 = vmatprep.subr.mxu0 0.0
    %3694 = vmatpush1.msra.mxu0 0.0
    %3695 = vmatprep.subr.mxu0 0.0
    %3696 = vmatpush1.msra.mxu0 0.0
    %3697 = vmatprep.subr.mxu0 0.0
    %3698 = vmatpush1.msra.mxu0 0.0
    %3699 = vmatprep.subr.mxu0 0.0
    %3700 = vmatpush1.msra.mxu0 0.0
    %3701 = vmatprep.subr.mxu0 0.0
    %3702 = vmatpush1.msra.mxu0 0.0
    %3703 = vmatprep.subr.mxu0 0.0
    %3704 = vmatpush1.msra.mxu0 0.0
    %3705 = vmatprep.mubr.f32.mxu0 0.0
    %3706 = vmatmul.mubr.f32.gmra.mrb[0].mxu0 %v3636
    %v3707 = vpop.f32.mrb[0].mxu0
    %v3708 = vadd.f32 %v3633, %v3707
    %v3709 = vpop.f32.mrb[0].mxu0
    %3710 = vmatprep.mubr.f32.mxu0 0.0
    %3711 = vmatmul.mubr.f32.gmra.mrb[0].mxu0 %v3639
    %v3712 = vpop.f32.mrb[0].mxu0
    %v3713 = vadd.f32 %v3633, %v3712
    %v3714 = vpop.f32.mrb[0].mxu0
    %3715 = vdwg.mxu0
    %v3716 = vadd.f32 %v2178, %v3708
    %v3717 = vadd.f32 %v2179, %v3713
    %s3718 = scalar_lea.vmem %s10, 1
    %v3719 = vld [vmem:[%s3718] sm:$0x1]
    %s3720 = scalar_lea.vmem %s11, 1
    %v3721 = vld [vmem:[%s3720] sm:$0x1]
    %v3722 = vsel %vm371, %v3716, 0.0
    %3723 = vadd.xlane.f32.xlu0 %v3722
    %v3724 = vpop.xlane.xlu0 %3723
    %v3725 = vsel %vm371, %v3717, 0.0
    %3726 = vadd.xlane.f32.xlu0 %v3725
    %v3727 = vpop.xlane.xlu0 %3726
    %v3728 = vmul.f32 %v3724, %v1906
    %v3729 = vmul.f32 %v3727, %v1906
    %v3730 = vsub.f32 %v3716, %v3728
    %v3731 = vsub.f32 %v3717, %v3729
    %v3732 = vmul.f32 %v3730, %v3730
    %v3733 = vmul.f32 %v3731, %v3731
    %v3734 = vsel %vm371, %v3732, 0.0
    %3735 = vadd.xlane.f32.xlu0 %v3734
    %v3736 = vpop.xlane.xlu0 %3735
    %v3737 = vsel %vm371, %v3733, 0.0
    %3738 = vadd.xlane.f32.xlu0 %v3737
    %v3739 = vpop.xlane.xlu0 %3738
    %v3740 = vmul.f32 %v3736, %v1906
    %v3741 = vmul.f32 %v3739, %v1906
    %v3742 = vadd.f32 %v3740, 1e-05
    %v3743 = vadd.f32 %v3741, 1e-05
    %v3744 = vrsqrt.pop %v3742
    %v3745 = vrsqrt.pop %v3743
    %v3746 = vmul.f32 %v3730, %v3744
    %v3747 = vmul.f32 %v3731, %v3745
    %v3749 = vlaneseq
    %v3750 = vshrl.u32 %v3749, 7
    %v3751 = vsub.s32 0, %v3750
    %v3752 = vrot.slane %v3719, %v3751
    %v3754 = vmul.f32 %v3746, %v3752
    %v3755 = vmul.f32 %v3747, %v3752
    %v3757 = vlaneseq
    %v3758 = vshrl.u32 %v3757, 7
    %v3759 = vsub.s32 0, %v3758
    %v3760 = vrot.slane %v3721, %v3759
    %v3762 = vadd.f32 %v3754, %v3760
    %v3763 = vadd.f32 %v3755, %v3760
    %s3764 = scalar_lea.vmem %s12, 32
    %v3765 = vld [vmem:[%s3764] sm:$0xff]
    %v3766 = vld [vmem:[%s3764 + $0x8] sm:$0xff]
    %v3767 = vld [vmem:[%s3764 + $0x10] sm:$0xff]
    %v3768 = vld [vmem:[%s3764 + $0x18] sm:$0xff]
    %s3769 = scalar_lea.vmem [#allocation5], 1
    %v3770 = vld [vmem:[%s3769] sm:$0x1]
    %v3772 = vlaneseq
    %v3773 = vshrl.u32 %v3772, 7
    %v3774 = vsub.s32 0, %v3773
    %v3775 = vrot.slane %v3770, %v3774
    %v3778 = vsel %vm371, %v3762, 0
    %v3781 = vsel %vm371, %v3763, 0
    %3783 = vmatprep.subr.mxu0 0.0
    %3784 = vmatpush1.msra.mxu0 %v3765
    %3785 = vmatprep.subr.mxu0 0.0
    %3786 = vmatpush1.msra.mxu0 %v3766
    %3787 = vmatprep.subr.mxu0 0.0
    %3788 = vmatpush1.msra.mxu0 %v3767
    %3789 = vmatprep.subr.mxu0 0.0
    %3790 = vmatpush1.msra.mxu0 %v3768
    %3791 = vmatprep.subr.mxu0 0.0
    %3792 = vmatpush1.msra.mxu0 0.0
    %3793 = vmatprep.subr.mxu0 0.0
    %3794 = vmatpush1.msra.mxu0 0.0
    %3795 = vmatprep.subr.mxu0 0.0
    %3796 = vmatpush1.msra.mxu0 0.0
    %3797 = vmatprep.subr.mxu0 0.0
    %3798 = vmatpush1.msra.mxu0 0.0
    %3799 = vmatprep.subr.mxu0 0.0
    %3800 = vmatpush1.msra.mxu0 0.0
    %3801 = vmatprep.subr.mxu0 0.0
    %3802 = vmatpush1.msra.mxu0 0.0
    %3803 = vmatprep.subr.mxu0 0.0
    %3804 = vmatpush1.msra.mxu0 0.0
    %3805 = vmatprep.subr.mxu0 0.0
    %3806 = vmatpush1.msra.mxu0 0.0
    %3807 = vmatprep.subr.mxu0 0.0
    %3808 = vmatpush1.msra.mxu0 0.0
    %3809 = vmatprep.subr.mxu0 0.0
    %3810 = vmatpush1.msra.mxu0 0.0
    %3811 = vmatprep.subr.mxu0 0.0
    %3812 = vmatpush1.msra.mxu0 0.0
    %3813 = vmatprep.subr.mxu0 0.0
    %3814 = vmatpush1.msra.mxu0 0.0
    %3815 = vmatprep.subr.mxu0 0.0
    %3816 = vmatpush1.msra.mxu0 0.0
    %3817 = vmatprep.subr.mxu0 0.0
    %3818 = vmatpush1.msra.mxu0 0.0
    %3819 = vmatprep.subr.mxu0 0.0
    %3820 = vmatpush1.msra.mxu0 0.0
    %3821 = vmatprep.subr.mxu0 0.0
    %3822 = vmatpush1.msra.mxu0 0.0
    %3823 = vmatprep.subr.mxu0 0.0
    %3824 = vmatpush1.msra.mxu0 0.0
    %3825 = vmatprep.subr.mxu0 0.0
    %3826 = vmatpush1.msra.mxu0 0.0
    %3827 = vmatprep.subr.mxu0 0.0
    %3828 = vmatpush1.msra.mxu0 0.0
    %3829 = vmatprep.subr.mxu0 0.0
    %3830 = vmatpush1.msra.mxu0 0.0
    %3831 = vmatprep.subr.mxu0 0.0
    %3832 = vmatpush1.msra.mxu0 0.0
    %3833 = vmatprep.subr.mxu0 0.0
    %3834 = vmatpush1.msra.mxu0 0.0
    %3835 = vmatprep.subr.mxu0 0.0
    %3836 = vmatpush1.msra.mxu0 0.0
    %3837 = vmatprep.subr.mxu0 0.0
    %3838 = vmatpush1.msra.mxu0 0.0
    %3839 = vmatprep.subr.mxu0 0.0
    %3840 = vmatpush1.msra.mxu0 0.0
    %3841 = vmatprep.subr.mxu0 0.0
    %3842 = vmatpush1.msra.mxu0 0.0
    %3843 = vmatprep.subr.mxu0 0.0
    %3844 = vmatpush1.msra.mxu0 0.0
    %3845 = vmatprep.subr.mxu0 0.0
    %3846 = vmatpush1.msra.mxu0 0.0
    %3847 = vmatprep.mubr.f32.mxu0 0.0
    %3848 = vmatmul.mubr.f32.gmra.mrb[0].mxu0 %v3778
    %v3849 = vpop.f32.mrb[0].mxu0
    %v3850 = vadd.f32 %v3775, %v3849
    %v3851 = vpop.f32.mrb[0].mxu0
    %3852 = vmatprep.mubr.f32.mxu0 0.0
    %3853 = vmatmul.mubr.f32.gmra.mrb[0].mxu0 %v3781
    %v3854 = vpop.f32.mrb[0].mxu0
    %v3855 = vadd.f32 %v3775, %v3854
    %v3856 = vpop.f32.mrb[0].mxu0
    %3857 = vdwg.mxu0
    %v3858 = vmax.f32 %v3850, 0.0
    %v3859 = vmax.f32 %v3855, 0.0
    %s3860 = scalar_lea.vmem %s14, 64
    %v3861 = vld [vmem:[%s3860] sm:$0xff]
    %v3862 = vld [vmem:[%s3860 + $0x8] sm:$0xff]
    %v3863 = vld [vmem:[%s3860 + $0x10] sm:$0xff]
    %v3864 = vld [vmem:[%s3860 + $0x18] sm:$0xff]
    %v3865 = vld [vmem:[%s3860 + $0x20] sm:$0xff]
    %v3866 = vld [vmem:[%s3860 + $0x28] sm:$0xff]
    %v3867 = vld [vmem:[%s3860 + $0x30] sm:$0xff]
    %v3868 = vld [vmem:[%s3860 + $0x38] sm:$0xff]
    %s3869 = scalar_lea.vmem %s15, 1
    %v3870 = vld [vmem:[%s3869] sm:$0x1]
    %v3872 = vlaneseq
    %v3873 = vshrl.u32 %v3872, 7
    %v3874 = vsub.s32 0, %v3873
    %v3875 = vrot.slane %v3870, %v3874
    %v3878 = vsel %vm2052, %v3858, 0
    %v3881 = vsel %vm2052, %v3859, 0
    %3883 = vmatprep.subr.mxu0 0.0
    %3884 = vmatpush1.msra.mxu0 %v3861
    %3885 = vmatprep.subr.mxu0 0.0
    %3886 = vmatpush1.msra.mxu0 %v3862
    %3887 = vmatprep.subr.mxu0 0.0
    %3888 = vmatpush1.msra.mxu0 %v3863
    %3889 = vmatprep.subr.mxu0 0.0
    %3890 = vmatpush1.msra.mxu0 %v3864
    %3891 = vmatprep.subr.mxu0 0.0
    %3892 = vmatpush1.msra.mxu0 %v3865
    %3893 = vmatprep.subr.mxu0 0.0
    %3894 = vmatpush1.msra.mxu0 %v3866
    %3895 = vmatprep.subr.mxu0 0.0
    %3896 = vmatpush1.msra.mxu0 %v3867
    %3897 = vmatprep.subr.mxu0 0.0
    %3898 = vmatpush1.msra.mxu0 %v3868
    %3899 = vmatprep.subr.mxu0 0.0
    %3900 = vmatpush1.msra.mxu0 0.0
    %3901 = vmatprep.subr.mxu0 0.0
    %3902 = vmatpush1.msra.mxu0 0.0
    %3903 = vmatprep.subr.mxu0 0.0
    %3904 = vmatpush1.msra.mxu0 0.0
    %3905 = vmatprep.subr.mxu0 0.0
    %3906 = vmatpush1.msra.mxu0 0.0
    %3907 = vmatprep.subr.mxu0 0.0
    %3908 = vmatpush1.msra.mxu0 0.0
    %3909 = vmatprep.subr.mxu0 0.0
    %3910 = vmatpush1.msra.mxu0 0.0
    %3911 = vmatprep.subr.mxu0 0.0
    %3912 = vmatpush1.msra.mxu0 0.0
    %3913 = vmatprep.subr.mxu0 0.0
    %3914 = vmatpush1.msra.mxu0 0.0
    %3915 = vmatprep.subr.mxu0 0.0
    %3916 = vmatpush1.msra.mxu0 0.0
    %3917 = vmatprep.subr.mxu0 0.0
    %3918 = vmatpush1.msra.mxu0 0.0
    %3919 = vmatprep.subr.mxu0 0.0
    %3920 = vmatpush1.msra.mxu0 0.0
    %3921 = vmatprep.subr.mxu0 0.0
    %3922 = vmatpush1.msra.mxu0 0.0
    %3923 = vmatprep.subr.mxu0 0.0
    %3924 = vmatpush1.msra.mxu0 0.0
    %3925 = vmatprep.subr.mxu0 0.0
    %3926 = vmatpush1.msra.mxu0 0.0
    %3927 = vmatprep.subr.mxu0 0.0
    %3928 = vmatpush1.msra.mxu0 0.0
    %3929 = vmatprep.subr.mxu0 0.0
    %3930 = vmatpush1.msra.mxu0 0.0
    %3931 = vmatprep.subr.mxu0 0.0
    %3932 = vmatpush1.msra.mxu0 0.0
    %3933 = vmatprep.subr.mxu0 0.0
    %3934 = vmatpush1.msra.mxu0 0.0
    %3935 = vmatprep.subr.mxu0 0.0
    %3936 = vmatpush1.msra.mxu0 0.0
    %3937 = vmatprep.subr.mxu0 0.0
    %3938 = vmatpush1.msra.mxu0 0.0
    %3939 = vmatprep.subr.mxu0 0.0
    %3940 = vmatpush1.msra.mxu0 0.0
    %3941 = vmatprep.subr.mxu0 0.0
    %3942 = vmatpush1.msra.mxu0 0.0
    %3943 = vmatprep.subr.mxu0 0.0
    %3944 = vmatpush1.msra.mxu0 0.0
    %3945 = vmatprep.subr.mxu0 0.0
    %3946 = vmatpush1.msra.mxu0 0.0
    %3947 = vmatprep.mubr.f32.mxu0 0.0
    %3948 = vmatmul.mubr.f32.gmra.mrb[0].mxu0 %v3878
    %v3949 = vpop.f32.mrb[0].mxu0
    %v3950 = vadd.f32 %v3875, %v3949
    %v3951 = vpop.f32.mrb[0].mxu0
    %3952 = vmatprep.mubr.f32.mxu0 0.0
    %3953 = vmatmul.mubr.f32.gmra.mrb[0].mxu0 %v3881
    %v3954 = vpop.f32.mrb[0].mxu0
    %v3955 = vadd.f32 %v3875, %v3954
    %v3956 = vpop.f32.mrb[0].mxu0
    %3957 = vdwg.mxu0
    %v3958 = vadd.f32 %v3762, %v3950
    %v3959 = vadd.f32 %v3763, %v3955
    %s3960 = scalar_lea.vmem %s16, 1
    %v3961 = vld [vmem:[%s3960] sm:$0x1]
    %s3962 = scalar_lea.vmem %s17, 1
    %v3963 = vld [vmem:[%s3962] sm:$0x1]
    %v3964 = vsel %vm371, %v3958, 0.0
    %3965 = vadd.xlane.f32.xlu0 %v3964
    %v3966 = vpop.xlane.xlu0 %3965
    %v3967 = vsel %vm371, %v3959, 0.0
    %3968 = vadd.xlane.f32.xlu0 %v3967
    %v3969 = vpop.xlane.xlu0 %3968
    %v3970 = vmul.f32 %v3966, %v1906
    %v3971 = vmul.f32 %v3969, %v1906
    %v3972 = vsub.f32 %v3958, %v3970
    %v3973 = vsub.f32 %v3959, %v3971
    %v3974 = vmul.f32 %v3972, %v3972
    %v3975 = vmul.f32 %v3973, %v3973
    %v3976 = vsel %vm371, %v3974, 0.0
    %3977 = vadd.xlane.f32.xlu0 %v3976
    %v3978 = vpop.xlane.xlu0 %3977
    %v3979 = vsel %vm371, %v3975, 0.0
    %3980 = vadd.xlane.f32.xlu0 %v3979
    %v3981 = vpop.xlane.xlu0 %3980
    %v3982 = vmul.f32 %v3978, %v1906
    %v3983 = vmul.f32 %v3981, %v1906
    %v3984 = vadd.f32 %v3982, 1e-05
    %v3985 = vadd.f32 %v3983, 1e-05
    %v3986 = vrsqrt.pop %v3984
    %v3987 = vrsqrt.pop %v3985
    %v3988 = vmul.f32 %v3972, %v3986
    %v3989 = vmul.f32 %v3973, %v3987
    %v3991 = vlaneseq
    %v3992 = vshrl.u32 %v3991, 7
    %v3993 = vsub.s32 0, %v3992
    %v3994 = vrot.slane %v3961, %v3993
    %v3996 = vmul.f32 %v3988, %v3994
    %v3997 = vmul.f32 %v3989, %v3994
    %v3999 = vlaneseq
    %v4000 = vshrl.u32 %v3999, 7
    %v4001 = vsub.s32 0, %v4000
    %v4002 = vrot.slane %v3963, %v4001
    %v4004 = vadd.f32 %v3996, %v4002
    %v4005 = vadd.f32 %v3997, %v4002
    %v4006 = vld [vmem:[%s18] sm:$0xff]
    %v4007 = vld [vmem:[%s18 + $0x8] sm:$0xff]
    %v4008 = vld [vmem:[%s18 + $0x10] sm:$0xff]
    %v4009 = vld [vmem:[%s18 + $0x18] sm:$0xff]
    %v4010 = vld [vmem:[#allocation2] sm:$0x1]
    %v4012 = vlaneseq
    %v4013 = vshrl.u32 %v4012, 7
    %v4014 = vsub.s32 0, %v4013
    %v4015 = vrot.slane %v4010, %v4014
    %v4019 = vrot.slane %v4005, 7
    %vm4020 = vcmask 1041409
    %v4021 = vsel %vm4020, %v4019, %v4004
    %v4022 = vsel %vm371, %v4021, 0
    %4024 = vmatprep.subr.mxu0 0.0
    %4025 = vmatpush1.msra.mxu0 %v4006
    %4026 = vmatprep.subr.mxu0 0.0
    %4027 = vmatpush1.msra.mxu0 %v4007
    %4028 = vmatprep.subr.mxu0 0.0
    %4029 = vmatpush1.msra.mxu0 %v4008
    %4030 = vmatprep.subr.mxu0 0.0
    %4031 = vmatpush1.msra.mxu0 %v4009
    %4032 = vmatprep.subr.mxu0 0.0
    %4033 = vmatpush1.msra.mxu0 0.0
    %4034 = vmatprep.subr.mxu0 0.0
    %4035 = vmatpush1.msra.mxu0 0.0
    %4036 = vmatprep.subr.mxu0 0.0
    %4037 = vmatpush1.msra.mxu0 0.0
    %4038 = vmatprep.subr.mxu0 0.0
    %4039 = vmatpush1.msra.mxu0 0.0
    %4040 = vmatprep.subr.mxu0 0.0
    %4041 = vmatpush1.msra.mxu0 0.0
    %4042 = vmatprep.subr.mxu0 0.0
    %4043 = vmatpush1.msra.mxu0 0.0
    %4044 = vmatprep.subr.mxu0 0.0
    %4045 = vmatpush1.msra.mxu0 0.0
    %4046 = vmatprep.subr.mxu0 0.0
    %4047 = vmatpush1.msra.mxu0 0.0
    %4048 = vmatprep.subr.mxu0 0.0
    %4049 = vmatpush1.msra.mxu0 0.0
    %4050 = vmatprep.subr.mxu0 0.0
    %4051 = vmatpush1.msra.mxu0 0.0
    %4052 = vmatprep.subr.mxu0 0.0
    %4053 = vmatpush1.msra.mxu0 0.0
    %4054 = vmatprep.subr.mxu0 0.0
    %4055 = vmatpush1.msra.mxu0 0.0
    %4056 = vmatprep.subr.mxu0 0.0
    %4057 = vmatpush1.msra.mxu0 0.0
    %4058 = vmatprep.subr.mxu0 0.0
    %4059 = vmatpush1.msra.mxu0 0.0
    %4060 = vmatprep.subr.mxu0 0.0
    %4061 = vmatpush1.msra.mxu0 0.0
    %4062 = vmatprep.subr.mxu0 0.0
    %4063 = vmatpush1.msra.mxu0 0.0
    %4064 = vmatprep.subr.mxu0 0.0
    %4065 = vmatpush1.msra.mxu0 0.0
    %4066 = vmatprep.subr.mxu0 0.0
    %4067 = vmatpush1.msra.mxu0 0.0
    %4068 = vmatprep.subr.mxu0 0.0
    %4069 = vmatpush1.msra.mxu0 0.0
    %4070 = vmatprep.subr.mxu0 0.0
    %4071 = vmatpush1.msra.mxu0 0.0
    %4072 = vmatprep.subr.mxu0 0.0
    %4073 = vmatpush1.msra.mxu0 0.0
    %4074 = vmatprep.subr.mxu0 0.0
    %4075 = vmatpush1.msra.mxu0 0.0
    %4076 = vmatprep.subr.mxu0 0.0
    %4077 = vmatpush1.msra.mxu0 0.0
    %4078 = vmatprep.subr.mxu0 0.0
    %4079 = vmatpush1.msra.mxu0 0.0
    %4080 = vmatprep.subr.mxu0 0.0
    %4081 = vmatpush1.msra.mxu0 0.0
    %4082 = vmatprep.subr.mxu0 0.0
    %4083 = vmatpush1.msra.mxu0 0.0
    %4084 = vmatprep.subr.mxu0 0.0
    %4085 = vmatpush1.msra.mxu0 0.0
    %4086 = vmatprep.subr.mxu0 0.0
    %4087 = vmatpush1.msra.mxu0 0.0
    %4088 = vmatprep.mubr.f32.mxu0 0.0
    %4089 = vmatmul.mubr.f32.gmra.mrb[0].mxu0 %v4022
    %v4090 = vpop.f32.mrb[0].mxu0
    %v4091 = vadd.f32 %v4015, %v4090
    %v4092 = vpop.f32.mrb[0].mxu0
    %4093 = vdwg.mxu0
    %vm4094 = vcmask 1024
    %4095 = vst.msk [vmem:[%s20] sm:$0x3] %vm4094, %v4091
    // Predicated region
    $region90: #{tpu_custom_call.1} parent=1 // pred_check
      _
    $region91: #{tpu_custom_call.1} parent=1 // pred_check_branch
      %4097 = sbr.rel (0) target = $region93
    $region92: #{tpu_custom_call.1} parent=1 // pred_region
      _
    $region93: #{tpu_custom_call.1} parent=1 // pred_fallthru
      _
    // Predicated region
    $region94: #{tpu_custom_call.1} parent=1 // pred_check
      _
    $region95: #{tpu_custom_call.1} parent=1 // pred_check_branch
      %4099 = sbr.rel (0) target = $region97
    $region96: #{tpu_custom_call.1} parent=1 // pred_region
      _
    $region97: #{tpu_custom_call.1} parent=1 // pred_fallthru
      _
    %4100 = vsyncpa [#allocation4], 1
    %4101 = vsyncpa [#allocation6], 1

</llo_original>
